<compile_context>
chip_gen: v6e
topology: v6e:2x2x1
jax: 0.10.0
libtpu: 0.0.40
codegen_flags: <defaults>
</compile_context>

<pallas_src>
import numpy as np
import jax
import jax.numpy as jnp
from jax import lax
from jax.experimental import pallas as pl
from jax.experimental.pallas import tpu as pltpu

# ---------------------------------------------------------------------------
# Stand-in for pyiqa's DEFAULT_CONFIGS / ARCH_REGISTRY (no file / net loading)
# ---------------------------------------------------------------------------
DEFAULT_CONFIGS = {
    "ssim": {
        "metric_mode": "FR",
        "lower_better": False,
        "metric_opts": {"type": "SSIM", "test_y_channel": True},
    },
}

_WIN_SIZE = 11
_SIGMA = 1.5
_C1 = (0.01 * 255.0) ** 2
_C2 = (0.03 * 255.0) ** 2
_LANE = 128


def _gauss_window_1d():
    # Deterministic "parameters" of the SSIM net (separable Gaussian window).
    c = np.arange(_WIN_SIZE, dtype=np.float64) - (_WIN_SIZE - 1) / 2.0
    w = np.exp(-(c ** 2) / (2.0 * _SIGMA ** 2))
    w = w / w.sum()
    return w


_WIN = _gauss_window_1d()


def _band_matrices(H, W, W_pad):
    """Banded matrices so that gfilt(p) == G_row @ p @ G_col (VALID conv)."""
    ho = H - (_WIN_SIZE - 1)
    wo = W - (_WIN_SIZE - 1)
    g_row = np.zeros((ho, H), dtype=np.float64)
    for o in range(ho):
        g_row[o, o:o + _WIN_SIZE] = _WIN
    # Rows >= W stay zero -> padded lane columns contribute nothing.
    g_col = np.zeros((W_pad, wo), dtype=np.float64)
    for o in range(wo):
        g_col[o:o + _WIN_SIZE, o] = _WIN
    return (jnp.asarray(g_row, dtype=jnp.float32),
            jnp.asarray(g_col, dtype=jnp.float32))


# ---------------------------------------------------------------------------
# Pallas kernel: per-image SSIM (Y channel, 11x11 Gaussian window, valid conv)
# ---------------------------------------------------------------------------
def _ssim_kernel(grow_ref, gcol_ref, tgt_ref, ref_ref, o_ref):
    # grow_ref: (ho, H); gcol_ref: (W_pad, wo); tgt/ref: (1, 3, H, W_pad).
    g_row = grow_ref[...]
    g_col = gcol_ref[...]

    def to_y(img_ref):
        # Cast to f32 *after* the DMA so inputs travel HBM->VMEM at native width.
        r = img_ref[0, 0, :, :].astype(jnp.float32)
        g = img_ref[0, 1, :, :].astype(jnp.float32)
        b = img_ref[0, 2, :, :].astype(jnp.float32)
        # ITU-R BT.601 luma on [0, 255] scale (inputs are [0, 1]).
        return 65.481 * r + 128.553 * g + 24.966 * b + 16.0

    x = to_y(tgt_ref)  # (H, W_pad)
    y = to_y(ref_ref)  # (H, W_pad)

    def gfilt(p):
        # Separable Gaussian, VALID padding, as two MXU matmuls.
        t = jnp.dot(g_row, p,
                    precision=lax.Precision.HIGHEST,
                    preferred_element_type=jnp.float32)         # (ho, W_pad)
        return jnp.dot(t, g_col,
                       precision=lax.Precision.HIGHEST,
                       preferred_element_type=jnp.float32)      # (ho, wo)

    mu1 = gfilt(x)
    mu2 = gfilt(y)
    s11 = gfilt(x * x)
    s22 = gfilt(y * y)
    s12 = gfilt(x * y)

    mu1_sq = mu1 * mu1
    mu2_sq = mu2 * mu2
    mu12 = mu1 * mu2
    sigma1_sq = s11 - mu1_sq
    sigma2_sq = s22 - mu2_sq
    sigma12 = s12 - mu12

    num = (2.0 * mu12 + _C1) * (2.0 * sigma12 + _C2)
    den = (mu1_sq + mu2_sq + _C1) * (sigma1_sq + sigma2_sq + _C2)
    ssim_map = num / den

    # Spatial mean over the valid (ho, wo) window positions.
    o_ref[0] = jnp.mean(ssim_map, axis=(0, 1), keepdims=True)


def ssim_pallas(target, ref):
    """SSIM 'net' forward: (B, 3, H, W) x2 -> (B,) SSIM scores."""
    B, C, H, W = target.shape
    assert C == 3, "SSIM Y-channel conversion expects RGB input"
    assert H > _WIN_SIZE and W > _WIN_SIZE
    ho = H - (_WIN_SIZE - 1)
    wo = W - (_WIN_SIZE - 1)

    # Lane-dense layout: pad W up to a multiple of 128.  Padded columns are
    # zero and are masked out of the SSIM map by the zero rows of G_col.
    W_pad = ((W + _LANE - 1) // _LANE) * _LANE
    if W_pad != W:
        pad = ((0, 0), (0, 0), (0, 0), (0, W_pad - W))
        target = jnp.pad(target, pad)
        ref = jnp.pad(ref, pad)

    g_row, g_col = _band_matrices(H, W, W_pad)

    # Explicit VMEM budget: 2 image blocks double-buffered + banded matrices
    # + generous room for in-kernel f32 temporaries; clamped to a safe range.
    in_bytes = C * H * W_pad * np.dtype(target.dtype).itemsize
    est = (4 * in_bytes
           + 4 * (ho * H + W_pad * wo) * 4
           + 16 * H * W_pad * 4
           + (2 << 20))
    vmem_limit = int(min(max(est, 8 << 20), 64 << 20))

    # TODO(synk): for very large images (e.g. 1080p on v7x's 64 MiB VMEM) the
    # whole-image block should become row-strip tiling with a 10-row halo and
    # a partial-sum accumulator; omitted here (overlapping halo blocks need
    # element-indexed specs / manual DMA).
    out = pl.pallas_call(
        _ssim_kernel,
        out_shape=jax.ShapeDtypeStruct((B, 1, 1), jnp.float32),
        grid=(B,),
        in_specs=[
            pl.BlockSpec((ho, H), lambda b: (0, 0)),           # G_row (resident)
            pl.BlockSpec((W_pad, wo), lambda b: (0, 0)),       # G_col (resident)
            pl.BlockSpec((1, C, H, W_pad), lambda b: (b, 0, 0, 0)),
            pl.BlockSpec((1, C, H, W_pad), lambda b: (b, 0, 0, 0)),
        ],
        out_specs=pl.BlockSpec((1, 1, 1), lambda b: (b, 0, 0)),
        compiler_params=pltpu.CompilerParams(
            dimension_semantics=("parallel",),
            vmem_limit_bytes=vmem_limit,
        ),
    )(g_row, g_col, target, ref)
    return out[:, 0, 0]


# ---------------------------------------------------------------------------
# InferenceModel wrapper semantics (as_loss / weight_reduce_loss / FR dispatch)
# ---------------------------------------------------------------------------
def weight_reduce_loss(loss, weight=None, reduction="mean"):
    if weight is not None:
        loss = loss * weight
    if reduction == "mean":
        return jnp.mean(loss)
    if reduction == "sum":
        return jnp.sum(loss)
    return loss


class InferenceModel:
    """JAX/Pallas analog of pyiqa InferenceModel with a concrete SSIM FR net."""

    def __init__(self, metric_name, as_loss=False, loss_weight=None,
                 loss_reduction="mean", **kwargs):
        cfg = DEFAULT_CONFIGS[metric_name]
        self.metric_name = metric_name
        self.lower_better = cfg.get("lower_better", False)
        self.metric_mode = cfg.get("metric_mode", None)
        if self.metric_mode is None:
            self.metric_mode = kwargs.pop("metric_mode")
        self.as_loss = as_loss
        self.loss_weight = loss_weight
        self.loss_reduction = loss_reduction
        # TODO(synk): ARCH_REGISTRY dynamic dispatch / checkpoint loading has no
        # Pallas equivalent; the net is the in-script Pallas SSIM kernel.
        self.net = ssim_pallas

    def forward(self, target, ref=None):
        # TODO(synk): imread2tensor (file -> tensor) path is not reproduced;
        # inputs must already be arrays.
        if self.metric_mode == "FR":
            assert ref is not None, \
                "Please specify reference image for Full Reference metric"
            output = self.net(target, ref)
        elif self.metric_mode == "NR":
            output = self.net(target)
        else:
            raise ValueError(f"unknown metric_mode {self.metric_mode}")

        if self.as_loss:
            if isinstance(output, tuple):
                output = output[0]
            return weight_reduce_loss(output, self.loss_weight,
                                      self.loss_reduction)
        return output

    __call__ = forward


# ---------------------------------------------------------------------------
# Pure-numpy reference for correctness check
# ---------------------------------------------------------------------------
def _ssim_reference(target, ref):
    win = np.asarray(_WIN, dtype=np.float64)

    def to_y(img):
        return (65.481 * img[:, 0] + 128.553 * img[:, 1]
                + 24.966 * img[:, 2] + 16.0)

    X = to_y(target.astype(np.float64))
    Y = to_y(ref.astype(np.float64))
    B, H, W = X.shape
    ho, wo = H - (_WIN_SIZE - 1), W - (_WIN_SIZE - 1)

    def gfilt(a):
        tmp = np.zeros((B, ho, W))
        for k in range(_WIN_SIZE):
            tmp += win[k] * a[:, k:k + ho, :]
        out = np.zeros((B, ho, wo))
        for k in range(_WIN_SIZE):
            out += win[k] * tmp[:, :, k:k + wo]
        return out

    mu1, mu2 = gfilt(X), gfilt(Y)
    s11, s22, s12 = gfilt(X * X), gfilt(Y * Y), gfilt(X * Y)
    sigma1 = s11 - mu1 * mu1
    sigma2 = s22 - mu2 * mu2
    sigma12 = s12 - mu1 * mu2
    num = (2 * mu1 * mu2 + _C1) * (2 * sigma12 + _C2)
    den = (mu1 * mu1 + mu2 * mu2 + _C1) * (sigma1 + sigma2 + _C2)
    return (num / den).mean(axis=(1, 2)).astype(np.float32)


if __name__ == "__main__":
    key = jax.random.PRNGKey(0)
    k1, k2 = jax.random.split(key)
    B, C, H, W = 2, 3, 16, 16
    target = jax.random.uniform(k1, (B, C, H, W), dtype=jnp.float32)
    ref = jax.random.uniform(k2, (B, C, H, W), dtype=jnp.float32)

    # Score mode (as_loss=False): per-image quality scores, shape (B,).
    model = InferenceModel("ssim", as_loss=False)
    scores = jax.block_until_ready(model(target, ref))
    assert scores.shape == (B,)

    ref_scores = _ssim_reference(np.asarray(target), np.asarray(ref))
    assert np.allclose(np.asarray(scores), ref_scores, rtol=2e-4, atol=2e-4), \
        (np.asarray(scores), ref_scores)

    # Loss mode (as_loss=True): weight_reduce_loss with mean reduction -> scalar.
    loss_model = InferenceModel("ssim", as_loss=True, loss_weight=None,
                                loss_reduction="mean")
    loss = jax.block_until_ready(loss_model(target, ref))
    assert loss.shape == ()
    assert np.allclose(float(loss), ref_scores.mean(), rtol=2e-4, atol=2e-4)

    print("KERNEL_OK")
</pallas_src>

<mosaic_0001>
module attributes {stable_mosaic.version = 11 : i64} {
  func.func @_ssim_kernel(%arg0: i32, %arg1: memref<6x16xf32, #tpu.memory_space<vmem>>, %arg2: memref<128x6xf32, #tpu.memory_space<vmem>>, %arg3: memref<1x3x16x128xf32, #tpu.memory_space<vmem>>, %arg4: memref<1x3x16x128xf32, #tpu.memory_space<vmem>>, %arg5: memref<1x1x1xf32, #tpu.memory_space<vmem>>) attributes {dimension_semantics = [#tpu.dimension_semantics<parallel>], iteration_bounds = array<i64: 2>, scalar_prefetch = 0 : i64, scratch_operands = 0 : i64, tpu.core_type = #tpu.core_type<tc>, window_params = [{pipeline_mode = #tpu.pipeline_mode<synchronous>, transform_indices = @transform_0, window_bounds = array<i64: 6, 16>}, {pipeline_mode = #tpu.pipeline_mode<synchronous>, transform_indices = @transform_1, window_bounds = array<i64: 128, 6>}, {transform_indices = @transform_2, window_bounds = array<i64: 1, 3, 16, 128>}, {transform_indices = @transform_3, window_bounds = array<i64: 1, 3, 16, 128>}, {transform_indices = @transform_4, window_bounds = array<i64: 1, 1, 1>}]} {
    %c0 = arith.constant 0 : index
    %c0_0 = arith.constant 0 : index
    %0 = vector.load %arg1[%c0, %c0_0] : memref<6x16xf32, #tpu.memory_space<vmem>>, vector<6x16xf32>
    %c0_1 = arith.constant 0 : index
    %c0_2 = arith.constant 0 : index
    %1 = vector.load %arg2[%c0_1, %c0_2] : memref<128x6xf32, #tpu.memory_space<vmem>>, vector<128x6xf32>
    %c0_3 = arith.constant 0 : index
    %c0_4 = arith.constant 0 : index
    %c0_5 = arith.constant 0 : index
    %c0_6 = arith.constant 0 : index
    %2 = vector.load %arg3[%c0_3, %c0_4, %c0_5, %c0_6] : memref<1x3x16x128xf32, #tpu.memory_space<vmem>>, vector<1x1x16x128xf32>
    %3 = vector.shape_cast %2 : vector<1x1x16x128xf32> to vector<16x128xf32>
    %c0_7 = arith.constant 0 : index
    %c1 = arith.constant 1 : index
    %c0_8 = arith.constant 0 : index
    %c0_9 = arith.constant 0 : index
    %4 = vector.load %arg3[%c0_7, %c1, %c0_8, %c0_9] : memref<1x3x16x128xf32, #tpu.memory_space<vmem>>, vector<1x1x16x128xf32>
    %5 = vector.shape_cast %4 : vector<1x1x16x128xf32> to vector<16x128xf32>
    %c0_10 = arith.constant 0 : index
    %c2 = arith.constant 2 : index
    %c0_11 = arith.constant 0 : index
    %c0_12 = arith.constant 0 : index
    %6 = vector.load %arg3[%c0_10, %c2, %c0_11, %c0_12] : memref<1x3x16x128xf32, #tpu.memory_space<vmem>>, vector<1x1x16x128xf32>
    %7 = vector.shape_cast %6 : vector<1x1x16x128xf32> to vector<16x128xf32>
    %cst = arith.constant 6.548100e+01 : f32
    %8 = vector.broadcast %cst : f32 to vector<16x128xf32>
    %9 = arith.mulf %8, %3 : vector<16x128xf32>
    %cst_13 = arith.constant 1.285530e+02 : f32
    %10 = vector.broadcast %cst_13 : f32 to vector<16x128xf32>
    %11 = arith.mulf %10, %5 : vector<16x128xf32>
    %12 = arith.addf %9, %11 : vector<16x128xf32>
    %cst_14 = arith.constant 2.496600e+01 : f32
    %13 = vector.broadcast %cst_14 : f32 to vector<16x128xf32>
    %14 = arith.mulf %13, %7 : vector<16x128xf32>
    %15 = arith.addf %12, %14 : vector<16x128xf32>
    %cst_15 = arith.constant 1.600000e+01 : f32
    %16 = vector.broadcast %cst_15 : f32 to vector<16x128xf32>
    %17 = arith.addf %15, %16 : vector<16x128xf32>
    %c0_16 = arith.constant 0 : index
    %c0_17 = arith.constant 0 : index
    %c0_18 = arith.constant 0 : index
    %c0_19 = arith.constant 0 : index
    %18 = vector.load %arg4[%c0_16, %c0_17, %c0_18, %c0_19] : memref<1x3x16x128xf32, #tpu.memory_space<vmem>>, vector<1x1x16x128xf32>
    %19 = vector.shape_cast %18 : vector<1x1x16x128xf32> to vector<16x128xf32>
    %c0_20 = arith.constant 0 : index
    %c1_21 = arith.constant 1 : index
    %c0_22 = arith.constant 0 : index
    %c0_23 = arith.constant 0 : index
    %20 = vector.load %arg4[%c0_20, %c1_21, %c0_22, %c0_23] : memref<1x3x16x128xf32, #tpu.memory_space<vmem>>, vector<1x1x16x128xf32>
    %21 = vector.shape_cast %20 : vector<1x1x16x128xf32> to vector<16x128xf32>
    %c0_24 = arith.constant 0 : index
    %c2_25 = arith.constant 2 : index
    %c0_26 = arith.constant 0 : index
    %c0_27 = arith.constant 0 : index
    %22 = vector.load %arg4[%c0_24, %c2_25, %c0_26, %c0_27] : memref<1x3x16x128xf32, #tpu.memory_space<vmem>>, vector<1x1x16x128xf32>
    %23 = vector.shape_cast %22 : vector<1x1x16x128xf32> to vector<16x128xf32>
    %cst_28 = arith.constant 6.548100e+01 : f32
    %24 = vector.broadcast %cst_28 : f32 to vector<16x128xf32>
    %25 = arith.mulf %24, %19 : vector<16x128xf32>
    %cst_29 = arith.constant 1.285530e+02 : f32
    %26 = vector.broadcast %cst_29 : f32 to vector<16x128xf32>
    %27 = arith.mulf %26, %21 : vector<16x128xf32>
    %28 = arith.addf %25, %27 : vector<16x128xf32>
    %cst_30 = arith.constant 2.496600e+01 : f32
    %29 = vector.broadcast %cst_30 : f32 to vector<16x128xf32>
    %30 = arith.mulf %29, %23 : vector<16x128xf32>
    %31 = arith.addf %28, %30 : vector<16x128xf32>
    %cst_31 = arith.constant 1.600000e+01 : f32
    %32 = vector.broadcast %cst_31 : f32 to vector<16x128xf32>
    %33 = arith.addf %31, %32 : vector<16x128xf32>
    %cst_32 = arith.constant dense<0.000000e+00> : vector<6x128xf32>
    %34 = tpu.matmul %0, %17, %cst_32 {dimension_numbers = #tpu.dot_dimension_numbers<[1], [0], [0], [1], [0, 0, 1, 1], [], []>, precision = #tpu.contract_precision<fp32>} : vector<6x16xf32>, vector<16x128xf32>, vector<6x128xf32> -> vector<6x128xf32>
    %cst_33 = arith.constant dense<0.000000e+00> : vector<6x6xf32>
    %35 = tpu.matmul %34, %1, %cst_33 {dimension_numbers = #tpu.dot_dimension_numbers<[1], [0], [0], [1], [0, 0, 1, 1], [], []>, precision = #tpu.contract_precision<fp32>} : vector<6x128xf32>, vector<128x6xf32>, vector<6x6xf32> -> vector<6x6xf32>
    %cst_34 = arith.constant dense<0.000000e+00> : vector<6x128xf32>
    %36 = tpu.matmul %0, %33, %cst_34 {dimension_numbers = #tpu.dot_dimension_numbers<[1], [0], [0], [1], [0, 0, 1, 1], [], []>, precision = #tpu.contract_precision<fp32>} : vector<6x16xf32>, vector<16x128xf32>, vector<6x128xf32> -> vector<6x128xf32>
    %cst_35 = arith.constant dense<0.000000e+00> : vector<6x6xf32>
    %37 = tpu.matmul %36, %1, %cst_35 {dimension_numbers = #tpu.dot_dimension_numbers<[1], [0], [0], [1], [0, 0, 1, 1], [], []>, precision = #tpu.contract_precision<fp32>} : vector<6x128xf32>, vector<128x6xf32>, vector<6x6xf32> -> vector<6x6xf32>
    %38 = arith.mulf %17, %17 : vector<16x128xf32>
    %cst_36 = arith.constant dense<0.000000e+00> : vector<6x128xf32>
    %39 = tpu.matmul %0, %38, %cst_36 {dimension_numbers = #tpu.dot_dimension_numbers<[1], [0], [0], [1], [0, 0, 1, 1], [], []>, precision = #tpu.contract_precision<fp32>} : vector<6x16xf32>, vector<16x128xf32>, vector<6x128xf32> -> vector<6x128xf32>
    %cst_37 = arith.constant dense<0.000000e+00> : vector<6x6xf32>
    %40 = tpu.matmul %39, %1, %cst_37 {dimension_numbers = #tpu.dot_dimension_numbers<[1], [0], [0], [1], [0, 0, 1, 1], [], []>, precision = #tpu.contract_precision<fp32>} : vector<6x128xf32>, vector<128x6xf32>, vector<6x6xf32> -> vector<6x6xf32>
    %41 = arith.mulf %33, %33 : vector<16x128xf32>
    %cst_38 = arith.constant dense<0.000000e+00> : vector<6x128xf32>
    %42 = tpu.matmul %0, %41, %cst_38 {dimension_numbers = #tpu.dot_dimension_numbers<[1], [0], [0], [1], [0, 0, 1, 1], [], []>, precision = #tpu.contract_precision<fp32>} : vector<6x16xf32>, vector<16x128xf32>, vector<6x128xf32> -> vector<6x128xf32>
    %cst_39 = arith.constant dense<0.000000e+00> : vector<6x6xf32>
    %43 = tpu.matmul %42, %1, %cst_39 {dimension_numbers = #tpu.dot_dimension_numbers<[1], [0], [0], [1], [0, 0, 1, 1], [], []>, precision = #tpu.contract_precision<fp32>} : vector<6x128xf32>, vector<128x6xf32>, vector<6x6xf32> -> vector<6x6xf32>
    %44 = arith.mulf %17, %33 : vector<16x128xf32>
    %cst_40 = arith.constant dense<0.000000e+00> : vector<6x128xf32>
    %45 = tpu.matmul %0, %44, %cst_40 {dimension_numbers = #tpu.dot_dimension_numbers<[1], [0], [0], [1], [0, 0, 1, 1], [], []>, precision = #tpu.contract_precision<fp32>} : vector<6x16xf32>, vector<16x128xf32>, vector<6x128xf32> -> vector<6x128xf32>
    %cst_41 = arith.constant dense<0.000000e+00> : vector<6x6xf32>
    %46 = tpu.matmul %45, %1, %cst_41 {dimension_numbers = #tpu.dot_dimension_numbers<[1], [0], [0], [1], [0, 0, 1, 1], [], []>, precision = #tpu.contract_precision<fp32>} : vector<6x128xf32>, vector<128x6xf32>, vector<6x6xf32> -> vector<6x6xf32>
    %47 = arith.mulf %35, %35 : vector<6x6xf32>
    %48 = arith.mulf %37, %37 : vector<6x6xf32>
    %49 = arith.mulf %35, %37 : vector<6x6xf32>
    %50 = arith.subf %40, %47 : vector<6x6xf32>
    %51 = arith.subf %43, %48 : vector<6x6xf32>
    %52 = arith.subf %46, %49 : vector<6x6xf32>
    %cst_42 = arith.constant 2.000000e+00 : f32
    %53 = vector.broadcast %cst_42 : f32 to vector<6x6xf32>
    %54 = arith.mulf %53, %49 : vector<6x6xf32>
    %cst_43 = arith.constant 6.502500e+00 : f32
    %55 = vector.broadcast %cst_43 : f32 to vector<6x6xf32>
    %56 = arith.addf %54, %55 : vector<6x6xf32>
    %cst_44 = arith.constant 2.000000e+00 : f32
    %57 = vector.broadcast %cst_44 : f32 to vector<6x6xf32>
    %58 = arith.mulf %57, %52 : vector<6x6xf32>
    %cst_45 = arith.constant 5.852250e+01 : f32
    %59 = vector.broadcast %cst_45 : f32 to vector<6x6xf32>
    %60 = arith.addf %58, %59 : vector<6x6xf32>
    %61 = arith.mulf %56, %60 : vector<6x6xf32>
    %62 = arith.addf %47, %48 : vector<6x6xf32>
    %cst_46 = arith.constant 6.502500e+00 : f32
    %63 = vector.broadcast %cst_46 : f32 to vector<6x6xf32>
    %64 = arith.addf %62, %63 : vector<6x6xf32>
    %65 = arith.addf %50, %51 : vector<6x6xf32>
    %cst_47 = arith.constant 5.852250e+01 : f32
    %66 = vector.broadcast %cst_47 : f32 to vector<6x6xf32>
    %67 = arith.addf %65, %66 : vector<6x6xf32>
    %68 = arith.mulf %64, %67 : vector<6x6xf32>
    %69 = arith.divf %61, %68 : vector<6x6xf32>
    %70 = vector.shape_cast %69 : vector<6x6xf32> to vector<1x6x6xf32>
    %cst_48 = arith.constant dense<0.000000e+00> : vector<1xf32>
    %71 = vector.multi_reduction <add>, %70, %cst_48 [1, 2] : vector<1x6x6xf32> to vector<1xf32>
    %72 = vector.shape_cast %71 : vector<1xf32> to vector<1x1x1xf32>
    %73 = vector.extract %72[0, 0, 0] : f32 from vector<1x1x1xf32>
    %74 = vector.broadcast %73 : f32 to vector<1x1xf32>
    %cst_49 = arith.constant 3.600000e+01 : f32
    %75 = vector.broadcast %cst_49 : f32 to vector<1x1xf32>
    %76 = arith.divf %74, %75 : vector<1x1xf32>
    %c0_50 = arith.constant 0 : index
    %c0_51 = arith.constant 0 : index
    %c0_52 = arith.constant 0 : index
    %77 = vector.load %arg5[%c0_50, %c0_51, %c0_52] : memref<1x1x1xf32, #tpu.memory_space<vmem>>, vector<1x1x1xf32>
    %78 = vector.shape_cast %77 : vector<1x1x1xf32> to vector<1x1xf32>
    %79 = vector.shape_cast %76 : vector<1x1xf32> to vector<1x1x1xf32>
    tpu.vector_store %arg5[%c0_50, %c0_51, %c0_52], %79 {strides = array<i32>} : memref<1x1x1xf32, #tpu.memory_space<vmem>>, vector<1x1x1xf32>,
    return
  }
  func.func @transform_0(%arg0: i32) -> (i32, i32) {
    %c0_i32 = arith.constant 0 : i32
    %c0_i32_0 = arith.constant 0 : i32
    %c0_i32_1 = arith.constant 0 : i32
    return %c0_i32, %c0_i32_0 : i32, i32
  }
  func.func @transform_1(%arg0: i32) -> (i32, i32) {
    %c0_i32 = arith.constant 0 : i32
    %c0_i32_0 = arith.constant 0 : i32
    %c0_i32_1 = arith.constant 0 : i32
    return %c0_i32, %c0_i32_0 : i32, i32
  }
  func.func @transform_2(%arg0: i32) -> (i32, i32, i32, i32) {
    %c0_i32 = arith.constant 0 : i32
    %c0_i32_0 = arith.constant 0 : i32
    %c0_i32_1 = arith.constant 0 : i32
    %c0_i32_2 = arith.constant 0 : i32
    return %arg0, %c0_i32, %c0_i32_0, %c0_i32_1 : i32, i32, i32, i32
  }
  func.func @transform_3(%arg0: i32) -> (i32, i32, i32, i32) {
    %c0_i32 = arith.constant 0 : i32
    %c0_i32_0 = arith.constant 0 : i32
    %c0_i32_1 = arith.constant 0 : i32
    %c0_i32_2 = arith.constant 0 : i32
    return %arg0, %c0_i32, %c0_i32_0, %c0_i32_1 : i32, i32, i32, i32
  }
  func.func @transform_4(%arg0: i32) -> (i32, i32, i32) {
    %c0_i32 = arith.constant 0 : i32
    %c0_i32_0 = arith.constant 0 : i32
    %c0_i32_1 = arith.constant 0 : i32
    return %arg0, %c0_i32, %c0_i32_0 : i32, i32, i32
  }
}

</mosaic_0001>

<llo_original>
// kernel: tpu_custom_call.1
$region0: #{tpu_custom_call.1}
  #allocation0 [shape = 'u32[]', space=smem, size = 0x4, offset = 0x4, fixed_abs, tag = 'smem constant byte address 0x4 - core index']
  #allocation1 [shape = 'u32[144,128]{1,0:T(1,128)}', space=vmem, size = 0x12000, scoped, tag = 'internal scratch']
  %s0 = inlined_call_operand.vmem [shape: f32[6,16], index: 0, kind: input, shape index: {}]
  %s1 = inlined_call_operand.vmem [shape: f32[128,6], index: 1, kind: input, shape index: {}]
  %s2 = inlined_call_operand.vmem [shape: f32[2,3,16,128], index: 2, kind: input, shape index: {}]
  %s3 = inlined_call_operand.hbm [shape: f32[2,3,16,128], index: 3, kind: input, shape index: {}]
  %s4 = inlined_call_operand.vmem [shape: f32[2,1,1], index: 4, kind: output, shape index: {}]
  %s5 = sld [smem:[#allocation0]]
  $region53: #{tpu_custom_call.1} parent=0
    _
  %s7 = ssub.s32 1, %s5
  %s8 = scalar_select 0, %s7, %s5
  $region1: #{tpu_custom_call.1} parent=0
    #allocation2 [shape = 'u8[49152]{0}', space=vmem, size = 0xc000, scoped, tag = 'input window, operand 3']
    #allocation3 [shape = 's32[2]{0}', space=sflag, size = 0x8, scoped, tag = 'scoped memory for tpu_custom_call.1']
    %9 = vsyncpa [#allocation3], 0
    %s10 = scalar_lea.sflag [#allocation3], 1
    %11 = vsyncpa %s10, 0
    loop: start=0, step=1, limit=4
    $region2: #{tpu_custom_call.1} parent=1 // loop_pre_header
      _
    $region3: #{tpu_custom_call.1} parent=1 // loop_header
      %s13 = sphi 0, %s17
      %p14 = scmp.ge.s32.totalorder %s13, 4
      %s21 = sphi 0, %s21
      %s23 = sphi 0, %s21
      %s24 = sphi 0, %s23
      %s38 = sphi 0, %s24
      %s42 = sphi 0, %s42
      %s44 = sphi 0, %s42
      %s45 = sphi 0, %s44
      %s59 = sphi 0, %s45
      %s65 = sphi 0, %s67
      %s68 = sphi 0, %s65
      %s69 = sphi 0, %s68
      %s85 = sphi 0, %s69
      %s91 = sphi 0, %s93
      %s94 = sphi 0, %s91
      %s95 = sphi 0, %s94
      %s111 = sphi 0, %s95
      %s117 = sphi 0, %s119
      %s120 = sphi 0, %s117
      %s121 = sphi 0, %s120
      %s137 = sphi 0, %s121
    $region4: #{tpu_custom_call.1} parent=1 // loop_header_branch
      %16 = sbr.rel (%p14) target = $region8
    $region5: #{tpu_custom_call.1} parent=1 // loop_body
      %s18 = ssub.s32 %s13, 1
      %s19 = ssub.s32 %s13, 2
      %s20 = sadd.s32 %s13, 1
      %s22 = sadd.s32 %s21, 1
      %p25 = scmp.eq.s32.totalorder %s13, 1
      %p26 = scmp.ne.s32.totalorder %s21, %s23
      %p27 = scmp.eq.s32.totalorder %s13, 0
      %p28 = por %p26, %p27
      %p29 = scmp.ne.s32.totalorder %s21, %s23
      %p30 = scmp.eq.s32.totalorder %s18, 1
      %p31 = por %p29, %p30
      %p32 = scmp.ne.s32.totalorder %s23, %s24
      %p33 = scmp.eq.s32.totalorder %s18, 0
      %p34 = por %p32, %p33
      %p35 = scmp.ne.s32.totalorder %s23, %s24
      %p36 = scmp.eq.s32.totalorder %s19, 1
      %p37 = por %p35, %p36
      %p39 = scmp.ne.s32.totalorder %s24, %s38
      %p40 = scmp.eq.s32.totalorder %s19, 0
      %p41 = por %p39, %p40
      %s43 = sadd.s32 %s42, 1
      %p46 = scmp.eq.s32.totalorder %s13, 1
      %p47 = scmp.ne.s32.totalorder %s42, %s44
      %p48 = scmp.eq.s32.totalorder %s13, 0
      %p49 = por %p47, %p48
      %p50 = scmp.ne.s32.totalorder %s42, %s44
      %p51 = scmp.eq.s32.totalorder %s18, 1
      %p52 = por %p50, %p51
      %p53 = scmp.ne.s32.totalorder %s44, %s45
      %p54 = scmp.eq.s32.totalorder %s18, 0
      %p55 = por %p53, %p54
      %p56 = scmp.ne.s32.totalorder %s44, %s45
      %p57 = scmp.eq.s32.totalorder %s19, 1
      %p58 = por %p56, %p57
      %p60 = scmp.ne.s32.totalorder %s45, %s59
      %p61 = scmp.eq.s32.totalorder %s19, 0
      %p62 = por %p60, %p61
      %s63 = ssub.s32 %s13, %s20
      %p64 = scmp.eq.s32.totalorder %s63, 0
      %s66 = sadd.s32 %s65, 1
      %s67 = scalar_select %p64, %s65, %s66
      %p70 = pneg %p64
      %p71 = scmp.eq.s32.totalorder %s13, 1
      %p72 = por %p70, %p71
      %p73 = scmp.ne.s32.totalorder %s65, %s68
      %p74 = scmp.eq.s32.totalorder %s13, 0
      %p75 = por %p73, %p74
      %p76 = scmp.ne.s32.totalorder %s65, %s68
      %p77 = scmp.eq.s32.totalorder %s18, 1
      %p78 = por %p76, %p77
      %p79 = scmp.ne.s32.totalorder %s68, %s69
      %p80 = scmp.eq.s32.totalorder %s18, 0
      %p81 = por %p79, %p80
      %p82 = scmp.ne.s32.totalorder %s68, %s69
      %p83 = scmp.eq.s32.totalorder %s19, 1
      %p84 = por %p82, %p83
      %p86 = scmp.ne.s32.totalorder %s69, %s85
      %p87 = scmp.eq.s32.totalorder %s19, 0
      %p88 = por %p86, %p87
      %s89 = ssub.s32 %s13, %s20
      %p90 = scmp.eq.s32.totalorder %s89, 0
      %s92 = sadd.s32 %s91, 1
      %s93 = scalar_select %p90, %s91, %s92
      %p96 = pneg %p90
      %p97 = scmp.eq.s32.totalorder %s13, 1
      %p98 = por %p96, %p97
      %p99 = scmp.ne.s32.totalorder %s91, %s94
      %p100 = scmp.eq.s32.totalorder %s13, 0
      %p101 = por %p99, %p100
      %p102 = scmp.ne.s32.totalorder %s91, %s94
      %p103 = scmp.eq.s32.totalorder %s18, 1
      %p104 = por %p102, %p103
      %p105 = scmp.ne.s32.totalorder %s94, %s95
      %p106 = scmp.eq.s32.totalorder %s18, 0
      %p107 = por %p105, %p106
      %p108 = scmp.ne.s32.totalorder %s94, %s95
      %p109 = scmp.eq.s32.totalorder %s19, 1
      %p110 = por %p108, %p109
      %p112 = scmp.ne.s32.totalorder %s95, %s111
      %p113 = scmp.eq.s32.totalorder %s19, 0
      %p114 = por %p112, %p113
      %s115 = ssub.s32 %s13, %s20
      %p116 = scmp.eq.s32.totalorder %s115, 0
      %s118 = sadd.s32 %s117, 1
      %s119 = scalar_select %p116, %s117, %s118
      %p122 = pneg %p116
      %p123 = scmp.eq.s32.totalorder %s13, 1
      %p124 = por %p122, %p123
      %p125 = scmp.ne.s32.totalorder %s117, %s120
      %p126 = scmp.eq.s32.totalorder %s13, 0
      %p127 = por %p125, %p126
      %p128 = scmp.ne.s32.totalorder %s117, %s120
      %p129 = scmp.eq.s32.totalorder %s18, 1
      %p130 = por %p128, %p129
      %p131 = scmp.ne.s32.totalorder %s120, %s121
      %p132 = scmp.eq.s32.totalorder %s18, 0
      %p133 = por %p131, %p132
      %p134 = scmp.ne.s32.totalorder %s120, %s121
      %p135 = scmp.eq.s32.totalorder %s19, 1
      %p136 = por %p134, %p135
      %p138 = scmp.ne.s32.totalorder %s121, %s137
      %p139 = scmp.eq.s32.totalorder %s19, 0
      %p140 = por %p138, %p139
      %p141 = scmp.le.s32.totalorder 1, %s13
      %p142 = scmp.lt.s32.totalorder %s13, 3
      %p143 = pnand %p141, %p142
      %p144 = pneg %p143
      // Predicated region
      $region9: #{tpu_custom_call.1} parent=5 // pred_check
        _
      $region10: #{tpu_custom_call.1} parent=5 // pred_check_branch
        %146 = sbr.rel (%p143) target = $region12
      $region11: #{tpu_custom_call.1} parent=5 // pred_region
        %s147 = ssub.s32 %s13, 1
        // Predicated region
        $region13: #{tpu_custom_call.1} parent=11 // pred_check
          %p148 = pneg %p34
        $region14: #{tpu_custom_call.1} parent=11 // pred_check_branch
          %150 = sbr.rel (%p148) target = $region16
        $region15: #{tpu_custom_call.1} parent=11 // pred_region
          _
        $region16: #{tpu_custom_call.1} parent=11 // pred_fallthru
          _
        // Predicated region
        $region17: #{tpu_custom_call.1} parent=11 // pred_check
          %p151 = pneg %p55
        $region18: #{tpu_custom_call.1} parent=11 // pred_check_branch
          %153 = sbr.rel (%p151) target = $region20
        $region19: #{tpu_custom_call.1} parent=11 // pred_region
          _
        $region20: #{tpu_custom_call.1} parent=11 // pred_fallthru
          _
      $region12: #{tpu_custom_call.1} parent=5 // pred_fallthru
        _
      %p154 = scmp.lt.s32.totalorder %s13, 2
      // Predicated region
      $region21: #{tpu_custom_call.1} parent=5 // pred_check
        %p155 = pneg %p154
      $region22: #{tpu_custom_call.1} parent=5 // pred_check_branch
        %157 = sbr.rel (%p155) target = $region24
      $region23: #{tpu_custom_call.1} parent=5 // pred_region
        // Predicated region
        $region25: #{tpu_custom_call.1} parent=23 // pred_check
          %p158 = pneg %p75
        $region26: #{tpu_custom_call.1} parent=23 // pred_check_branch
          %160 = sbr.rel (%p158) target = $region28
        $region27: #{tpu_custom_call.1} parent=23 // pred_region
          %p161 = scmp.lt.s32.totalorder %s13, 1
          %s162 = scalar_select %p161, %s13, 1
          %s163 = smul.addr %s162, 6
          %s164 = smul.addr %s163, 8
          %s165 = scalar_lea.vmem %s2, %s164
        $region28: #{tpu_custom_call.1} parent=23 // pred_fallthru
          _
        // Predicated region
        $region29: #{tpu_custom_call.1} parent=23 // pred_check
          %p166 = pneg %p101
        $region30: #{tpu_custom_call.1} parent=23 // pred_check_branch
          %168 = sbr.rel (%p166) target = $region32
        $region31: #{tpu_custom_call.1} parent=23 // pred_region
          %s169 = sand.u32 %s91, 1
          %s170 = scalar_lea.sflag [#allocation3], %s169
          %s171 = sand.u32 %s91, 1
          %s172 = smul.addr %s171, 48
          %s173 = scalar_lea.vmem [#allocation2], %s172
          %s175 = ssub.s32 768, 768
          %176 = vsyncadd %s170, %s175
          %s177 = smul.addr %s13, 6
          %s178 = smul.addr %s177, 128
          %s179 = scalar_lea.hbm %s3, %s178
          %s180 = sshll.u32 %s173, 4
          %s181 = int_to_ptr.vmem [resolvable:$true] %s180
          %186 = dma.hbm_to_vmem [thread:$0]  %s179, 768, %s181, %s170, 128, 128, 8
        $region32: #{tpu_custom_call.1} parent=23 // pred_fallthru
          _
      $region24: #{tpu_custom_call.1} parent=5 // pred_fallthru
        _
      %p187 = scmp.le.s32.totalorder 1, %s13
      %p188 = scmp.lt.s32.totalorder %s13, 3
      %p189 = pnand %p187, %p188
      %p190 = pneg %p189
      // Predicated region
      $region33: #{tpu_custom_call.1} parent=5 // pred_check
        _
      $region34: #{tpu_custom_call.1} parent=5 // pred_check_branch
        %192 = sbr.rel (%p189) target = $region36
      $region35: #{tpu_custom_call.1} parent=5 // pred_region
        %s193 = ssub.s32 %s13, 1
        %s194 = sand.u32 %s94, 1
        %s195 = scalar_lea.sflag [#allocation3], %s194
        %s196 = sand.u32 %s94, 1
        %s197 = smul.addr %s196, 48
        %s198 = scalar_lea.vmem [#allocation2], %s197
        // Predicated region
        $region37: #{tpu_custom_call.1} parent=35 // pred_check
          %p199 = pneg %p107
        $region38: #{tpu_custom_call.1} parent=35 // pred_check_branch
          %201 = sbr.rel (%p199) target = $region40
        $region39: #{tpu_custom_call.1} parent=35 // pred_region
          %202 = dma.done %s195, 768
        $region40: #{tpu_custom_call.1} parent=35 // pred_fallthru
          _
        %p203 = pneg %p34
        %p204 = pneg %p31
        %p205 = pneg %p55
        %p206 = pneg %p52
        %p207 = scmp.lt.s32.totalorder %s18, 1
        %s208 = scalar_select %p207, %s18, 1
        %s209 = smul.addr %s208, 6
        %s210 = smul.addr %s209, 8
        %s211 = scalar_lea.vmem %s2, %s210
        %p212 = pneg %p81
        %p213 = pneg %p78
        %s214 = sand.u32 %s94, 1
        %s215 = scalar_lea.sflag [#allocation3], %s214
        %s216 = sand.u32 %s94, 1
        %s217 = smul.addr %s216, 48
        %s218 = scalar_lea.vmem [#allocation2], %s217
        %p219 = pneg %p107
        %p220 = pneg %p104
        %p221 = pneg %p133
        %p222 = pneg %p130
        %p223 = scmp.lt.s32.totalorder %s18, 1
        %s224 = scalar_select %p223, %s18, 1
        %s225 = scalar_lea.vmem %s4, %s224
        %p226 = scmp.lt.s32.totalorder %s18, 1
        %s227 = scalar_select %p226, %s18, 1
        %s228 = smul.addr %s227, 6
        %s229 = smul.addr %s228, 8
        %s230 = scalar_lea.vmem %s2, %s229
        %p231 = scmp.lt.s32.totalorder %s18, 1
        %s232 = scalar_select %p231, %s18, 1
        %s233 = scalar_lea.vmem %s4, %s232
        %v234 = vld [vmem:[%s0] sm:$0x3f]
        %v235 = vld [vmem:[%s1] sm:$0xff]
        %v236 = vld [vmem:[%s1 + $0x8] sm:$0xff]
        %v237 = vld [vmem:[%s1 + $0x10] sm:$0xff]
        %v238 = vld [vmem:[%s1 + $0x18] sm:$0xff]
        %v239 = vld [vmem:[%s1 + $0x20] sm:$0xff]
        %v240 = vld [vmem:[%s1 + $0x28] sm:$0xff]
        %v241 = vld [vmem:[%s1 + $0x30] sm:$0xff]
        %v242 = vld [vmem:[%s1 + $0x38] sm:$0xff]
        %v243 = vld [vmem:[%s1 + $0x40] sm:$0xff]
        %v244 = vld [vmem:[%s1 + $0x48] sm:$0xff]
        %v245 = vld [vmem:[%s1 + $0x50] sm:$0xff]
        %v246 = vld [vmem:[%s1 + $0x58] sm:$0xff]
        %v247 = vld [vmem:[%s1 + $0x60] sm:$0xff]
        %v248 = vld [vmem:[%s1 + $0x68] sm:$0xff]
        %v249 = vld [vmem:[%s1 + $0x70] sm:$0xff]
        %v250 = vld [vmem:[%s1 + $0x78] sm:$0xff]
        %v251 = vld [vmem:[%s230] sm:$0xff]
        %v252 = vld [vmem:[%s230 + $0x8] sm:$0xff]
        %s253 = scalar_lea.vmem %s230, 16
        %v254 = vld [vmem:[%s253] sm:$0xff]
        %v255 = vld [vmem:[%s253 + $0x8] sm:$0xff]
        %s256 = scalar_lea.vmem %s230, 32
        %v257 = vld [vmem:[%s256] sm:$0xff]
        %v258 = vld [vmem:[%s256 + $0x8] sm:$0xff]
        %v259 = vmul.f32 %v251, 65.481
        %v260 = vmul.f32 %v252, 65.481
        %v261 = vmul.f32 %v254, 128.553
        %v262 = vmul.f32 %v255, 128.553
        %v263 = vadd.f32 %v259, %v261
        %v264 = vadd.f32 %v260, %v262
        %v265 = vmul.f32 %v257, 24.966
        %v266 = vmul.f32 %v258, 24.966
        %v267 = vadd.f32 %v263, %v265
        %v268 = vadd.f32 %v264, %v266
        %v269 = vadd.f32 %v267, 16.0
        %v270 = vadd.f32 %v268, 16.0
        %v271 = vld [vmem:[%s198] sm:$0xff]
        %v272 = vld [vmem:[%s198 + $0x8] sm:$0xff]
        %s273 = scalar_lea.vmem %s198, 16 [#allocation2]
        %v274 = vld [vmem:[%s273] sm:$0xff]
        %v275 = vld [vmem:[%s273 + $0x8] sm:$0xff]
        %s276 = scalar_lea.vmem %s198, 32 [#allocation2]
        %v277 = vld [vmem:[%s276] sm:$0xff]
        %v278 = vld [vmem:[%s276 + $0x8] sm:$0xff]
        %v279 = vmul.f32 %v271, 65.481
        %v280 = vmul.f32 %v272, 65.481
        %v281 = vmul.f32 %v274, 128.553
        %v282 = vmul.f32 %v275, 128.553
        %v283 = vadd.f32 %v279, %v281
        %v284 = vadd.f32 %v280, %v282
        %v285 = vmul.f32 %v277, 24.966
        %v286 = vmul.f32 %v278, 24.966
        %v287 = vadd.f32 %v283, %v285
        %v288 = vadd.f32 %v284, %v286
        %v289 = vadd.f32 %v287, 16.0
        %v290 = vadd.f32 %v288, 16.0
        %vm291 = vcmask 130048
        %v293 = vsel %vm291, %v234, 0
        %295 = vmatprep.subr.mxu0 0.0
        %296 = vmatpush1.msra.mxu0 0.0
        %297 = vmatprep.subr.mxu0 0.0
        %298 = vmatpush1.msra.mxu0 0.0
        %299 = vmatprep.subr.mxu0 0.0
        %300 = vmatpush1.msra.mxu0 0.0
        %301 = vmatprep.subr.mxu0 0.0
        %302 = vmatpush1.msra.mxu0 0.0
        %303 = vmatprep.subr.mxu0 0.0
        %304 = vmatpush1.msra.mxu0 0.0
        %305 = vmatprep.subr.mxu0 0.0
        %306 = vmatpush1.msra.mxu0 0.0
        %307 = vmatprep.subr.mxu0 0.0
        %308 = vmatpush1.msra.mxu0 0.0
        %309 = vmatprep.subr.mxu0 0.0
        %310 = vmatpush1.msra.mxu0 0.0
        %311 = vmatprep.subr.mxu0 0.0
        %312 = vmatpush1.msra.mxu0 0.0
        %313 = vmatprep.subr.mxu0 0.0
        %314 = vmatpush1.msra.mxu0 0.0
        %315 = vmatprep.subr.mxu0 0.0
        %316 = vmatpush1.msra.mxu0 0.0
        %317 = vmatprep.subr.mxu0 0.0
        %318 = vmatpush1.msra.mxu0 0.0
        %319 = vmatprep.subr.mxu0 0.0
        %320 = vmatpush1.msra.mxu0 0.0
        %321 = vmatprep.subr.mxu0 0.0
        %322 = vmatpush1.msra.mxu0 0.0
        %323 = vmatprep.subr.mxu0 0.0
        %v324 = vand.u32 %v270, 4294901760
        %325 = vmatpush1.msra.mxu0 %v324
        %326 = vmatprep.subr.mxu0 0.0
        %v327 = vand.u32 %v269, 4294901760
        %328 = vmatpush1.msra.mxu0 %v327
        %329 = vmatprep.subr.mxu0 0.0
        %330 = vmatpush2.msra.mxu0 0.0
        %331 = vmatprep.subr.mxu0 0.0
        %332 = vmatpush2.msra.mxu0 0.0
        %333 = vmatprep.subr.mxu0 0.0
        %334 = vmatpush2.msra.mxu0 0.0
        %335 = vmatprep.subr.mxu0 0.0
        %336 = vmatpush2.msra.mxu0 0.0
        %337 = vmatprep.subr.mxu0 0.0
        %338 = vmatpush2.msra.mxu0 0.0
        %339 = vmatprep.subr.mxu0 0.0
        %340 = vmatpush2.msra.mxu0 0.0
        %341 = vmatprep.subr.mxu0 0.0
        %342 = vmatpush2.msra.mxu0 0.0
        %343 = vmatprep.subr.mxu0 0.0
        %344 = vmatpush2.msra.mxu0 0.0
        %345 = vmatprep.subr.mxu0 0.0
        %346 = vmatpush2.msra.mxu0 0.0
        %347 = vmatprep.subr.mxu0 0.0
        %348 = vmatpush2.msra.mxu0 0.0
        %349 = vmatprep.subr.mxu0 0.0
        %350 = vmatpush2.msra.mxu0 0.0
        %351 = vmatprep.subr.mxu0 0.0
        %352 = vmatpush2.msra.mxu0 0.0
        %353 = vmatprep.subr.mxu0 0.0
        %354 = vmatpush2.msra.mxu0 0.0
        %355 = vmatprep.subr.mxu0 0.0
        %356 = vmatpush2.msra.mxu0 0.0
        %357 = vmatprep.subr.mxu0 0.0
        %358 = vmatpush2.msra.mxu0 0.0
        %359 = vmatprep.subr.mxu0 0.0
        %360 = vmatpush2.msra.mxu0 0.0
        %361 = vmatprep.mubr.f32.mxu0 0.0
        %v362 = vand.u32 %v293, 4294901760
        %v363 = vsub.f32 %v293, %v362
        %v364 = vand.u32 %v363, 4294901760
        %v365 = vsub.f32 %v363, %v364
        %v366 = vand.u32 %v365, 4294901760
        %367 = vmatmul.mubr.f32.gmra.mxu0 %v366
        %v368 = vpop.f32.mrf.mxu0
        %v369 = vadd.f32 0.0, %v368
        %v370 = vpop.f32.mrf.mxu0
        %371 = vdwg.mxu0
        %372 = vmatprep.subr.mxu0 0.0
        %373 = vmatpush1.msra.mxu0 0.0
        %374 = vmatprep.subr.mxu0 0.0
        %375 = vmatpush1.msra.mxu0 0.0
        %376 = vmatprep.subr.mxu0 0.0
        %377 = vmatpush1.msra.mxu0 0.0
        %378 = vmatprep.subr.mxu0 0.0
        %379 = vmatpush1.msra.mxu0 0.0
        %380 = vmatprep.subr.mxu0 0.0
        %381 = vmatpush1.msra.mxu0 0.0
        %382 = vmatprep.subr.mxu0 0.0
        %383 = vmatpush1.msra.mxu0 0.0
        %384 = vmatprep.subr.mxu0 0.0
        %385 = vmatpush1.msra.mxu0 0.0
        %386 = vmatprep.subr.mxu0 0.0
        %387 = vmatpush1.msra.mxu0 0.0
        %388 = vmatprep.subr.mxu0 0.0
        %389 = vmatpush1.msra.mxu0 0.0
        %390 = vmatprep.subr.mxu0 0.0
        %391 = vmatpush1.msra.mxu0 0.0
        %392 = vmatprep.subr.mxu0 0.0
        %393 = vmatpush1.msra.mxu0 0.0
        %394 = vmatprep.subr.mxu0 0.0
        %395 = vmatpush1.msra.mxu0 0.0
        %396 = vmatprep.subr.mxu0 0.0
        %397 = vmatpush1.msra.mxu0 0.0
        %398 = vmatprep.subr.mxu0 0.0
        %399 = vmatpush1.msra.mxu0 0.0
        %400 = vmatprep.subr.mxu0 0.0
        %v401 = vand.u32 %v270, 4294901760
        %v402 = vsub.f32 %v270, %v401
        %v403 = vand.u32 %v402, 4294901760
        %v404 = vsub.f32 %v402, %v403
        %v405 = vand.u32 %v404, 4294901760
        %406 = vmatpush1.msra.mxu0 %v405
        %407 = vmatprep.subr.mxu0 0.0
        %v408 = vand.u32 %v269, 4294901760
        %v409 = vsub.f32 %v269, %v408
        %v410 = vand.u32 %v409, 4294901760
        %v411 = vsub.f32 %v409, %v410
        %v412 = vand.u32 %v411, 4294901760
        %413 = vmatpush1.msra.mxu0 %v412
        %414 = vmatprep.subr.mxu0 0.0
        %415 = vmatpush2.msra.mxu0 0.0
        %416 = vmatprep.subr.mxu0 0.0
        %417 = vmatpush2.msra.mxu0 0.0
        %418 = vmatprep.subr.mxu0 0.0
        %419 = vmatpush2.msra.mxu0 0.0
        %420 = vmatprep.subr.mxu0 0.0
        %421 = vmatpush2.msra.mxu0 0.0
        %422 = vmatprep.subr.mxu0 0.0
        %423 = vmatpush2.msra.mxu0 0.0
        %424 = vmatprep.subr.mxu0 0.0
        %425 = vmatpush2.msra.mxu0 0.0
        %426 = vmatprep.subr.mxu0 0.0
        %427 = vmatpush2.msra.mxu0 0.0
        %428 = vmatprep.subr.mxu0 0.0
        %429 = vmatpush2.msra.mxu0 0.0
        %430 = vmatprep.subr.mxu0 0.0
        %431 = vmatpush2.msra.mxu0 0.0
        %432 = vmatprep.subr.mxu0 0.0
        %433 = vmatpush2.msra.mxu0 0.0
        %434 = vmatprep.subr.mxu0 0.0
        %435 = vmatpush2.msra.mxu0 0.0
        %436 = vmatprep.subr.mxu0 0.0
        %437 = vmatpush2.msra.mxu0 0.0
        %438 = vmatprep.subr.mxu0 0.0
        %439 = vmatpush2.msra.mxu0 0.0
        %440 = vmatprep.subr.mxu0 0.0
        %441 = vmatpush2.msra.mxu0 0.0
        %442 = vmatprep.subr.mxu0 0.0
        %443 = vmatpush2.msra.mxu0 0.0
        %444 = vmatprep.subr.mxu0 0.0
        %445 = vmatpush2.msra.mxu0 0.0
        %446 = vmatprep.mubr.f32.mxu0 0.0
        %v447 = vand.u32 %v293, 4294901760
        %448 = vmatmul.mubr.f32.gmra.mxu0 %v447
        %v449 = vpop.f32.mrf.mxu0
        %v450 = vadd.f32 %v369, %v449
        %v451 = vpop.f32.mrf.mxu0
        %452 = vdwg.mxu0
        %453 = vmatprep.subr.mxu0 0.0
        %454 = vmatpush1.msra.mxu0 0.0
        %455 = vmatprep.subr.mxu0 0.0
        %456 = vmatpush1.msra.mxu0 0.0
        %457 = vmatprep.subr.mxu0 0.0
        %458 = vmatpush1.msra.mxu0 0.0
        %459 = vmatprep.subr.mxu0 0.0
        %460 = vmatpush1.msra.mxu0 0.0
        %461 = vmatprep.subr.mxu0 0.0
        %462 = vmatpush1.msra.mxu0 0.0
        %463 = vmatprep.subr.mxu0 0.0
        %464 = vmatpush1.msra.mxu0 0.0
        %465 = vmatprep.subr.mxu0 0.0
        %466 = vmatpush1.msra.mxu0 0.0
        %467 = vmatprep.subr.mxu0 0.0
        %468 = vmatpush1.msra.mxu0 0.0
        %469 = vmatprep.subr.mxu0 0.0
        %470 = vmatpush1.msra.mxu0 0.0
        %471 = vmatprep.subr.mxu0 0.0
        %472 = vmatpush1.msra.mxu0 0.0
        %473 = vmatprep.subr.mxu0 0.0
        %474 = vmatpush1.msra.mxu0 0.0
        %475 = vmatprep.subr.mxu0 0.0
        %476 = vmatpush1.msra.mxu0 0.0
        %477 = vmatprep.subr.mxu0 0.0
        %478 = vmatpush1.msra.mxu0 0.0
        %479 = vmatprep.subr.mxu0 0.0
        %480 = vmatpush1.msra.mxu0 0.0
        %481 = vmatprep.subr.mxu0 0.0
        %v482 = vand.u32 %v270, 4294901760
        %v483 = vsub.f32 %v270, %v482
        %484 = vmatpush1.msra.mxu0 %v483
        %485 = vmatprep.subr.mxu0 0.0
        %v486 = vand.u32 %v269, 4294901760
        %v487 = vsub.f32 %v269, %v486
        %488 = vmatpush1.msra.mxu0 %v487
        %489 = vmatprep.subr.mxu0 0.0
        %490 = vmatpush2.msra.mxu0 0.0
        %491 = vmatprep.subr.mxu0 0.0
        %492 = vmatpush2.msra.mxu0 0.0
        %493 = vmatprep.subr.mxu0 0.0
        %494 = vmatpush2.msra.mxu0 0.0
        %495 = vmatprep.subr.mxu0 0.0
        %496 = vmatpush2.msra.mxu0 0.0
        %497 = vmatprep.subr.mxu0 0.0
        %498 = vmatpush2.msra.mxu0 0.0
        %499 = vmatprep.subr.mxu0 0.0
        %500 = vmatpush2.msra.mxu0 0.0
        %501 = vmatprep.subr.mxu0 0.0
        %502 = vmatpush2.msra.mxu0 0.0
        %503 = vmatprep.subr.mxu0 0.0
        %504 = vmatpush2.msra.mxu0 0.0
        %505 = vmatprep.subr.mxu0 0.0
        %506 = vmatpush2.msra.mxu0 0.0
        %507 = vmatprep.subr.mxu0 0.0
        %508 = vmatpush2.msra.mxu0 0.0
        %509 = vmatprep.subr.mxu0 0.0
        %510 = vmatpush2.msra.mxu0 0.0
        %511 = vmatprep.subr.mxu0 0.0
        %512 = vmatpush2.msra.mxu0 0.0
        %513 = vmatprep.subr.mxu0 0.0
        %514 = vmatpush2.msra.mxu0 0.0
        %515 = vmatprep.subr.mxu0 0.0
        %516 = vmatpush2.msra.mxu0 0.0
        %517 = vmatprep.subr.mxu0 0.0
        %518 = vmatpush2.msra.mxu0 0.0
        %519 = vmatprep.subr.mxu0 0.0
        %520 = vmatpush2.msra.mxu0 0.0
        %521 = vmatprep.mubr.f32.mxu0 0.0
        %v522 = vand.u32 %v293, 4294901760
        %v523 = vsub.f32 %v293, %v522
        %524 = vmatmul.mubr.f32.gmra.mxu0 %v523
        %v525 = vpop.f32.mrf.mxu0
        %v526 = vadd.f32 %v450, %v525
        %v527 = vpop.f32.mrf.mxu0
        %528 = vdwg.mxu0
        %529 = vmatprep.subr.mxu0 0.0
        %530 = vmatpush1.msra.mxu0 0.0
        %531 = vmatprep.subr.mxu0 0.0
        %532 = vmatpush1.msra.mxu0 0.0
        %533 = vmatprep.subr.mxu0 0.0
        %534 = vmatpush1.msra.mxu0 0.0
        %535 = vmatprep.subr.mxu0 0.0
        %536 = vmatpush1.msra.mxu0 0.0
        %537 = vmatprep.subr.mxu0 0.0
        %538 = vmatpush1.msra.mxu0 0.0
        %539 = vmatprep.subr.mxu0 0.0
        %540 = vmatpush1.msra.mxu0 0.0
        %541 = vmatprep.subr.mxu0 0.0
        %542 = vmatpush1.msra.mxu0 0.0
        %543 = vmatprep.subr.mxu0 0.0
        %544 = vmatpush1.msra.mxu0 0.0
        %545 = vmatprep.subr.mxu0 0.0
        %546 = vmatpush1.msra.mxu0 0.0
        %547 = vmatprep.subr.mxu0 0.0
        %548 = vmatpush1.msra.mxu0 0.0
        %549 = vmatprep.subr.mxu0 0.0
        %550 = vmatpush1.msra.mxu0 0.0
        %551 = vmatprep.subr.mxu0 0.0
        %552 = vmatpush1.msra.mxu0 0.0
        %553 = vmatprep.subr.mxu0 0.0
        %554 = vmatpush1.msra.mxu0 0.0
        %555 = vmatprep.subr.mxu0 0.0
        %556 = vmatpush1.msra.mxu0 0.0
        %557 = vmatprep.subr.mxu0 0.0
        %v558 = vand.u32 %v270, 4294901760
        %559 = vmatpush1.msra.mxu0 %v558
        %560 = vmatprep.subr.mxu0 0.0
        %v561 = vand.u32 %v269, 4294901760
        %562 = vmatpush1.msra.mxu0 %v561
        %563 = vmatprep.subr.mxu0 0.0
        %564 = vmatpush2.msra.mxu0 0.0
        %565 = vmatprep.subr.mxu0 0.0
        %566 = vmatpush2.msra.mxu0 0.0
        %567 = vmatprep.subr.mxu0 0.0
        %568 = vmatpush2.msra.mxu0 0.0
        %569 = vmatprep.subr.mxu0 0.0
        %570 = vmatpush2.msra.mxu0 0.0
        %571 = vmatprep.subr.mxu0 0.0
        %572 = vmatpush2.msra.mxu0 0.0
        %573 = vmatprep.subr.mxu0 0.0
        %574 = vmatpush2.msra.mxu0 0.0
        %575 = vmatprep.subr.mxu0 0.0
        %576 = vmatpush2.msra.mxu0 0.0
        %577 = vmatprep.subr.mxu0 0.0
        %578 = vmatpush2.msra.mxu0 0.0
        %579 = vmatprep.subr.mxu0 0.0
        %580 = vmatpush2.msra.mxu0 0.0
        %581 = vmatprep.subr.mxu0 0.0
        %582 = vmatpush2.msra.mxu0 0.0
        %583 = vmatprep.subr.mxu0 0.0
        %584 = vmatpush2.msra.mxu0 0.0
        %585 = vmatprep.subr.mxu0 0.0
        %586 = vmatpush2.msra.mxu0 0.0
        %587 = vmatprep.subr.mxu0 0.0
        %588 = vmatpush2.msra.mxu0 0.0
        %589 = vmatprep.subr.mxu0 0.0
        %590 = vmatpush2.msra.mxu0 0.0
        %591 = vmatprep.subr.mxu0 0.0
        %592 = vmatpush2.msra.mxu0 0.0
        %593 = vmatprep.subr.mxu0 0.0
        %594 = vmatpush2.msra.mxu0 0.0
        %595 = vmatprep.mubr.f32.mxu0 0.0
        %v596 = vand.u32 %v293, 4294901760
        %v597 = vsub.f32 %v293, %v596
        %v598 = vand.u32 %v597, 4294901760
        %599 = vmatmul.mubr.f32.gmra.mxu0 %v598
        %v600 = vpop.f32.mrf.mxu0
        %v601 = vadd.f32 %v526, %v600
        %v602 = vpop.f32.mrf.mxu0
        %603 = vdwg.mxu0
        %604 = vmatprep.subr.mxu0 0.0
        %605 = vmatpush1.msra.mxu0 0.0
        %606 = vmatprep.subr.mxu0 0.0
        %607 = vmatpush1.msra.mxu0 0.0
        %608 = vmatprep.subr.mxu0 0.0
        %609 = vmatpush1.msra.mxu0 0.0
        %610 = vmatprep.subr.mxu0 0.0
        %611 = vmatpush1.msra.mxu0 0.0
        %612 = vmatprep.subr.mxu0 0.0
        %613 = vmatpush1.msra.mxu0 0.0
        %614 = vmatprep.subr.mxu0 0.0
        %615 = vmatpush1.msra.mxu0 0.0
        %616 = vmatprep.subr.mxu0 0.0
        %617 = vmatpush1.msra.mxu0 0.0
        %618 = vmatprep.subr.mxu0 0.0
        %619 = vmatpush1.msra.mxu0 0.0
        %620 = vmatprep.subr.mxu0 0.0
        %621 = vmatpush1.msra.mxu0 0.0
        %622 = vmatprep.subr.mxu0 0.0
        %623 = vmatpush1.msra.mxu0 0.0
        %624 = vmatprep.subr.mxu0 0.0
        %625 = vmatpush1.msra.mxu0 0.0
        %626 = vmatprep.subr.mxu0 0.0
        %627 = vmatpush1.msra.mxu0 0.0
        %628 = vmatprep.subr.mxu0 0.0
        %629 = vmatpush1.msra.mxu0 0.0
        %630 = vmatprep.subr.mxu0 0.0
        %631 = vmatpush1.msra.mxu0 0.0
        %632 = vmatprep.subr.mxu0 0.0
        %v633 = vand.u32 %v270, 4294901760
        %v634 = vsub.f32 %v270, %v633
        %v635 = vand.u32 %v634, 4294901760
        %636 = vmatpush1.msra.mxu0 %v635
        %637 = vmatprep.subr.mxu0 0.0
        %v638 = vand.u32 %v269, 4294901760
        %v639 = vsub.f32 %v269, %v638
        %v640 = vand.u32 %v639, 4294901760
        %641 = vmatpush1.msra.mxu0 %v640
        %642 = vmatprep.subr.mxu0 0.0
        %643 = vmatpush2.msra.mxu0 0.0
        %644 = vmatprep.subr.mxu0 0.0
        %645 = vmatpush2.msra.mxu0 0.0
        %646 = vmatprep.subr.mxu0 0.0
        %647 = vmatpush2.msra.mxu0 0.0
        %648 = vmatprep.subr.mxu0 0.0
        %649 = vmatpush2.msra.mxu0 0.0
        %650 = vmatprep.subr.mxu0 0.0
        %651 = vmatpush2.msra.mxu0 0.0
        %652 = vmatprep.subr.mxu0 0.0
        %653 = vmatpush2.msra.mxu0 0.0
        %654 = vmatprep.subr.mxu0 0.0
        %655 = vmatpush2.msra.mxu0 0.0
        %656 = vmatprep.subr.mxu0 0.0
        %657 = vmatpush2.msra.mxu0 0.0
        %658 = vmatprep.subr.mxu0 0.0
        %659 = vmatpush2.msra.mxu0 0.0
        %660 = vmatprep.subr.mxu0 0.0
        %661 = vmatpush2.msra.mxu0 0.0
        %662 = vmatprep.subr.mxu0 0.0
        %663 = vmatpush2.msra.mxu0 0.0
        %664 = vmatprep.subr.mxu0 0.0
        %665 = vmatpush2.msra.mxu0 0.0
        %666 = vmatprep.subr.mxu0 0.0
        %667 = vmatpush2.msra.mxu0 0.0
        %668 = vmatprep.subr.mxu0 0.0
        %669 = vmatpush2.msra.mxu0 0.0
        %670 = vmatprep.subr.mxu0 0.0
        %671 = vmatpush2.msra.mxu0 0.0
        %672 = vmatprep.subr.mxu0 0.0
        %673 = vmatpush2.msra.mxu0 0.0
        %674 = vmatprep.mubr.f32.mxu0 0.0
        %v675 = vand.u32 %v293, 4294901760
        %676 = vmatmul.mubr.f32.gmra.mxu0 %v675
        %v677 = vpop.f32.mrf.mxu0
        %v678 = vadd.f32 %v601, %v677
        %v679 = vpop.f32.mrf.mxu0
        %680 = vdwg.mxu0
        %681 = vmatprep.subr.mxu0 0.0
        %682 = vmatpush1.msra.mxu0 0.0
        %683 = vmatprep.subr.mxu0 0.0
        %684 = vmatpush1.msra.mxu0 0.0
        %685 = vmatprep.subr.mxu0 0.0
        %686 = vmatpush1.msra.mxu0 0.0
        %687 = vmatprep.subr.mxu0 0.0
        %688 = vmatpush1.msra.mxu0 0.0
        %689 = vmatprep.subr.mxu0 0.0
        %690 = vmatpush1.msra.mxu0 0.0
        %691 = vmatprep.subr.mxu0 0.0
        %692 = vmatpush1.msra.mxu0 0.0
        %693 = vmatprep.subr.mxu0 0.0
        %694 = vmatpush1.msra.mxu0 0.0
        %695 = vmatprep.subr.mxu0 0.0
        %696 = vmatpush1.msra.mxu0 0.0
        %697 = vmatprep.subr.mxu0 0.0
        %698 = vmatpush1.msra.mxu0 0.0
        %699 = vmatprep.subr.mxu0 0.0
        %700 = vmatpush1.msra.mxu0 0.0
        %701 = vmatprep.subr.mxu0 0.0
        %702 = vmatpush1.msra.mxu0 0.0
        %703 = vmatprep.subr.mxu0 0.0
        %704 = vmatpush1.msra.mxu0 0.0
        %705 = vmatprep.subr.mxu0 0.0
        %706 = vmatpush1.msra.mxu0 0.0
        %707 = vmatprep.subr.mxu0 0.0
        %708 = vmatpush1.msra.mxu0 0.0
        %709 = vmatprep.subr.mxu0 0.0
        %v710 = vand.u32 %v270, 4294901760
        %711 = vmatpush1.msra.mxu0 %v710
        %712 = vmatprep.subr.mxu0 0.0
        %v713 = vand.u32 %v269, 4294901760
        %714 = vmatpush1.msra.mxu0 %v713
        %715 = vmatprep.subr.mxu0 0.0
        %716 = vmatpush2.msra.mxu0 0.0
        %717 = vmatprep.subr.mxu0 0.0
        %718 = vmatpush2.msra.mxu0 0.0
        %719 = vmatprep.subr.mxu0 0.0
        %720 = vmatpush2.msra.mxu0 0.0
        %721 = vmatprep.subr.mxu0 0.0
        %722 = vmatpush2.msra.mxu0 0.0
        %723 = vmatprep.subr.mxu0 0.0
        %724 = vmatpush2.msra.mxu0 0.0
        %725 = vmatprep.subr.mxu0 0.0
        %726 = vmatpush2.msra.mxu0 0.0
        %727 = vmatprep.subr.mxu0 0.0
        %728 = vmatpush2.msra.mxu0 0.0
        %729 = vmatprep.subr.mxu0 0.0
        %730 = vmatpush2.msra.mxu0 0.0
        %731 = vmatprep.subr.mxu0 0.0
        %732 = vmatpush2.msra.mxu0 0.0
        %733 = vmatprep.subr.mxu0 0.0
        %734 = vmatpush2.msra.mxu0 0.0
        %735 = vmatprep.subr.mxu0 0.0
        %736 = vmatpush2.msra.mxu0 0.0
        %737 = vmatprep.subr.mxu0 0.0
        %738 = vmatpush2.msra.mxu0 0.0
        %739 = vmatprep.subr.mxu0 0.0
        %740 = vmatpush2.msra.mxu0 0.0
        %741 = vmatprep.subr.mxu0 0.0
        %742 = vmatpush2.msra.mxu0 0.0
        %743 = vmatprep.subr.mxu0 0.0
        %744 = vmatpush2.msra.mxu0 0.0
        %745 = vmatprep.subr.mxu0 0.0
        %746 = vmatpush2.msra.mxu0 0.0
        %747 = vmatprep.mubr.f32.mxu0 0.0
        %v748 = vand.u32 %v293, 4294901760
        %749 = vmatmul.mubr.f32.gmra.mxu0 %v748
        %v750 = vpop.f32.mrf.mxu0
        %v751 = vadd.f32 %v678, %v750
        %v752 = vpop.f32.mrf.mxu0
        %753 = vdwg.mxu0
        %754 = vmatprep.subr.mxu0 0.0
        %v755 = vand.u32 %v250, 4294901760
        %756 = vmatpush1.msra.mxu0 %v755
        %757 = vmatprep.subr.mxu0 0.0
        %v758 = vand.u32 %v249, 4294901760
        %759 = vmatpush1.msra.mxu0 %v758
        %760 = vmatprep.subr.mxu0 0.0
        %v761 = vand.u32 %v248, 4294901760
        %762 = vmatpush1.msra.mxu0 %v761
        %763 = vmatprep.subr.mxu0 0.0
        %v764 = vand.u32 %v247, 4294901760
        %765 = vmatpush1.msra.mxu0 %v764
        %766 = vmatprep.subr.mxu0 0.0
        %v767 = vand.u32 %v246, 4294901760
        %768 = vmatpush1.msra.mxu0 %v767
        %769 = vmatprep.subr.mxu0 0.0
        %v770 = vand.u32 %v245, 4294901760
        %771 = vmatpush1.msra.mxu0 %v770
        %772 = vmatprep.subr.mxu0 0.0
        %v773 = vand.u32 %v244, 4294901760
        %774 = vmatpush1.msra.mxu0 %v773
        %775 = vmatprep.subr.mxu0 0.0
        %v776 = vand.u32 %v243, 4294901760
        %777 = vmatpush1.msra.mxu0 %v776
        %778 = vmatprep.subr.mxu0 0.0
        %v779 = vand.u32 %v242, 4294901760
        %780 = vmatpush1.msra.mxu0 %v779
        %781 = vmatprep.subr.mxu0 0.0
        %v782 = vand.u32 %v241, 4294901760
        %783 = vmatpush1.msra.mxu0 %v782
        %784 = vmatprep.subr.mxu0 0.0
        %v785 = vand.u32 %v240, 4294901760
        %786 = vmatpush1.msra.mxu0 %v785
        %787 = vmatprep.subr.mxu0 0.0
        %v788 = vand.u32 %v239, 4294901760
        %789 = vmatpush1.msra.mxu0 %v788
        %790 = vmatprep.subr.mxu0 0.0
        %v791 = vand.u32 %v238, 4294901760
        %792 = vmatpush1.msra.mxu0 %v791
        %793 = vmatprep.subr.mxu0 0.0
        %v794 = vand.u32 %v237, 4294901760
        %795 = vmatpush1.msra.mxu0 %v794
        %796 = vmatprep.subr.mxu0 0.0
        %v797 = vand.u32 %v236, 4294901760
        %798 = vmatpush1.msra.mxu0 %v797
        %799 = vmatprep.subr.mxu0 0.0
        %v800 = vand.u32 %v235, 4294901760
        %801 = vmatpush1.msra.mxu0 %v800
        %802 = vmatprep.subr.mxu0 0.0
        %803 = vmatpush2.msra.mxu0 0.0
        %804 = vmatprep.subr.mxu0 0.0
        %805 = vmatpush2.msra.mxu0 0.0
        %806 = vmatprep.subr.mxu0 0.0
        %807 = vmatpush2.msra.mxu0 0.0
        %808 = vmatprep.subr.mxu0 0.0
        %809 = vmatpush2.msra.mxu0 0.0
        %810 = vmatprep.subr.mxu0 0.0
        %811 = vmatpush2.msra.mxu0 0.0
        %812 = vmatprep.subr.mxu0 0.0
        %813 = vmatpush2.msra.mxu0 0.0
        %814 = vmatprep.subr.mxu0 0.0
        %815 = vmatpush2.msra.mxu0 0.0
        %816 = vmatprep.subr.mxu0 0.0
        %817 = vmatpush2.msra.mxu0 0.0
        %818 = vmatprep.subr.mxu0 0.0
        %819 = vmatpush2.msra.mxu0 0.0
        %820 = vmatprep.subr.mxu0 0.0
        %821 = vmatpush2.msra.mxu0 0.0
        %822 = vmatprep.subr.mxu0 0.0
        %823 = vmatpush2.msra.mxu0 0.0
        %824 = vmatprep.subr.mxu0 0.0
        %825 = vmatpush2.msra.mxu0 0.0
        %826 = vmatprep.subr.mxu0 0.0
        %827 = vmatpush2.msra.mxu0 0.0
        %828 = vmatprep.subr.mxu0 0.0
        %829 = vmatpush2.msra.mxu0 0.0
        %830 = vmatprep.subr.mxu0 0.0
        %831 = vmatpush2.msra.mxu0 0.0
        %832 = vmatprep.subr.mxu0 0.0
        %833 = vmatpush2.msra.mxu0 0.0
        %834 = vmatprep.mubr.f32.mxu0 0.0
        %v835 = vand.u32 %v751, 4294901760
        %v836 = vsub.f32 %v751, %v835
        %v837 = vand.u32 %v836, 4294901760
        %v838 = vsub.f32 %v836, %v837
        %v839 = vand.u32 %v838, 4294901760
        %840 = vmatmul.mubr.f32.gmra.mxu0 %v839
        %v841 = vpop.f32.mrf.mxu0
        %v842 = vadd.f32 0.0, %v841
        %v843 = vpop.f32.mrf.mxu0
        %844 = vdwg.mxu0
        %845 = vmatprep.subr.mxu0 0.0
        %v846 = vand.u32 %v250, 4294901760
        %v847 = vsub.f32 %v250, %v846
        %v848 = vand.u32 %v847, 4294901760
        %v849 = vsub.f32 %v847, %v848
        %v850 = vand.u32 %v849, 4294901760
        %851 = vmatpush1.msra.mxu0 %v850
        %852 = vmatprep.subr.mxu0 0.0
        %v853 = vand.u32 %v249, 4294901760
        %v854 = vsub.f32 %v249, %v853
        %v855 = vand.u32 %v854, 4294901760
        %v856 = vsub.f32 %v854, %v855
        %v857 = vand.u32 %v856, 4294901760
        %858 = vmatpush1.msra.mxu0 %v857
        %859 = vmatprep.subr.mxu0 0.0
        %v860 = vand.u32 %v248, 4294901760
        %v861 = vsub.f32 %v248, %v860
        %v862 = vand.u32 %v861, 4294901760
        %v863 = vsub.f32 %v861, %v862
        %v864 = vand.u32 %v863, 4294901760
        %865 = vmatpush1.msra.mxu0 %v864
        %866 = vmatprep.subr.mxu0 0.0
        %v867 = vand.u32 %v247, 4294901760
        %v868 = vsub.f32 %v247, %v867
        %v869 = vand.u32 %v868, 4294901760
        %v870 = vsub.f32 %v868, %v869
        %v871 = vand.u32 %v870, 4294901760
        %872 = vmatpush1.msra.mxu0 %v871
        %873 = vmatprep.subr.mxu0 0.0
        %v874 = vand.u32 %v246, 4294901760
        %v875 = vsub.f32 %v246, %v874
        %v876 = vand.u32 %v875, 4294901760
        %v877 = vsub.f32 %v875, %v876
        %v878 = vand.u32 %v877, 4294901760
        %879 = vmatpush1.msra.mxu0 %v878
        %880 = vmatprep.subr.mxu0 0.0
        %v881 = vand.u32 %v245, 4294901760
        %v882 = vsub.f32 %v245, %v881
        %v883 = vand.u32 %v882, 4294901760
        %v884 = vsub.f32 %v882, %v883
        %v885 = vand.u32 %v884, 4294901760
        %886 = vmatpush1.msra.mxu0 %v885
        %887 = vmatprep.subr.mxu0 0.0
        %v888 = vand.u32 %v244, 4294901760
        %v889 = vsub.f32 %v244, %v888
        %v890 = vand.u32 %v889, 4294901760
        %v891 = vsub.f32 %v889, %v890
        %v892 = vand.u32 %v891, 4294901760
        %893 = vmatpush1.msra.mxu0 %v892
        %894 = vmatprep.subr.mxu0 0.0
        %v895 = vand.u32 %v243, 4294901760
        %v896 = vsub.f32 %v243, %v895
        %v897 = vand.u32 %v896, 4294901760
        %v898 = vsub.f32 %v896, %v897
        %v899 = vand.u32 %v898, 4294901760
        %900 = vmatpush1.msra.mxu0 %v899
        %901 = vmatprep.subr.mxu0 0.0
        %v902 = vand.u32 %v242, 4294901760
        %v903 = vsub.f32 %v242, %v902
        %v904 = vand.u32 %v903, 4294901760
        %v905 = vsub.f32 %v903, %v904
        %v906 = vand.u32 %v905, 4294901760
        %907 = vmatpush1.msra.mxu0 %v906
        %908 = vmatprep.subr.mxu0 0.0
        %v909 = vand.u32 %v241, 4294901760
        %v910 = vsub.f32 %v241, %v909
        %v911 = vand.u32 %v910, 4294901760
        %v912 = vsub.f32 %v910, %v911
        %v913 = vand.u32 %v912, 4294901760
        %914 = vmatpush1.msra.mxu0 %v913
        %915 = vmatprep.subr.mxu0 0.0
        %v916 = vand.u32 %v240, 4294901760
        %v917 = vsub.f32 %v240, %v916
        %v918 = vand.u32 %v917, 4294901760
        %v919 = vsub.f32 %v917, %v918
        %v920 = vand.u32 %v919, 4294901760
        %921 = vmatpush1.msra.mxu0 %v920
        %922 = vmatprep.subr.mxu0 0.0
        %v923 = vand.u32 %v239, 4294901760
        %v924 = vsub.f32 %v239, %v923
        %v925 = vand.u32 %v924, 4294901760
        %v926 = vsub.f32 %v924, %v925
        %v927 = vand.u32 %v926, 4294901760
        %928 = vmatpush1.msra.mxu0 %v927
        %929 = vmatprep.subr.mxu0 0.0
        %v930 = vand.u32 %v238, 4294901760
        %v931 = vsub.f32 %v238, %v930
        %v932 = vand.u32 %v931, 4294901760
        %v933 = vsub.f32 %v931, %v932
        %v934 = vand.u32 %v933, 4294901760
        %935 = vmatpush1.msra.mxu0 %v934
        %936 = vmatprep.subr.mxu0 0.0
        %v937 = vand.u32 %v237, 4294901760
        %v938 = vsub.f32 %v237, %v937
        %v939 = vand.u32 %v938, 4294901760
        %v940 = vsub.f32 %v938, %v939
        %v941 = vand.u32 %v940, 4294901760
        %942 = vmatpush1.msra.mxu0 %v941
        %943 = vmatprep.subr.mxu0 0.0
        %v944 = vand.u32 %v236, 4294901760
        %v945 = vsub.f32 %v236, %v944
        %v946 = vand.u32 %v945, 4294901760
        %v947 = vsub.f32 %v945, %v946
        %v948 = vand.u32 %v947, 4294901760
        %949 = vmatpush1.msra.mxu0 %v948
        %950 = vmatprep.subr.mxu0 0.0
        %v951 = vand.u32 %v235, 4294901760
        %v952 = vsub.f32 %v235, %v951
        %v953 = vand.u32 %v952, 4294901760
        %v954 = vsub.f32 %v952, %v953
        %v955 = vand.u32 %v954, 4294901760
        %956 = vmatpush1.msra.mxu0 %v955
        %957 = vmatprep.subr.mxu0 0.0
        %958 = vmatpush2.msra.mxu0 0.0
        %959 = vmatprep.subr.mxu0 0.0
        %960 = vmatpush2.msra.mxu0 0.0
        %961 = vmatprep.subr.mxu0 0.0
        %962 = vmatpush2.msra.mxu0 0.0
        %963 = vmatprep.subr.mxu0 0.0
        %964 = vmatpush2.msra.mxu0 0.0
        %965 = vmatprep.subr.mxu0 0.0
        %966 = vmatpush2.msra.mxu0 0.0
        %967 = vmatprep.subr.mxu0 0.0
        %968 = vmatpush2.msra.mxu0 0.0
        %969 = vmatprep.subr.mxu0 0.0
        %970 = vmatpush2.msra.mxu0 0.0
        %971 = vmatprep.subr.mxu0 0.0
        %972 = vmatpush2.msra.mxu0 0.0
        %973 = vmatprep.subr.mxu0 0.0
        %974 = vmatpush2.msra.mxu0 0.0
        %975 = vmatprep.subr.mxu0 0.0
        %976 = vmatpush2.msra.mxu0 0.0
        %977 = vmatprep.subr.mxu0 0.0
        %978 = vmatpush2.msra.mxu0 0.0
        %979 = vmatprep.subr.mxu0 0.0
        %980 = vmatpush2.msra.mxu0 0.0
        %981 = vmatprep.subr.mxu0 0.0
        %982 = vmatpush2.msra.mxu0 0.0
        %983 = vmatprep.subr.mxu0 0.0
        %984 = vmatpush2.msra.mxu0 0.0
        %985 = vmatprep.subr.mxu0 0.0
        %986 = vmatpush2.msra.mxu0 0.0
        %987 = vmatprep.subr.mxu0 0.0
        %988 = vmatpush2.msra.mxu0 0.0
        %989 = vmatprep.mubr.f32.mxu0 0.0
        %v990 = vand.u32 %v751, 4294901760
        %991 = vmatmul.mubr.f32.gmra.mxu0 %v990
        %v992 = vpop.f32.mrf.mxu0
        %v993 = vadd.f32 %v842, %v992
        %v994 = vpop.f32.mrf.mxu0
        %995 = vdwg.mxu0
        %996 = vmatprep.subr.mxu0 0.0
        %v997 = vand.u32 %v250, 4294901760
        %v998 = vsub.f32 %v250, %v997
        %999 = vmatpush1.msra.mxu0 %v998
        %1000 = vmatprep.subr.mxu0 0.0
        %v1001 = vand.u32 %v249, 4294901760
        %v1002 = vsub.f32 %v249, %v1001
        %1003 = vmatpush1.msra.mxu0 %v1002
        %1004 = vmatprep.subr.mxu0 0.0
        %v1005 = vand.u32 %v248, 4294901760
        %v1006 = vsub.f32 %v248, %v1005
        %1007 = vmatpush1.msra.mxu0 %v1006
        %1008 = vmatprep.subr.mxu0 0.0
        %v1009 = vand.u32 %v247, 4294901760
        %v1010 = vsub.f32 %v247, %v1009
        %1011 = vmatpush1.msra.mxu0 %v1010
        %1012 = vmatprep.subr.mxu0 0.0
        %v1013 = vand.u32 %v246, 4294901760
        %v1014 = vsub.f32 %v246, %v1013
        %1015 = vmatpush1.msra.mxu0 %v1014
        %1016 = vmatprep.subr.mxu0 0.0
        %v1017 = vand.u32 %v245, 4294901760
        %v1018 = vsub.f32 %v245, %v1017
        %1019 = vmatpush1.msra.mxu0 %v1018
        %1020 = vmatprep.subr.mxu0 0.0
        %v1021 = vand.u32 %v244, 4294901760
        %v1022 = vsub.f32 %v244, %v1021
        %1023 = vmatpush1.msra.mxu0 %v1022
        %1024 = vmatprep.subr.mxu0 0.0
        %v1025 = vand.u32 %v243, 4294901760
        %v1026 = vsub.f32 %v243, %v1025
        %1027 = vmatpush1.msra.mxu0 %v1026
        %1028 = vmatprep.subr.mxu0 0.0
        %v1029 = vand.u32 %v242, 4294901760
        %v1030 = vsub.f32 %v242, %v1029
        %1031 = vmatpush1.msra.mxu0 %v1030
        %1032 = vmatprep.subr.mxu0 0.0
        %v1033 = vand.u32 %v241, 4294901760
        %v1034 = vsub.f32 %v241, %v1033
        %1035 = vmatpush1.msra.mxu0 %v1034
        %1036 = vmatprep.subr.mxu0 0.0
        %v1037 = vand.u32 %v240, 4294901760
        %v1038 = vsub.f32 %v240, %v1037
        %1039 = vmatpush1.msra.mxu0 %v1038
        %1040 = vmatprep.subr.mxu0 0.0
        %v1041 = vand.u32 %v239, 4294901760
        %v1042 = vsub.f32 %v239, %v1041
        %1043 = vmatpush1.msra.mxu0 %v1042
        %1044 = vmatprep.subr.mxu0 0.0
        %v1045 = vand.u32 %v238, 4294901760
        %v1046 = vsub.f32 %v238, %v1045
        %1047 = vmatpush1.msra.mxu0 %v1046
        %1048 = vmatprep.subr.mxu0 0.0
        %v1049 = vand.u32 %v237, 4294901760
        %v1050 = vsub.f32 %v237, %v1049
        %1051 = vmatpush1.msra.mxu0 %v1050
        %1052 = vmatprep.subr.mxu0 0.0
        %v1053 = vand.u32 %v236, 4294901760
        %v1054 = vsub.f32 %v236, %v1053
        %1055 = vmatpush1.msra.mxu0 %v1054
        %1056 = vmatprep.subr.mxu0 0.0
        %v1057 = vand.u32 %v235, 4294901760
        %v1058 = vsub.f32 %v235, %v1057
        %1059 = vmatpush1.msra.mxu0 %v1058
        %1060 = vmatprep.subr.mxu0 0.0
        %1061 = vmatpush2.msra.mxu0 0.0
        %1062 = vmatprep.subr.mxu0 0.0
        %1063 = vmatpush2.msra.mxu0 0.0
        %1064 = vmatprep.subr.mxu0 0.0
        %1065 = vmatpush2.msra.mxu0 0.0
        %1066 = vmatprep.subr.mxu0 0.0
        %1067 = vmatpush2.msra.mxu0 0.0
        %1068 = vmatprep.subr.mxu0 0.0
        %1069 = vmatpush2.msra.mxu0 0.0
        %1070 = vmatprep.subr.mxu0 0.0
        %1071 = vmatpush2.msra.mxu0 0.0
        %1072 = vmatprep.subr.mxu0 0.0
        %1073 = vmatpush2.msra.mxu0 0.0
        %1074 = vmatprep.subr.mxu0 0.0
        %1075 = vmatpush2.msra.mxu0 0.0
        %1076 = vmatprep.subr.mxu0 0.0
        %1077 = vmatpush2.msra.mxu0 0.0
        %1078 = vmatprep.subr.mxu0 0.0
        %1079 = vmatpush2.msra.mxu0 0.0
        %1080 = vmatprep.subr.mxu0 0.0
        %1081 = vmatpush2.msra.mxu0 0.0
        %1082 = vmatprep.subr.mxu0 0.0
        %1083 = vmatpush2.msra.mxu0 0.0
        %1084 = vmatprep.subr.mxu0 0.0
        %1085 = vmatpush2.msra.mxu0 0.0
        %1086 = vmatprep.subr.mxu0 0.0
        %1087 = vmatpush2.msra.mxu0 0.0
        %1088 = vmatprep.subr.mxu0 0.0
        %1089 = vmatpush2.msra.mxu0 0.0
        %1090 = vmatprep.subr.mxu0 0.0
        %1091 = vmatpush2.msra.mxu0 0.0
        %1092 = vmatprep.mubr.f32.mxu0 0.0
        %v1093 = vand.u32 %v751, 4294901760
        %v1094 = vsub.f32 %v751, %v1093
        %1095 = vmatmul.mubr.f32.gmra.mxu0 %v1094
        %v1096 = vpop.f32.mrf.mxu0
        %v1097 = vadd.f32 %v993, %v1096
        %v1098 = vpop.f32.mrf.mxu0
        %1099 = vdwg.mxu0
        %1100 = vmatprep.subr.mxu0 0.0
        %v1101 = vand.u32 %v250, 4294901760
        %1102 = vmatpush1.msra.mxu0 %v1101
        %1103 = vmatprep.subr.mxu0 0.0
        %v1104 = vand.u32 %v249, 4294901760
        %1105 = vmatpush1.msra.mxu0 %v1104
        %1106 = vmatprep.subr.mxu0 0.0
        %v1107 = vand.u32 %v248, 4294901760
        %1108 = vmatpush1.msra.mxu0 %v1107
        %1109 = vmatprep.subr.mxu0 0.0
        %v1110 = vand.u32 %v247, 4294901760
        %1111 = vmatpush1.msra.mxu0 %v1110
        %1112 = vmatprep.subr.mxu0 0.0
        %v1113 = vand.u32 %v246, 4294901760
        %1114 = vmatpush1.msra.mxu0 %v1113
        %1115 = vmatprep.subr.mxu0 0.0
        %v1116 = vand.u32 %v245, 4294901760
        %1117 = vmatpush1.msra.mxu0 %v1116
        %1118 = vmatprep.subr.mxu0 0.0
        %v1119 = vand.u32 %v244, 4294901760
        %1120 = vmatpush1.msra.mxu0 %v1119
        %1121 = vmatprep.subr.mxu0 0.0
        %v1122 = vand.u32 %v243, 4294901760
        %1123 = vmatpush1.msra.mxu0 %v1122
        %1124 = vmatprep.subr.mxu0 0.0
        %v1125 = vand.u32 %v242, 4294901760
        %1126 = vmatpush1.msra.mxu0 %v1125
        %1127 = vmatprep.subr.mxu0 0.0
        %v1128 = vand.u32 %v241, 4294901760
        %1129 = vmatpush1.msra.mxu0 %v1128
        %1130 = vmatprep.subr.mxu0 0.0
        %v1131 = vand.u32 %v240, 4294901760
        %1132 = vmatpush1.msra.mxu0 %v1131
        %1133 = vmatprep.subr.mxu0 0.0
        %v1134 = vand.u32 %v239, 4294901760
        %1135 = vmatpush1.msra.mxu0 %v1134
        %1136 = vmatprep.subr.mxu0 0.0
        %v1137 = vand.u32 %v238, 4294901760
        %1138 = vmatpush1.msra.mxu0 %v1137
        %1139 = vmatprep.subr.mxu0 0.0
        %v1140 = vand.u32 %v237, 4294901760
        %1141 = vmatpush1.msra.mxu0 %v1140
        %1142 = vmatprep.subr.mxu0 0.0
        %v1143 = vand.u32 %v236, 4294901760
        %1144 = vmatpush1.msra.mxu0 %v1143
        %1145 = vmatprep.subr.mxu0 0.0
        %v1146 = vand.u32 %v235, 4294901760
        %1147 = vmatpush1.msra.mxu0 %v1146
        %1148 = vmatprep.subr.mxu0 0.0
        %1149 = vmatpush2.msra.mxu0 0.0
        %1150 = vmatprep.subr.mxu0 0.0
        %1151 = vmatpush2.msra.mxu0 0.0
        %1152 = vmatprep.subr.mxu0 0.0
        %1153 = vmatpush2.msra.mxu0 0.0
        %1154 = vmatprep.subr.mxu0 0.0
        %1155 = vmatpush2.msra.mxu0 0.0
        %1156 = vmatprep.subr.mxu0 0.0
        %1157 = vmatpush2.msra.mxu0 0.0
        %1158 = vmatprep.subr.mxu0 0.0
        %1159 = vmatpush2.msra.mxu0 0.0
        %1160 = vmatprep.subr.mxu0 0.0
        %1161 = vmatpush2.msra.mxu0 0.0
        %1162 = vmatprep.subr.mxu0 0.0
        %1163 = vmatpush2.msra.mxu0 0.0
        %1164 = vmatprep.subr.mxu0 0.0
        %1165 = vmatpush2.msra.mxu0 0.0
        %1166 = vmatprep.subr.mxu0 0.0
        %1167 = vmatpush2.msra.mxu0 0.0
        %1168 = vmatprep.subr.mxu0 0.0
        %1169 = vmatpush2.msra.mxu0 0.0
        %1170 = vmatprep.subr.mxu0 0.0
        %1171 = vmatpush2.msra.mxu0 0.0
        %1172 = vmatprep.subr.mxu0 0.0
        %1173 = vmatpush2.msra.mxu0 0.0
        %1174 = vmatprep.subr.mxu0 0.0
        %1175 = vmatpush2.msra.mxu0 0.0
        %1176 = vmatprep.subr.mxu0 0.0
        %1177 = vmatpush2.msra.mxu0 0.0
        %1178 = vmatprep.subr.mxu0 0.0
        %1179 = vmatpush2.msra.mxu0 0.0
        %1180 = vmatprep.mubr.f32.mxu0 0.0
        %v1181 = vand.u32 %v751, 4294901760
        %v1182 = vsub.f32 %v751, %v1181
        %v1183 = vand.u32 %v1182, 4294901760
        %1184 = vmatmul.mubr.f32.gmra.mxu0 %v1183
        %v1185 = vpop.f32.mrf.mxu0
        %v1186 = vadd.f32 %v1097, %v1185
        %v1187 = vpop.f32.mrf.mxu0
        %1188 = vdwg.mxu0
        %1189 = vmatprep.subr.mxu0 0.0
        %v1190 = vand.u32 %v250, 4294901760
        %v1191 = vsub.f32 %v250, %v1190
        %v1192 = vand.u32 %v1191, 4294901760
        %1193 = vmatpush1.msra.mxu0 %v1192
        %1194 = vmatprep.subr.mxu0 0.0
        %v1195 = vand.u32 %v249, 4294901760
        %v1196 = vsub.f32 %v249, %v1195
        %v1197 = vand.u32 %v1196, 4294901760
        %1198 = vmatpush1.msra.mxu0 %v1197
        %1199 = vmatprep.subr.mxu0 0.0
        %v1200 = vand.u32 %v248, 4294901760
        %v1201 = vsub.f32 %v248, %v1200
        %v1202 = vand.u32 %v1201, 4294901760
        %1203 = vmatpush1.msra.mxu0 %v1202
        %1204 = vmatprep.subr.mxu0 0.0
        %v1205 = vand.u32 %v247, 4294901760
        %v1206 = vsub.f32 %v247, %v1205
        %v1207 = vand.u32 %v1206, 4294901760
        %1208 = vmatpush1.msra.mxu0 %v1207
        %1209 = vmatprep.subr.mxu0 0.0
        %v1210 = vand.u32 %v246, 4294901760
        %v1211 = vsub.f32 %v246, %v1210
        %v1212 = vand.u32 %v1211, 4294901760
        %1213 = vmatpush1.msra.mxu0 %v1212
        %1214 = vmatprep.subr.mxu0 0.0
        %v1215 = vand.u32 %v245, 4294901760
        %v1216 = vsub.f32 %v245, %v1215
        %v1217 = vand.u32 %v1216, 4294901760
        %1218 = vmatpush1.msra.mxu0 %v1217
        %1219 = vmatprep.subr.mxu0 0.0
        %v1220 = vand.u32 %v244, 4294901760
        %v1221 = vsub.f32 %v244, %v1220
        %v1222 = vand.u32 %v1221, 4294901760
        %1223 = vmatpush1.msra.mxu0 %v1222
        %1224 = vmatprep.subr.mxu0 0.0
        %v1225 = vand.u32 %v243, 4294901760
        %v1226 = vsub.f32 %v243, %v1225
        %v1227 = vand.u32 %v1226, 4294901760
        %1228 = vmatpush1.msra.mxu0 %v1227
        %1229 = vmatprep.subr.mxu0 0.0
        %v1230 = vand.u32 %v242, 4294901760
        %v1231 = vsub.f32 %v242, %v1230
        %v1232 = vand.u32 %v1231, 4294901760
        %1233 = vmatpush1.msra.mxu0 %v1232
        %1234 = vmatprep.subr.mxu0 0.0
        %v1235 = vand.u32 %v241, 4294901760
        %v1236 = vsub.f32 %v241, %v1235
        %v1237 = vand.u32 %v1236, 4294901760
        %1238 = vmatpush1.msra.mxu0 %v1237
        %1239 = vmatprep.subr.mxu0 0.0
        %v1240 = vand.u32 %v240, 4294901760
        %v1241 = vsub.f32 %v240, %v1240
        %v1242 = vand.u32 %v1241, 4294901760
        %1243 = vmatpush1.msra.mxu0 %v1242
        %1244 = vmatprep.subr.mxu0 0.0
        %v1245 = vand.u32 %v239, 4294901760
        %v1246 = vsub.f32 %v239, %v1245
        %v1247 = vand.u32 %v1246, 4294901760
        %1248 = vmatpush1.msra.mxu0 %v1247
        %1249 = vmatprep.subr.mxu0 0.0
        %v1250 = vand.u32 %v238, 4294901760
        %v1251 = vsub.f32 %v238, %v1250
        %v1252 = vand.u32 %v1251, 4294901760
        %1253 = vmatpush1.msra.mxu0 %v1252
        %1254 = vmatprep.subr.mxu0 0.0
        %v1255 = vand.u32 %v237, 4294901760
        %v1256 = vsub.f32 %v237, %v1255
        %v1257 = vand.u32 %v1256, 4294901760
        %1258 = vmatpush1.msra.mxu0 %v1257
        %1259 = vmatprep.subr.mxu0 0.0
        %v1260 = vand.u32 %v236, 4294901760
        %v1261 = vsub.f32 %v236, %v1260
        %v1262 = vand.u32 %v1261, 4294901760
        %1263 = vmatpush1.msra.mxu0 %v1262
        %1264 = vmatprep.subr.mxu0 0.0
        %v1265 = vand.u32 %v235, 4294901760
        %v1266 = vsub.f32 %v235, %v1265
        %v1267 = vand.u32 %v1266, 4294901760
        %1268 = vmatpush1.msra.mxu0 %v1267
        %1269 = vmatprep.subr.mxu0 0.0
        %1270 = vmatpush2.msra.mxu0 0.0
        %1271 = vmatprep.subr.mxu0 0.0
        %1272 = vmatpush2.msra.mxu0 0.0
        %1273 = vmatprep.subr.mxu0 0.0
        %1274 = vmatpush2.msra.mxu0 0.0
        %1275 = vmatprep.subr.mxu0 0.0
        %1276 = vmatpush2.msra.mxu0 0.0
        %1277 = vmatprep.subr.mxu0 0.0
        %1278 = vmatpush2.msra.mxu0 0.0
        %1279 = vmatprep.subr.mxu0 0.0
        %1280 = vmatpush2.msra.mxu0 0.0
        %1281 = vmatprep.subr.mxu0 0.0
        %1282 = vmatpush2.msra.mxu0 0.0
        %1283 = vmatprep.subr.mxu0 0.0
        %1284 = vmatpush2.msra.mxu0 0.0
        %1285 = vmatprep.subr.mxu0 0.0
        %1286 = vmatpush2.msra.mxu0 0.0
        %1287 = vmatprep.subr.mxu0 0.0
        %1288 = vmatpush2.msra.mxu0 0.0
        %1289 = vmatprep.subr.mxu0 0.0
        %1290 = vmatpush2.msra.mxu0 0.0
        %1291 = vmatprep.subr.mxu0 0.0
        %1292 = vmatpush2.msra.mxu0 0.0
        %1293 = vmatprep.subr.mxu0 0.0
        %1294 = vmatpush2.msra.mxu0 0.0
        %1295 = vmatprep.subr.mxu0 0.0
        %1296 = vmatpush2.msra.mxu0 0.0
        %1297 = vmatprep.subr.mxu0 0.0
        %1298 = vmatpush2.msra.mxu0 0.0
        %1299 = vmatprep.subr.mxu0 0.0
        %1300 = vmatpush2.msra.mxu0 0.0
        %1301 = vmatprep.mubr.f32.mxu0 0.0
        %v1302 = vand.u32 %v751, 4294901760
        %1303 = vmatmul.mubr.f32.gmra.mxu0 %v1302
        %v1304 = vpop.f32.mrf.mxu0
        %v1305 = vadd.f32 %v1186, %v1304
        %v1306 = vpop.f32.mrf.mxu0
        %1307 = vdwg.mxu0
        %1308 = vmatprep.subr.mxu0 0.0
        %v1309 = vand.u32 %v250, 4294901760
        %1310 = vmatpush1.msra.mxu0 %v1309
        %1311 = vmatprep.subr.mxu0 0.0
        %v1312 = vand.u32 %v249, 4294901760
        %1313 = vmatpush1.msra.mxu0 %v1312
        %1314 = vmatprep.subr.mxu0 0.0
        %v1315 = vand.u32 %v248, 4294901760
        %1316 = vmatpush1.msra.mxu0 %v1315
        %1317 = vmatprep.subr.mxu0 0.0
        %v1318 = vand.u32 %v247, 4294901760
        %1319 = vmatpush1.msra.mxu0 %v1318
        %1320 = vmatprep.subr.mxu0 0.0
        %v1321 = vand.u32 %v246, 4294901760
        %1322 = vmatpush1.msra.mxu0 %v1321
        %1323 = vmatprep.subr.mxu0 0.0
        %v1324 = vand.u32 %v245, 4294901760
        %1325 = vmatpush1.msra.mxu0 %v1324
        %1326 = vmatprep.subr.mxu0 0.0
        %v1327 = vand.u32 %v244, 4294901760
        %1328 = vmatpush1.msra.mxu0 %v1327
        %1329 = vmatprep.subr.mxu0 0.0
        %v1330 = vand.u32 %v243, 4294901760
        %1331 = vmatpush1.msra.mxu0 %v1330
        %1332 = vmatprep.subr.mxu0 0.0
        %v1333 = vand.u32 %v242, 4294901760
        %1334 = vmatpush1.msra.mxu0 %v1333
        %1335 = vmatprep.subr.mxu0 0.0
        %v1336 = vand.u32 %v241, 4294901760
        %1337 = vmatpush1.msra.mxu0 %v1336
        %1338 = vmatprep.subr.mxu0 0.0
        %v1339 = vand.u32 %v240, 4294901760
        %1340 = vmatpush1.msra.mxu0 %v1339
        %1341 = vmatprep.subr.mxu0 0.0
        %v1342 = vand.u32 %v239, 4294901760
        %1343 = vmatpush1.msra.mxu0 %v1342
        %1344 = vmatprep.subr.mxu0 0.0
        %v1345 = vand.u32 %v238, 4294901760
        %1346 = vmatpush1.msra.mxu0 %v1345
        %1347 = vmatprep.subr.mxu0 0.0
        %v1348 = vand.u32 %v237, 4294901760
        %1349 = vmatpush1.msra.mxu0 %v1348
        %1350 = vmatprep.subr.mxu0 0.0
        %v1351 = vand.u32 %v236, 4294901760
        %1352 = vmatpush1.msra.mxu0 %v1351
        %1353 = vmatprep.subr.mxu0 0.0
        %v1354 = vand.u32 %v235, 4294901760
        %1355 = vmatpush1.msra.mxu0 %v1354
        %1356 = vmatprep.subr.mxu0 0.0
        %1357 = vmatpush2.msra.mxu0 0.0
        %1358 = vmatprep.subr.mxu0 0.0
        %1359 = vmatpush2.msra.mxu0 0.0
        %1360 = vmatprep.subr.mxu0 0.0
        %1361 = vmatpush2.msra.mxu0 0.0
        %1362 = vmatprep.subr.mxu0 0.0
        %1363 = vmatpush2.msra.mxu0 0.0
        %1364 = vmatprep.subr.mxu0 0.0
        %1365 = vmatpush2.msra.mxu0 0.0
        %1366 = vmatprep.subr.mxu0 0.0
        %1367 = vmatpush2.msra.mxu0 0.0
        %1368 = vmatprep.subr.mxu0 0.0
        %1369 = vmatpush2.msra.mxu0 0.0
        %1370 = vmatprep.subr.mxu0 0.0
        %1371 = vmatpush2.msra.mxu0 0.0
        %1372 = vmatprep.subr.mxu0 0.0
        %1373 = vmatpush2.msra.mxu0 0.0
        %1374 = vmatprep.subr.mxu0 0.0
        %1375 = vmatpush2.msra.mxu0 0.0
        %1376 = vmatprep.subr.mxu0 0.0
        %1377 = vmatpush2.msra.mxu0 0.0
        %1378 = vmatprep.subr.mxu0 0.0
        %1379 = vmatpush2.msra.mxu0 0.0
        %1380 = vmatprep.subr.mxu0 0.0
        %1381 = vmatpush2.msra.mxu0 0.0
        %1382 = vmatprep.subr.mxu0 0.0
        %1383 = vmatpush2.msra.mxu0 0.0
        %1384 = vmatprep.subr.mxu0 0.0
        %1385 = vmatpush2.msra.mxu0 0.0
        %1386 = vmatprep.subr.mxu0 0.0
        %1387 = vmatpush2.msra.mxu0 0.0
        %1388 = vmatprep.mubr.f32.mxu0 0.0
        %v1389 = vand.u32 %v751, 4294901760
        %1390 = vmatmul.mubr.f32.gmra.mxu0 %v1389
        %v1391 = vpop.f32.mrf.mxu0
        %v1392 = vadd.f32 %v1305, %v1391
        %v1393 = vpop.f32.mrf.mxu0
        %1394 = vdwg.mxu0
        %1395 = vmatprep.subr.mxu0 0.0
        %1396 = vmatpush1.msra.mxu0 0.0
        %1397 = vmatprep.subr.mxu0 0.0
        %1398 = vmatpush1.msra.mxu0 0.0
        %1399 = vmatprep.subr.mxu0 0.0
        %1400 = vmatpush1.msra.mxu0 0.0
        %1401 = vmatprep.subr.mxu0 0.0
        %1402 = vmatpush1.msra.mxu0 0.0
        %1403 = vmatprep.subr.mxu0 0.0
        %1404 = vmatpush1.msra.mxu0 0.0
        %1405 = vmatprep.subr.mxu0 0.0
        %1406 = vmatpush1.msra.mxu0 0.0
        %1407 = vmatprep.subr.mxu0 0.0
        %1408 = vmatpush1.msra.mxu0 0.0
        %1409 = vmatprep.subr.mxu0 0.0
        %1410 = vmatpush1.msra.mxu0 0.0
        %1411 = vmatprep.subr.mxu0 0.0
        %1412 = vmatpush1.msra.mxu0 0.0
        %1413 = vmatprep.subr.mxu0 0.0
        %1414 = vmatpush1.msra.mxu0 0.0
        %1415 = vmatprep.subr.mxu0 0.0
        %1416 = vmatpush1.msra.mxu0 0.0
        %1417 = vmatprep.subr.mxu0 0.0
        %1418 = vmatpush1.msra.mxu0 0.0
        %1419 = vmatprep.subr.mxu0 0.0
        %1420 = vmatpush1.msra.mxu0 0.0
        %1421 = vmatprep.subr.mxu0 0.0
        %1422 = vmatpush1.msra.mxu0 0.0
        %1423 = vmatprep.subr.mxu0 0.0
        %v1424 = vand.u32 %v290, 4294901760
        %1425 = vmatpush1.msra.mxu0 %v1424
        %1426 = vmatprep.subr.mxu0 0.0
        %v1427 = vand.u32 %v289, 4294901760
        %1428 = vmatpush1.msra.mxu0 %v1427
        %1429 = vmatprep.subr.mxu0 0.0
        %1430 = vmatpush2.msra.mxu0 0.0
        %1431 = vmatprep.subr.mxu0 0.0
        %1432 = vmatpush2.msra.mxu0 0.0
        %1433 = vmatprep.subr.mxu0 0.0
        %1434 = vmatpush2.msra.mxu0 0.0
        %1435 = vmatprep.subr.mxu0 0.0
        %1436 = vmatpush2.msra.mxu0 0.0
        %1437 = vmatprep.subr.mxu0 0.0
        %1438 = vmatpush2.msra.mxu0 0.0
        %1439 = vmatprep.subr.mxu0 0.0
        %1440 = vmatpush2.msra.mxu0 0.0
        %1441 = vmatprep.subr.mxu0 0.0
        %1442 = vmatpush2.msra.mxu0 0.0
        %1443 = vmatprep.subr.mxu0 0.0
        %1444 = vmatpush2.msra.mxu0 0.0
        %1445 = vmatprep.subr.mxu0 0.0
        %1446 = vmatpush2.msra.mxu0 0.0
        %1447 = vmatprep.subr.mxu0 0.0
        %1448 = vmatpush2.msra.mxu0 0.0
        %1449 = vmatprep.subr.mxu0 0.0
        %1450 = vmatpush2.msra.mxu0 0.0
        %1451 = vmatprep.subr.mxu0 0.0
        %1452 = vmatpush2.msra.mxu0 0.0
        %1453 = vmatprep.subr.mxu0 0.0
        %1454 = vmatpush2.msra.mxu0 0.0
        %1455 = vmatprep.subr.mxu0 0.0
        %1456 = vmatpush2.msra.mxu0 0.0
        %1457 = vmatprep.subr.mxu0 0.0
        %1458 = vmatpush2.msra.mxu0 0.0
        %1459 = vmatprep.subr.mxu0 0.0
        %1460 = vmatpush2.msra.mxu0 0.0
        %1461 = vmatprep.mubr.f32.mxu0 0.0
        %v1462 = vand.u32 %v293, 4294901760
        %v1463 = vsub.f32 %v293, %v1462
        %v1464 = vand.u32 %v1463, 4294901760
        %v1465 = vsub.f32 %v1463, %v1464
        %v1466 = vand.u32 %v1465, 4294901760
        %1467 = vmatmul.mubr.f32.gmra.mxu0 %v1466
        %v1468 = vpop.f32.mrf.mxu0
        %v1469 = vadd.f32 0.0, %v1468
        %v1470 = vpop.f32.mrf.mxu0
        %1471 = vdwg.mxu0
        %1472 = vmatprep.subr.mxu0 0.0
        %1473 = vmatpush1.msra.mxu0 0.0
        %1474 = vmatprep.subr.mxu0 0.0
        %1475 = vmatpush1.msra.mxu0 0.0
        %1476 = vmatprep.subr.mxu0 0.0
        %1477 = vmatpush1.msra.mxu0 0.0
        %1478 = vmatprep.subr.mxu0 0.0
        %1479 = vmatpush1.msra.mxu0 0.0
        %1480 = vmatprep.subr.mxu0 0.0
        %1481 = vmatpush1.msra.mxu0 0.0
        %1482 = vmatprep.subr.mxu0 0.0
        %1483 = vmatpush1.msra.mxu0 0.0
        %1484 = vmatprep.subr.mxu0 0.0
        %1485 = vmatpush1.msra.mxu0 0.0
        %1486 = vmatprep.subr.mxu0 0.0
        %1487 = vmatpush1.msra.mxu0 0.0
        %1488 = vmatprep.subr.mxu0 0.0
        %1489 = vmatpush1.msra.mxu0 0.0
        %1490 = vmatprep.subr.mxu0 0.0
        %1491 = vmatpush1.msra.mxu0 0.0
        %1492 = vmatprep.subr.mxu0 0.0
        %1493 = vmatpush1.msra.mxu0 0.0
        %1494 = vmatprep.subr.mxu0 0.0
        %1495 = vmatpush1.msra.mxu0 0.0
        %1496 = vmatprep.subr.mxu0 0.0
        %1497 = vmatpush1.msra.mxu0 0.0
        %1498 = vmatprep.subr.mxu0 0.0
        %1499 = vmatpush1.msra.mxu0 0.0
        %1500 = vmatprep.subr.mxu0 0.0
        %v1501 = vand.u32 %v290, 4294901760
        %v1502 = vsub.f32 %v290, %v1501
        %v1503 = vand.u32 %v1502, 4294901760
        %v1504 = vsub.f32 %v1502, %v1503
        %v1505 = vand.u32 %v1504, 4294901760
        %1506 = vmatpush1.msra.mxu0 %v1505
        %1507 = vmatprep.subr.mxu0 0.0
        %v1508 = vand.u32 %v289, 4294901760
        %v1509 = vsub.f32 %v289, %v1508
        %v1510 = vand.u32 %v1509, 4294901760
        %v1511 = vsub.f32 %v1509, %v1510
        %v1512 = vand.u32 %v1511, 4294901760
        %1513 = vmatpush1.msra.mxu0 %v1512
        %1514 = vmatprep.subr.mxu0 0.0
        %1515 = vmatpush2.msra.mxu0 0.0
        %1516 = vmatprep.subr.mxu0 0.0
        %1517 = vmatpush2.msra.mxu0 0.0
        %1518 = vmatprep.subr.mxu0 0.0
        %1519 = vmatpush2.msra.mxu0 0.0
        %1520 = vmatprep.subr.mxu0 0.0
        %1521 = vmatpush2.msra.mxu0 0.0
        %1522 = vmatprep.subr.mxu0 0.0
        %1523 = vmatpush2.msra.mxu0 0.0
        %1524 = vmatprep.subr.mxu0 0.0
        %1525 = vmatpush2.msra.mxu0 0.0
        %1526 = vmatprep.subr.mxu0 0.0
        %1527 = vmatpush2.msra.mxu0 0.0
        %1528 = vmatprep.subr.mxu0 0.0
        %1529 = vmatpush2.msra.mxu0 0.0
        %1530 = vmatprep.subr.mxu0 0.0
        %1531 = vmatpush2.msra.mxu0 0.0
        %1532 = vmatprep.subr.mxu0 0.0
        %1533 = vmatpush2.msra.mxu0 0.0
        %1534 = vmatprep.subr.mxu0 0.0
        %1535 = vmatpush2.msra.mxu0 0.0
        %1536 = vmatprep.subr.mxu0 0.0
        %1537 = vmatpush2.msra.mxu0 0.0
        %1538 = vmatprep.subr.mxu0 0.0
        %1539 = vmatpush2.msra.mxu0 0.0
        %1540 = vmatprep.subr.mxu0 0.0
        %1541 = vmatpush2.msra.mxu0 0.0
        %1542 = vmatprep.subr.mxu0 0.0
        %1543 = vmatpush2.msra.mxu0 0.0
        %1544 = vmatprep.subr.mxu0 0.0
        %1545 = vmatpush2.msra.mxu0 0.0
        %1546 = vmatprep.mubr.f32.mxu0 0.0
        %v1547 = vand.u32 %v293, 4294901760
        %1548 = vmatmul.mubr.f32.gmra.mxu0 %v1547
        %v1549 = vpop.f32.mrf.mxu0
        %v1550 = vadd.f32 %v1469, %v1549
        %v1551 = vpop.f32.mrf.mxu0
        %1552 = vdwg.mxu0
        %1553 = vmatprep.subr.mxu0 0.0
        %1554 = vmatpush1.msra.mxu0 0.0
        %1555 = vmatprep.subr.mxu0 0.0
        %1556 = vmatpush1.msra.mxu0 0.0
        %1557 = vmatprep.subr.mxu0 0.0
        %1558 = vmatpush1.msra.mxu0 0.0
        %1559 = vmatprep.subr.mxu0 0.0
        %1560 = vmatpush1.msra.mxu0 0.0
        %1561 = vmatprep.subr.mxu0 0.0
        %1562 = vmatpush1.msra.mxu0 0.0
        %1563 = vmatprep.subr.mxu0 0.0
        %1564 = vmatpush1.msra.mxu0 0.0
        %1565 = vmatprep.subr.mxu0 0.0
        %1566 = vmatpush1.msra.mxu0 0.0
        %1567 = vmatprep.subr.mxu0 0.0
        %1568 = vmatpush1.msra.mxu0 0.0
        %1569 = vmatprep.subr.mxu0 0.0
        %1570 = vmatpush1.msra.mxu0 0.0
        %1571 = vmatprep.subr.mxu0 0.0
        %1572 = vmatpush1.msra.mxu0 0.0
        %1573 = vmatprep.subr.mxu0 0.0
        %1574 = vmatpush1.msra.mxu0 0.0
        %1575 = vmatprep.subr.mxu0 0.0
        %1576 = vmatpush1.msra.mxu0 0.0
        %1577 = vmatprep.subr.mxu0 0.0
        %1578 = vmatpush1.msra.mxu0 0.0
        %1579 = vmatprep.subr.mxu0 0.0
        %1580 = vmatpush1.msra.mxu0 0.0
        %1581 = vmatprep.subr.mxu0 0.0
        %v1582 = vand.u32 %v290, 4294901760
        %v1583 = vsub.f32 %v290, %v1582
        %1584 = vmatpush1.msra.mxu0 %v1583
        %1585 = vmatprep.subr.mxu0 0.0
        %v1586 = vand.u32 %v289, 4294901760
        %v1587 = vsub.f32 %v289, %v1586
        %1588 = vmatpush1.msra.mxu0 %v1587
        %1589 = vmatprep.subr.mxu0 0.0
        %1590 = vmatpush2.msra.mxu0 0.0
        %1591 = vmatprep.subr.mxu0 0.0
        %1592 = vmatpush2.msra.mxu0 0.0
        %1593 = vmatprep.subr.mxu0 0.0
        %1594 = vmatpush2.msra.mxu0 0.0
        %1595 = vmatprep.subr.mxu0 0.0
        %1596 = vmatpush2.msra.mxu0 0.0
        %1597 = vmatprep.subr.mxu0 0.0
        %1598 = vmatpush2.msra.mxu0 0.0
        %1599 = vmatprep.subr.mxu0 0.0
        %1600 = vmatpush2.msra.mxu0 0.0
        %1601 = vmatprep.subr.mxu0 0.0
        %1602 = vmatpush2.msra.mxu0 0.0
        %1603 = vmatprep.subr.mxu0 0.0
        %1604 = vmatpush2.msra.mxu0 0.0
        %1605 = vmatprep.subr.mxu0 0.0
        %1606 = vmatpush2.msra.mxu0 0.0
        %1607 = vmatprep.subr.mxu0 0.0
        %1608 = vmatpush2.msra.mxu0 0.0
        %1609 = vmatprep.subr.mxu0 0.0
        %1610 = vmatpush2.msra.mxu0 0.0
        %1611 = vmatprep.subr.mxu0 0.0
        %1612 = vmatpush2.msra.mxu0 0.0
        %1613 = vmatprep.subr.mxu0 0.0
        %1614 = vmatpush2.msra.mxu0 0.0
        %1615 = vmatprep.subr.mxu0 0.0
        %1616 = vmatpush2.msra.mxu0 0.0
        %1617 = vmatprep.subr.mxu0 0.0
        %1618 = vmatpush2.msra.mxu0 0.0
        %1619 = vmatprep.subr.mxu0 0.0
        %1620 = vmatpush2.msra.mxu0 0.0
        %1621 = vmatprep.mubr.f32.mxu0 0.0
        %v1622 = vand.u32 %v293, 4294901760
        %v1623 = vsub.f32 %v293, %v1622
        %1624 = vmatmul.mubr.f32.gmra.mxu0 %v1623
        %v1625 = vpop.f32.mrf.mxu0
        %v1626 = vadd.f32 %v1550, %v1625
        %v1627 = vpop.f32.mrf.mxu0
        %1628 = vdwg.mxu0
        %1629 = vmatprep.subr.mxu0 0.0
        %1630 = vmatpush1.msra.mxu0 0.0
        %1631 = vmatprep.subr.mxu0 0.0
        %1632 = vmatpush1.msra.mxu0 0.0
        %1633 = vmatprep.subr.mxu0 0.0
        %1634 = vmatpush1.msra.mxu0 0.0
        %1635 = vmatprep.subr.mxu0 0.0
        %1636 = vmatpush1.msra.mxu0 0.0
        %1637 = vmatprep.subr.mxu0 0.0
        %1638 = vmatpush1.msra.mxu0 0.0
        %1639 = vmatprep.subr.mxu0 0.0
        %1640 = vmatpush1.msra.mxu0 0.0
        %1641 = vmatprep.subr.mxu0 0.0
        %1642 = vmatpush1.msra.mxu0 0.0
        %1643 = vmatprep.subr.mxu0 0.0
        %1644 = vmatpush1.msra.mxu0 0.0
        %1645 = vmatprep.subr.mxu0 0.0
        %1646 = vmatpush1.msra.mxu0 0.0
        %1647 = vmatprep.subr.mxu0 0.0
        %1648 = vmatpush1.msra.mxu0 0.0
        %1649 = vmatprep.subr.mxu0 0.0
        %1650 = vmatpush1.msra.mxu0 0.0
        %1651 = vmatprep.subr.mxu0 0.0
        %1652 = vmatpush1.msra.mxu0 0.0
        %1653 = vmatprep.subr.mxu0 0.0
        %1654 = vmatpush1.msra.mxu0 0.0
        %1655 = vmatprep.subr.mxu0 0.0
        %1656 = vmatpush1.msra.mxu0 0.0
        %1657 = vmatprep.subr.mxu0 0.0
        %v1658 = vand.u32 %v290, 4294901760
        %1659 = vmatpush1.msra.mxu0 %v1658
        %1660 = vmatprep.subr.mxu0 0.0
        %v1661 = vand.u32 %v289, 4294901760
        %1662 = vmatpush1.msra.mxu0 %v1661
        %1663 = vmatprep.subr.mxu0 0.0
        %1664 = vmatpush2.msra.mxu0 0.0
        %1665 = vmatprep.subr.mxu0 0.0
        %1666 = vmatpush2.msra.mxu0 0.0
        %1667 = vmatprep.subr.mxu0 0.0
        %1668 = vmatpush2.msra.mxu0 0.0
        %1669 = vmatprep.subr.mxu0 0.0
        %1670 = vmatpush2.msra.mxu0 0.0
        %1671 = vmatprep.subr.mxu0 0.0
        %1672 = vmatpush2.msra.mxu0 0.0
        %1673 = vmatprep.subr.mxu0 0.0
        %1674 = vmatpush2.msra.mxu0 0.0
        %1675 = vmatprep.subr.mxu0 0.0
        %1676 = vmatpush2.msra.mxu0 0.0
        %1677 = vmatprep.subr.mxu0 0.0
        %1678 = vmatpush2.msra.mxu0 0.0
        %1679 = vmatprep.subr.mxu0 0.0
        %1680 = vmatpush2.msra.mxu0 0.0
        %1681 = vmatprep.subr.mxu0 0.0
        %1682 = vmatpush2.msra.mxu0 0.0
        %1683 = vmatprep.subr.mxu0 0.0
        %1684 = vmatpush2.msra.mxu0 0.0
        %1685 = vmatprep.subr.mxu0 0.0
        %1686 = vmatpush2.msra.mxu0 0.0
        %1687 = vmatprep.subr.mxu0 0.0
        %1688 = vmatpush2.msra.mxu0 0.0
        %1689 = vmatprep.subr.mxu0 0.0
        %1690 = vmatpush2.msra.mxu0 0.0
        %1691 = vmatprep.subr.mxu0 0.0
        %1692 = vmatpush2.msra.mxu0 0.0
        %1693 = vmatprep.subr.mxu0 0.0
        %1694 = vmatpush2.msra.mxu0 0.0
        %1695 = vmatprep.mubr.f32.mxu0 0.0
        %v1696 = vand.u32 %v293, 4294901760
        %v1697 = vsub.f32 %v293, %v1696
        %v1698 = vand.u32 %v1697, 4294901760
        %1699 = vmatmul.mubr.f32.gmra.mxu0 %v1698
        %v1700 = vpop.f32.mrf.mxu0
        %v1701 = vadd.f32 %v1626, %v1700
        %v1702 = vpop.f32.mrf.mxu0
        %1703 = vdwg.mxu0
        %1704 = vmatprep.subr.mxu0 0.0
        %1705 = vmatpush1.msra.mxu0 0.0
        %1706 = vmatprep.subr.mxu0 0.0
        %1707 = vmatpush1.msra.mxu0 0.0
        %1708 = vmatprep.subr.mxu0 0.0
        %1709 = vmatpush1.msra.mxu0 0.0
        %1710 = vmatprep.subr.mxu0 0.0
        %1711 = vmatpush1.msra.mxu0 0.0
        %1712 = vmatprep.subr.mxu0 0.0
        %1713 = vmatpush1.msra.mxu0 0.0
        %1714 = vmatprep.subr.mxu0 0.0
        %1715 = vmatpush1.msra.mxu0 0.0
        %1716 = vmatprep.subr.mxu0 0.0
        %1717 = vmatpush1.msra.mxu0 0.0
        %1718 = vmatprep.subr.mxu0 0.0
        %1719 = vmatpush1.msra.mxu0 0.0
        %1720 = vmatprep.subr.mxu0 0.0
        %1721 = vmatpush1.msra.mxu0 0.0
        %1722 = vmatprep.subr.mxu0 0.0
        %1723 = vmatpush1.msra.mxu0 0.0
        %1724 = vmatprep.subr.mxu0 0.0
        %1725 = vmatpush1.msra.mxu0 0.0
        %1726 = vmatprep.subr.mxu0 0.0
        %1727 = vmatpush1.msra.mxu0 0.0
        %1728 = vmatprep.subr.mxu0 0.0
        %1729 = vmatpush1.msra.mxu0 0.0
        %1730 = vmatprep.subr.mxu0 0.0
        %1731 = vmatpush1.msra.mxu0 0.0
        %1732 = vmatprep.subr.mxu0 0.0
        %v1733 = vand.u32 %v290, 4294901760
        %v1734 = vsub.f32 %v290, %v1733
        %v1735 = vand.u32 %v1734, 4294901760
        %1736 = vmatpush1.msra.mxu0 %v1735
        %1737 = vmatprep.subr.mxu0 0.0
        %v1738 = vand.u32 %v289, 4294901760
        %v1739 = vsub.f32 %v289, %v1738
        %v1740 = vand.u32 %v1739, 4294901760
        %1741 = vmatpush1.msra.mxu0 %v1740
        %1742 = vmatprep.subr.mxu0 0.0
        %1743 = vmatpush2.msra.mxu0 0.0
        %1744 = vmatprep.subr.mxu0 0.0
        %1745 = vmatpush2.msra.mxu0 0.0
        %1746 = vmatprep.subr.mxu0 0.0
        %1747 = vmatpush2.msra.mxu0 0.0
        %1748 = vmatprep.subr.mxu0 0.0
        %1749 = vmatpush2.msra.mxu0 0.0
        %1750 = vmatprep.subr.mxu0 0.0
        %1751 = vmatpush2.msra.mxu0 0.0
        %1752 = vmatprep.subr.mxu0 0.0
        %1753 = vmatpush2.msra.mxu0 0.0
        %1754 = vmatprep.subr.mxu0 0.0
        %1755 = vmatpush2.msra.mxu0 0.0
        %1756 = vmatprep.subr.mxu0 0.0
        %1757 = vmatpush2.msra.mxu0 0.0
        %1758 = vmatprep.subr.mxu0 0.0
        %1759 = vmatpush2.msra.mxu0 0.0
        %1760 = vmatprep.subr.mxu0 0.0
        %1761 = vmatpush2.msra.mxu0 0.0
        %1762 = vmatprep.subr.mxu0 0.0
        %1763 = vmatpush2.msra.mxu0 0.0
        %1764 = vmatprep.subr.mxu0 0.0
        %1765 = vmatpush2.msra.mxu0 0.0
        %1766 = vmatprep.subr.mxu0 0.0
        %1767 = vmatpush2.msra.mxu0 0.0
        %1768 = vmatprep.subr.mxu0 0.0
        %1769 = vmatpush2.msra.mxu0 0.0
        %1770 = vmatprep.subr.mxu0 0.0
        %1771 = vmatpush2.msra.mxu0 0.0
        %1772 = vmatprep.subr.mxu0 0.0
        %1773 = vmatpush2.msra.mxu0 0.0
        %1774 = vmatprep.mubr.f32.mxu0 0.0
        %v1775 = vand.u32 %v293, 4294901760
        %1776 = vmatmul.mubr.f32.gmra.mxu0 %v1775
        %v1777 = vpop.f32.mrf.mxu0
        %v1778 = vadd.f32 %v1701, %v1777
        %v1779 = vpop.f32.mrf.mxu0
        %1780 = vdwg.mxu0
        %1781 = vmatprep.subr.mxu0 0.0
        %1782 = vmatpush1.msra.mxu0 0.0
        %1783 = vmatprep.subr.mxu0 0.0
        %1784 = vmatpush1.msra.mxu0 0.0
        %1785 = vmatprep.subr.mxu0 0.0
        %1786 = vmatpush1.msra.mxu0 0.0
        %1787 = vmatprep.subr.mxu0 0.0
        %1788 = vmatpush1.msra.mxu0 0.0
        %1789 = vmatprep.subr.mxu0 0.0
        %1790 = vmatpush1.msra.mxu0 0.0
        %1791 = vmatprep.subr.mxu0 0.0
        %1792 = vmatpush1.msra.mxu0 0.0
        %1793 = vmatprep.subr.mxu0 0.0
        %1794 = vmatpush1.msra.mxu0 0.0
        %1795 = vmatprep.subr.mxu0 0.0
        %1796 = vmatpush1.msra.mxu0 0.0
        %1797 = vmatprep.subr.mxu0 0.0
        %1798 = vmatpush1.msra.mxu0 0.0
        %1799 = vmatprep.subr.mxu0 0.0
        %1800 = vmatpush1.msra.mxu0 0.0
        %1801 = vmatprep.subr.mxu0 0.0
        %1802 = vmatpush1.msra.mxu0 0.0
        %1803 = vmatprep.subr.mxu0 0.0
        %1804 = vmatpush1.msra.mxu0 0.0
        %1805 = vmatprep.subr.mxu0 0.0
        %1806 = vmatpush1.msra.mxu0 0.0
        %1807 = vmatprep.subr.mxu0 0.0
        %1808 = vmatpush1.msra.mxu0 0.0
        %1809 = vmatprep.subr.mxu0 0.0
        %v1810 = vand.u32 %v290, 4294901760
        %1811 = vmatpush1.msra.mxu0 %v1810
        %1812 = vmatprep.subr.mxu0 0.0
        %v1813 = vand.u32 %v289, 4294901760
        %1814 = vmatpush1.msra.mxu0 %v1813
        %1815 = vmatprep.subr.mxu0 0.0
        %1816 = vmatpush2.msra.mxu0 0.0
        %1817 = vmatprep.subr.mxu0 0.0
        %1818 = vmatpush2.msra.mxu0 0.0
        %1819 = vmatprep.subr.mxu0 0.0
        %1820 = vmatpush2.msra.mxu0 0.0
        %1821 = vmatprep.subr.mxu0 0.0
        %1822 = vmatpush2.msra.mxu0 0.0
        %1823 = vmatprep.subr.mxu0 0.0
        %1824 = vmatpush2.msra.mxu0 0.0
        %1825 = vmatprep.subr.mxu0 0.0
        %1826 = vmatpush2.msra.mxu0 0.0
        %1827 = vmatprep.subr.mxu0 0.0
        %1828 = vmatpush2.msra.mxu0 0.0
        %1829 = vmatprep.subr.mxu0 0.0
        %1830 = vmatpush2.msra.mxu0 0.0
        %1831 = vmatprep.subr.mxu0 0.0
        %1832 = vmatpush2.msra.mxu0 0.0
        %1833 = vmatprep.subr.mxu0 0.0
        %1834 = vmatpush2.msra.mxu0 0.0
        %1835 = vmatprep.subr.mxu0 0.0
        %1836 = vmatpush2.msra.mxu0 0.0
        %1837 = vmatprep.subr.mxu0 0.0
        %1838 = vmatpush2.msra.mxu0 0.0
        %1839 = vmatprep.subr.mxu0 0.0
        %1840 = vmatpush2.msra.mxu0 0.0
        %1841 = vmatprep.subr.mxu0 0.0
        %1842 = vmatpush2.msra.mxu0 0.0
        %1843 = vmatprep.subr.mxu0 0.0
        %1844 = vmatpush2.msra.mxu0 0.0
        %1845 = vmatprep.subr.mxu0 0.0
        %1846 = vmatpush2.msra.mxu0 0.0
        %1847 = vmatprep.mubr.f32.mxu0 0.0
        %v1848 = vand.u32 %v293, 4294901760
        %1849 = vmatmul.mubr.f32.gmra.mxu0 %v1848
        %v1850 = vpop.f32.mrf.mxu0
        %v1851 = vadd.f32 %v1778, %v1850
        %v1852 = vpop.f32.mrf.mxu0
        %1853 = vdwg.mxu0
        %1854 = vmatprep.subr.mxu0 0.0
        %v1855 = vand.u32 %v250, 4294901760
        %1856 = vmatpush1.msra.mxu0 %v1855
        %1857 = vmatprep.subr.mxu0 0.0
        %v1858 = vand.u32 %v249, 4294901760
        %1859 = vmatpush1.msra.mxu0 %v1858
        %1860 = vmatprep.subr.mxu0 0.0
        %v1861 = vand.u32 %v248, 4294901760
        %1862 = vmatpush1.msra.mxu0 %v1861
        %1863 = vmatprep.subr.mxu0 0.0
        %v1864 = vand.u32 %v247, 4294901760
        %1865 = vmatpush1.msra.mxu0 %v1864
        %1866 = vmatprep.subr.mxu0 0.0
        %v1867 = vand.u32 %v246, 4294901760
        %1868 = vmatpush1.msra.mxu0 %v1867
        %1869 = vmatprep.subr.mxu0 0.0
        %v1870 = vand.u32 %v245, 4294901760
        %1871 = vmatpush1.msra.mxu0 %v1870
        %1872 = vmatprep.subr.mxu0 0.0
        %v1873 = vand.u32 %v244, 4294901760
        %1874 = vmatpush1.msra.mxu0 %v1873
        %1875 = vmatprep.subr.mxu0 0.0
        %v1876 = vand.u32 %v243, 4294901760
        %1877 = vmatpush1.msra.mxu0 %v1876
        %1878 = vmatprep.subr.mxu0 0.0
        %v1879 = vand.u32 %v242, 4294901760
        %1880 = vmatpush1.msra.mxu0 %v1879
        %1881 = vmatprep.subr.mxu0 0.0
        %v1882 = vand.u32 %v241, 4294901760
        %1883 = vmatpush1.msra.mxu0 %v1882
        %1884 = vmatprep.subr.mxu0 0.0
        %v1885 = vand.u32 %v240, 4294901760
        %1886 = vmatpush1.msra.mxu0 %v1885
        %1887 = vmatprep.subr.mxu0 0.0
        %v1888 = vand.u32 %v239, 4294901760
        %1889 = vmatpush1.msra.mxu0 %v1888
        %1890 = vmatprep.subr.mxu0 0.0
        %v1891 = vand.u32 %v238, 4294901760
        %1892 = vmatpush1.msra.mxu0 %v1891
        %1893 = vmatprep.subr.mxu0 0.0
        %v1894 = vand.u32 %v237, 4294901760
        %1895 = vmatpush1.msra.mxu0 %v1894
        %1896 = vmatprep.subr.mxu0 0.0
        %v1897 = vand.u32 %v236, 4294901760
        %1898 = vmatpush1.msra.mxu0 %v1897
        %1899 = vmatprep.subr.mxu0 0.0
        %v1900 = vand.u32 %v235, 4294901760
        %1901 = vmatpush1.msra.mxu0 %v1900
        %1902 = vmatprep.subr.mxu0 0.0
        %1903 = vmatpush2.msra.mxu0 0.0
        %1904 = vmatprep.subr.mxu0 0.0
        %1905 = vmatpush2.msra.mxu0 0.0
        %1906 = vmatprep.subr.mxu0 0.0
        %1907 = vmatpush2.msra.mxu0 0.0
        %1908 = vmatprep.subr.mxu0 0.0
        %1909 = vmatpush2.msra.mxu0 0.0
        %1910 = vmatprep.subr.mxu0 0.0
        %1911 = vmatpush2.msra.mxu0 0.0
        %1912 = vmatprep.subr.mxu0 0.0
        %1913 = vmatpush2.msra.mxu0 0.0
        %1914 = vmatprep.subr.mxu0 0.0
        %1915 = vmatpush2.msra.mxu0 0.0
        %1916 = vmatprep.subr.mxu0 0.0
        %1917 = vmatpush2.msra.mxu0 0.0
        %1918 = vmatprep.subr.mxu0 0.0
        %1919 = vmatpush2.msra.mxu0 0.0
        %1920 = vmatprep.subr.mxu0 0.0
        %1921 = vmatpush2.msra.mxu0 0.0
        %1922 = vmatprep.subr.mxu0 0.0
        %1923 = vmatpush2.msra.mxu0 0.0
        %1924 = vmatprep.subr.mxu0 0.0
        %1925 = vmatpush2.msra.mxu0 0.0
        %1926 = vmatprep.subr.mxu0 0.0
        %1927 = vmatpush2.msra.mxu0 0.0
        %1928 = vmatprep.subr.mxu0 0.0
        %1929 = vmatpush2.msra.mxu0 0.0
        %1930 = vmatprep.subr.mxu0 0.0
        %1931 = vmatpush2.msra.mxu0 0.0
        %1932 = vmatprep.subr.mxu0 0.0
        %1933 = vmatpush2.msra.mxu0 0.0
        %1934 = vmatprep.mubr.f32.mxu0 0.0
        %v1935 = vand.u32 %v1851, 4294901760
        %v1936 = vsub.f32 %v1851, %v1935
        %v1937 = vand.u32 %v1936, 4294901760
        %v1938 = vsub.f32 %v1936, %v1937
        %v1939 = vand.u32 %v1938, 4294901760
        %1940 = vmatmul.mubr.f32.gmra.mxu0 %v1939
        %v1941 = vpop.f32.mrf.mxu0
        %v1942 = vadd.f32 0.0, %v1941
        %v1943 = vpop.f32.mrf.mxu0
        %1944 = vdwg.mxu0
        %1945 = vmatprep.subr.mxu0 0.0
        %v1946 = vand.u32 %v250, 4294901760
        %v1947 = vsub.f32 %v250, %v1946
        %v1948 = vand.u32 %v1947, 4294901760
        %v1949 = vsub.f32 %v1947, %v1948
        %v1950 = vand.u32 %v1949, 4294901760
        %1951 = vmatpush1.msra.mxu0 %v1950
        %1952 = vmatprep.subr.mxu0 0.0
        %v1953 = vand.u32 %v249, 4294901760
        %v1954 = vsub.f32 %v249, %v1953
        %v1955 = vand.u32 %v1954, 4294901760
        %v1956 = vsub.f32 %v1954, %v1955
        %v1957 = vand.u32 %v1956, 4294901760
        %1958 = vmatpush1.msra.mxu0 %v1957
        %1959 = vmatprep.subr.mxu0 0.0
        %v1960 = vand.u32 %v248, 4294901760
        %v1961 = vsub.f32 %v248, %v1960
        %v1962 = vand.u32 %v1961, 4294901760
        %v1963 = vsub.f32 %v1961, %v1962
        %v1964 = vand.u32 %v1963, 4294901760
        %1965 = vmatpush1.msra.mxu0 %v1964
        %1966 = vmatprep.subr.mxu0 0.0
        %v1967 = vand.u32 %v247, 4294901760
        %v1968 = vsub.f32 %v247, %v1967
        %v1969 = vand.u32 %v1968, 4294901760
        %v1970 = vsub.f32 %v1968, %v1969
        %v1971 = vand.u32 %v1970, 4294901760
        %1972 = vmatpush1.msra.mxu0 %v1971
        %1973 = vmatprep.subr.mxu0 0.0
        %v1974 = vand.u32 %v246, 4294901760
        %v1975 = vsub.f32 %v246, %v1974
        %v1976 = vand.u32 %v1975, 4294901760
        %v1977 = vsub.f32 %v1975, %v1976
        %v1978 = vand.u32 %v1977, 4294901760
        %1979 = vmatpush1.msra.mxu0 %v1978
        %1980 = vmatprep.subr.mxu0 0.0
        %v1981 = vand.u32 %v245, 4294901760
        %v1982 = vsub.f32 %v245, %v1981
        %v1983 = vand.u32 %v1982, 4294901760
        %v1984 = vsub.f32 %v1982, %v1983
        %v1985 = vand.u32 %v1984, 4294901760
        %1986 = vmatpush1.msra.mxu0 %v1985
        %1987 = vmatprep.subr.mxu0 0.0
        %v1988 = vand.u32 %v244, 4294901760
        %v1989 = vsub.f32 %v244, %v1988
        %v1990 = vand.u32 %v1989, 4294901760
        %v1991 = vsub.f32 %v1989, %v1990
        %v1992 = vand.u32 %v1991, 4294901760
        %1993 = vmatpush1.msra.mxu0 %v1992
        %1994 = vmatprep.subr.mxu0 0.0
        %v1995 = vand.u32 %v243, 4294901760
        %v1996 = vsub.f32 %v243, %v1995
        %v1997 = vand.u32 %v1996, 4294901760
        %v1998 = vsub.f32 %v1996, %v1997
        %v1999 = vand.u32 %v1998, 4294901760
        %2000 = vmatpush1.msra.mxu0 %v1999
        %2001 = vmatprep.subr.mxu0 0.0
        %v2002 = vand.u32 %v242, 4294901760
        %v2003 = vsub.f32 %v242, %v2002
        %v2004 = vand.u32 %v2003, 4294901760
        %v2005 = vsub.f32 %v2003, %v2004
        %v2006 = vand.u32 %v2005, 4294901760
        %2007 = vmatpush1.msra.mxu0 %v2006
        %2008 = vmatprep.subr.mxu0 0.0
        %v2009 = vand.u32 %v241, 4294901760
        %v2010 = vsub.f32 %v241, %v2009
        %v2011 = vand.u32 %v2010, 4294901760
        %v2012 = vsub.f32 %v2010, %v2011
        %v2013 = vand.u32 %v2012, 4294901760
        %2014 = vmatpush1.msra.mxu0 %v2013
        %2015 = vmatprep.subr.mxu0 0.0
        %v2016 = vand.u32 %v240, 4294901760
        %v2017 = vsub.f32 %v240, %v2016
        %v2018 = vand.u32 %v2017, 4294901760
        %v2019 = vsub.f32 %v2017, %v2018
        %v2020 = vand.u32 %v2019, 4294901760
        %2021 = vmatpush1.msra.mxu0 %v2020
        %2022 = vmatprep.subr.mxu0 0.0
        %v2023 = vand.u32 %v239, 4294901760
        %v2024 = vsub.f32 %v239, %v2023
        %v2025 = vand.u32 %v2024, 4294901760
        %v2026 = vsub.f32 %v2024, %v2025
        %v2027 = vand.u32 %v2026, 4294901760
        %2028 = vmatpush1.msra.mxu0 %v2027
        %2029 = vmatprep.subr.mxu0 0.0
        %v2030 = vand.u32 %v238, 4294901760
        %v2031 = vsub.f32 %v238, %v2030
        %v2032 = vand.u32 %v2031, 4294901760
        %v2033 = vsub.f32 %v2031, %v2032
        %v2034 = vand.u32 %v2033, 4294901760
        %2035 = vmatpush1.msra.mxu0 %v2034
        %2036 = vmatprep.subr.mxu0 0.0
        %v2037 = vand.u32 %v237, 4294901760
        %v2038 = vsub.f32 %v237, %v2037
        %v2039 = vand.u32 %v2038, 4294901760
        %v2040 = vsub.f32 %v2038, %v2039
        %v2041 = vand.u32 %v2040, 4294901760
        %2042 = vmatpush1.msra.mxu0 %v2041
        %2043 = vmatprep.subr.mxu0 0.0
        %v2044 = vand.u32 %v236, 4294901760
        %v2045 = vsub.f32 %v236, %v2044
        %v2046 = vand.u32 %v2045, 4294901760
        %v2047 = vsub.f32 %v2045, %v2046
        %v2048 = vand.u32 %v2047, 4294901760
        %2049 = vmatpush1.msra.mxu0 %v2048
        %2050 = vmatprep.subr.mxu0 0.0
        %v2051 = vand.u32 %v235, 4294901760
        %v2052 = vsub.f32 %v235, %v2051
        %v2053 = vand.u32 %v2052, 4294901760
        %v2054 = vsub.f32 %v2052, %v2053
        %v2055 = vand.u32 %v2054, 4294901760
        %2056 = vmatpush1.msra.mxu0 %v2055
        %2057 = vmatprep.subr.mxu0 0.0
        %2058 = vmatpush2.msra.mxu0 0.0
        %2059 = vmatprep.subr.mxu0 0.0
        %2060 = vmatpush2.msra.mxu0 0.0
        %2061 = vmatprep.subr.mxu0 0.0
        %2062 = vmatpush2.msra.mxu0 0.0
        %2063 = vmatprep.subr.mxu0 0.0
        %2064 = vmatpush2.msra.mxu0 0.0
        %2065 = vmatprep.subr.mxu0 0.0
        %2066 = vmatpush2.msra.mxu0 0.0
        %2067 = vmatprep.subr.mxu0 0.0
        %2068 = vmatpush2.msra.mxu0 0.0
        %2069 = vmatprep.subr.mxu0 0.0
        %2070 = vmatpush2.msra.mxu0 0.0
        %2071 = vmatprep.subr.mxu0 0.0
        %2072 = vmatpush2.msra.mxu0 0.0
        %2073 = vmatprep.subr.mxu0 0.0
        %2074 = vmatpush2.msra.mxu0 0.0
        %2075 = vmatprep.subr.mxu0 0.0
        %2076 = vmatpush2.msra.mxu0 0.0
        %2077 = vmatprep.subr.mxu0 0.0
        %2078 = vmatpush2.msra.mxu0 0.0
        %2079 = vmatprep.subr.mxu0 0.0
        %2080 = vmatpush2.msra.mxu0 0.0
        %2081 = vmatprep.subr.mxu0 0.0
        %2082 = vmatpush2.msra.mxu0 0.0
        %2083 = vmatprep.subr.mxu0 0.0
        %2084 = vmatpush2.msra.mxu0 0.0
        %2085 = vmatprep.subr.mxu0 0.0
        %2086 = vmatpush2.msra.mxu0 0.0
        %2087 = vmatprep.subr.mxu0 0.0
        %2088 = vmatpush2.msra.mxu0 0.0
        %2089 = vmatprep.mubr.f32.mxu0 0.0
        %v2090 = vand.u32 %v1851, 4294901760
        %2091 = vmatmul.mubr.f32.gmra.mxu0 %v2090
        %v2092 = vpop.f32.mrf.mxu0
        %v2093 = vadd.f32 %v1942, %v2092
        %v2094 = vpop.f32.mrf.mxu0
        %2095 = vdwg.mxu0
        %2096 = vmatprep.subr.mxu0 0.0
        %v2097 = vand.u32 %v250, 4294901760
        %v2098 = vsub.f32 %v250, %v2097
        %2099 = vmatpush1.msra.mxu0 %v2098
        %2100 = vmatprep.subr.mxu0 0.0
        %v2101 = vand.u32 %v249, 4294901760
        %v2102 = vsub.f32 %v249, %v2101
        %2103 = vmatpush1.msra.mxu0 %v2102
        %2104 = vmatprep.subr.mxu0 0.0
        %v2105 = vand.u32 %v248, 4294901760
        %v2106 = vsub.f32 %v248, %v2105
        %2107 = vmatpush1.msra.mxu0 %v2106
        %2108 = vmatprep.subr.mxu0 0.0
        %v2109 = vand.u32 %v247, 4294901760
        %v2110 = vsub.f32 %v247, %v2109
        %2111 = vmatpush1.msra.mxu0 %v2110
        %2112 = vmatprep.subr.mxu0 0.0
        %v2113 = vand.u32 %v246, 4294901760
        %v2114 = vsub.f32 %v246, %v2113
        %2115 = vmatpush1.msra.mxu0 %v2114
        %2116 = vmatprep.subr.mxu0 0.0
        %v2117 = vand.u32 %v245, 4294901760
        %v2118 = vsub.f32 %v245, %v2117
        %2119 = vmatpush1.msra.mxu0 %v2118
        %2120 = vmatprep.subr.mxu0 0.0
        %v2121 = vand.u32 %v244, 4294901760
        %v2122 = vsub.f32 %v244, %v2121
        %2123 = vmatpush1.msra.mxu0 %v2122
        %2124 = vmatprep.subr.mxu0 0.0
        %v2125 = vand.u32 %v243, 4294901760
        %v2126 = vsub.f32 %v243, %v2125
        %2127 = vmatpush1.msra.mxu0 %v2126
        %2128 = vmatprep.subr.mxu0 0.0
        %v2129 = vand.u32 %v242, 4294901760
        %v2130 = vsub.f32 %v242, %v2129
        %2131 = vmatpush1.msra.mxu0 %v2130
        %2132 = vmatprep.subr.mxu0 0.0
        %v2133 = vand.u32 %v241, 4294901760
        %v2134 = vsub.f32 %v241, %v2133
        %2135 = vmatpush1.msra.mxu0 %v2134
        %2136 = vmatprep.subr.mxu0 0.0
        %v2137 = vand.u32 %v240, 4294901760
        %v2138 = vsub.f32 %v240, %v2137
        %2139 = vmatpush1.msra.mxu0 %v2138
        %2140 = vmatprep.subr.mxu0 0.0
        %v2141 = vand.u32 %v239, 4294901760
        %v2142 = vsub.f32 %v239, %v2141
        %2143 = vmatpush1.msra.mxu0 %v2142
        %2144 = vmatprep.subr.mxu0 0.0
        %v2145 = vand.u32 %v238, 4294901760
        %v2146 = vsub.f32 %v238, %v2145
        %2147 = vmatpush1.msra.mxu0 %v2146
        %2148 = vmatprep.subr.mxu0 0.0
        %v2149 = vand.u32 %v237, 4294901760
        %v2150 = vsub.f32 %v237, %v2149
        %2151 = vmatpush1.msra.mxu0 %v2150
        %2152 = vmatprep.subr.mxu0 0.0
        %v2153 = vand.u32 %v236, 4294901760
        %v2154 = vsub.f32 %v236, %v2153
        %2155 = vmatpush1.msra.mxu0 %v2154
        %2156 = vmatprep.subr.mxu0 0.0
        %v2157 = vand.u32 %v235, 4294901760
        %v2158 = vsub.f32 %v235, %v2157
        %2159 = vmatpush1.msra.mxu0 %v2158
        %2160 = vmatprep.subr.mxu0 0.0
        %2161 = vmatpush2.msra.mxu0 0.0
        %2162 = vmatprep.subr.mxu0 0.0
        %2163 = vmatpush2.msra.mxu0 0.0
        %2164 = vmatprep.subr.mxu0 0.0
        %2165 = vmatpush2.msra.mxu0 0.0
        %2166 = vmatprep.subr.mxu0 0.0
        %2167 = vmatpush2.msra.mxu0 0.0
        %2168 = vmatprep.subr.mxu0 0.0
        %2169 = vmatpush2.msra.mxu0 0.0
        %2170 = vmatprep.subr.mxu0 0.0
        %2171 = vmatpush2.msra.mxu0 0.0
        %2172 = vmatprep.subr.mxu0 0.0
        %2173 = vmatpush2.msra.mxu0 0.0
        %2174 = vmatprep.subr.mxu0 0.0
        %2175 = vmatpush2.msra.mxu0 0.0
        %2176 = vmatprep.subr.mxu0 0.0
        %2177 = vmatpush2.msra.mxu0 0.0
        %2178 = vmatprep.subr.mxu0 0.0
        %2179 = vmatpush2.msra.mxu0 0.0
        %2180 = vmatprep.subr.mxu0 0.0
        %2181 = vmatpush2.msra.mxu0 0.0
        %2182 = vmatprep.subr.mxu0 0.0
        %2183 = vmatpush2.msra.mxu0 0.0
        %2184 = vmatprep.subr.mxu0 0.0
        %2185 = vmatpush2.msra.mxu0 0.0
        %2186 = vmatprep.subr.mxu0 0.0
        %2187 = vmatpush2.msra.mxu0 0.0
        %2188 = vmatprep.subr.mxu0 0.0
        %2189 = vmatpush2.msra.mxu0 0.0
        %2190 = vmatprep.subr.mxu0 0.0
        %2191 = vmatpush2.msra.mxu0 0.0
        %2192 = vmatprep.mubr.f32.mxu0 0.0
        %v2193 = vand.u32 %v1851, 4294901760
        %v2194 = vsub.f32 %v1851, %v2193
        %2195 = vmatmul.mubr.f32.gmra.mxu0 %v2194
        %v2196 = vpop.f32.mrf.mxu0
        %v2197 = vadd.f32 %v2093, %v2196
        %v2198 = vpop.f32.mrf.mxu0
        %2199 = vdwg.mxu0
        %2200 = vmatprep.subr.mxu0 0.0
        %v2201 = vand.u32 %v250, 4294901760
        %2202 = vmatpush1.msra.mxu0 %v2201
        %2203 = vmatprep.subr.mxu0 0.0
        %v2204 = vand.u32 %v249, 4294901760
        %2205 = vmatpush1.msra.mxu0 %v2204
        %2206 = vmatprep.subr.mxu0 0.0
        %v2207 = vand.u32 %v248, 4294901760
        %2208 = vmatpush1.msra.mxu0 %v2207
        %2209 = vmatprep.subr.mxu0 0.0
        %v2210 = vand.u32 %v247, 4294901760
        %2211 = vmatpush1.msra.mxu0 %v2210
        %2212 = vmatprep.subr.mxu0 0.0
        %v2213 = vand.u32 %v246, 4294901760
        %2214 = vmatpush1.msra.mxu0 %v2213
        %2215 = vmatprep.subr.mxu0 0.0
        %v2216 = vand.u32 %v245, 4294901760
        %2217 = vmatpush1.msra.mxu0 %v2216
        %2218 = vmatprep.subr.mxu0 0.0
        %v2219 = vand.u32 %v244, 4294901760
        %2220 = vmatpush1.msra.mxu0 %v2219
        %2221 = vmatprep.subr.mxu0 0.0
        %v2222 = vand.u32 %v243, 4294901760
        %2223 = vmatpush1.msra.mxu0 %v2222
        %2224 = vmatprep.subr.mxu0 0.0
        %v2225 = vand.u32 %v242, 4294901760
        %2226 = vmatpush1.msra.mxu0 %v2225
        %2227 = vmatprep.subr.mxu0 0.0
        %v2228 = vand.u32 %v241, 4294901760
        %2229 = vmatpush1.msra.mxu0 %v2228
        %2230 = vmatprep.subr.mxu0 0.0
        %v2231 = vand.u32 %v240, 4294901760
        %2232 = vmatpush1.msra.mxu0 %v2231
        %2233 = vmatprep.subr.mxu0 0.0
        %v2234 = vand.u32 %v239, 4294901760
        %2235 = vmatpush1.msra.mxu0 %v2234
        %2236 = vmatprep.subr.mxu0 0.0
        %v2237 = vand.u32 %v238, 4294901760
        %2238 = vmatpush1.msra.mxu0 %v2237
        %2239 = vmatprep.subr.mxu0 0.0
        %v2240 = vand.u32 %v237, 4294901760
        %2241 = vmatpush1.msra.mxu0 %v2240
        %2242 = vmatprep.subr.mxu0 0.0
        %v2243 = vand.u32 %v236, 4294901760
        %2244 = vmatpush1.msra.mxu0 %v2243
        %2245 = vmatprep.subr.mxu0 0.0
        %v2246 = vand.u32 %v235, 4294901760
        %2247 = vmatpush1.msra.mxu0 %v2246
        %2248 = vmatprep.subr.mxu0 0.0
        %2249 = vmatpush2.msra.mxu0 0.0
        %2250 = vmatprep.subr.mxu0 0.0
        %2251 = vmatpush2.msra.mxu0 0.0
        %2252 = vmatprep.subr.mxu0 0.0
        %2253 = vmatpush2.msra.mxu0 0.0
        %2254 = vmatprep.subr.mxu0 0.0
        %2255 = vmatpush2.msra.mxu0 0.0
        %2256 = vmatprep.subr.mxu0 0.0
        %2257 = vmatpush2.msra.mxu0 0.0
        %2258 = vmatprep.subr.mxu0 0.0
        %2259 = vmatpush2.msra.mxu0 0.0
        %2260 = vmatprep.subr.mxu0 0.0
        %2261 = vmatpush2.msra.mxu0 0.0
        %2262 = vmatprep.subr.mxu0 0.0
        %2263 = vmatpush2.msra.mxu0 0.0
        %2264 = vmatprep.subr.mxu0 0.0
        %2265 = vmatpush2.msra.mxu0 0.0
        %2266 = vmatprep.subr.mxu0 0.0
        %2267 = vmatpush2.msra.mxu0 0.0
        %2268 = vmatprep.subr.mxu0 0.0
        %2269 = vmatpush2.msra.mxu0 0.0
        %2270 = vmatprep.subr.mxu0 0.0
        %2271 = vmatpush2.msra.mxu0 0.0
        %2272 = vmatprep.subr.mxu0 0.0
        %2273 = vmatpush2.msra.mxu0 0.0
        %2274 = vmatprep.subr.mxu0 0.0
        %2275 = vmatpush2.msra.mxu0 0.0
        %2276 = vmatprep.subr.mxu0 0.0
        %2277 = vmatpush2.msra.mxu0 0.0
        %2278 = vmatprep.subr.mxu0 0.0
        %2279 = vmatpush2.msra.mxu0 0.0
        %2280 = vmatprep.mubr.f32.mxu0 0.0
        %v2281 = vand.u32 %v1851, 4294901760
        %v2282 = vsub.f32 %v1851, %v2281
        %v2283 = vand.u32 %v2282, 4294901760
        %2284 = vmatmul.mubr.f32.gmra.mxu0 %v2283
        %v2285 = vpop.f32.mrf.mxu0
        %v2286 = vadd.f32 %v2197, %v2285
        %v2287 = vpop.f32.mrf.mxu0
        %2288 = vdwg.mxu0
        %2289 = vmatprep.subr.mxu0 0.0
        %v2290 = vand.u32 %v250, 4294901760
        %v2291 = vsub.f32 %v250, %v2290
        %v2292 = vand.u32 %v2291, 4294901760
        %2293 = vmatpush1.msra.mxu0 %v2292
        %2294 = vmatprep.subr.mxu0 0.0
        %v2295 = vand.u32 %v249, 4294901760
        %v2296 = vsub.f32 %v249, %v2295
        %v2297 = vand.u32 %v2296, 4294901760
        %2298 = vmatpush1.msra.mxu0 %v2297
        %2299 = vmatprep.subr.mxu0 0.0
        %v2300 = vand.u32 %v248, 4294901760
        %v2301 = vsub.f32 %v248, %v2300
        %v2302 = vand.u32 %v2301, 4294901760
        %2303 = vmatpush1.msra.mxu0 %v2302
        %2304 = vmatprep.subr.mxu0 0.0
        %v2305 = vand.u32 %v247, 4294901760
        %v2306 = vsub.f32 %v247, %v2305
        %v2307 = vand.u32 %v2306, 4294901760
        %2308 = vmatpush1.msra.mxu0 %v2307
        %2309 = vmatprep.subr.mxu0 0.0
        %v2310 = vand.u32 %v246, 4294901760
        %v2311 = vsub.f32 %v246, %v2310
        %v2312 = vand.u32 %v2311, 4294901760
        %2313 = vmatpush1.msra.mxu0 %v2312
        %2314 = vmatprep.subr.mxu0 0.0
        %v2315 = vand.u32 %v245, 4294901760
        %v2316 = vsub.f32 %v245, %v2315
        %v2317 = vand.u32 %v2316, 4294901760
        %2318 = vmatpush1.msra.mxu0 %v2317
        %2319 = vmatprep.subr.mxu0 0.0
        %v2320 = vand.u32 %v244, 4294901760
        %v2321 = vsub.f32 %v244, %v2320
        %v2322 = vand.u32 %v2321, 4294901760
        %2323 = vmatpush1.msra.mxu0 %v2322
        %2324 = vmatprep.subr.mxu0 0.0
        %v2325 = vand.u32 %v243, 4294901760
        %v2326 = vsub.f32 %v243, %v2325
        %v2327 = vand.u32 %v2326, 4294901760
        %2328 = vmatpush1.msra.mxu0 %v2327
        %2329 = vmatprep.subr.mxu0 0.0
        %v2330 = vand.u32 %v242, 4294901760
        %v2331 = vsub.f32 %v242, %v2330
        %v2332 = vand.u32 %v2331, 4294901760
        %2333 = vmatpush1.msra.mxu0 %v2332
        %2334 = vmatprep.subr.mxu0 0.0
        %v2335 = vand.u32 %v241, 4294901760
        %v2336 = vsub.f32 %v241, %v2335
        %v2337 = vand.u32 %v2336, 4294901760
        %2338 = vmatpush1.msra.mxu0 %v2337
        %2339 = vmatprep.subr.mxu0 0.0
        %v2340 = vand.u32 %v240, 4294901760
        %v2341 = vsub.f32 %v240, %v2340
        %v2342 = vand.u32 %v2341, 4294901760
        %2343 = vmatpush1.msra.mxu0 %v2342
        %2344 = vmatprep.subr.mxu0 0.0
        %v2345 = vand.u32 %v239, 4294901760
        %v2346 = vsub.f32 %v239, %v2345
        %v2347 = vand.u32 %v2346, 4294901760
        %2348 = vmatpush1.msra.mxu0 %v2347
        %2349 = vmatprep.subr.mxu0 0.0
        %v2350 = vand.u32 %v238, 4294901760
        %v2351 = vsub.f32 %v238, %v2350
        %v2352 = vand.u32 %v2351, 4294901760
        %2353 = vmatpush1.msra.mxu0 %v2352
        %2354 = vmatprep.subr.mxu0 0.0
        %v2355 = vand.u32 %v237, 4294901760
        %v2356 = vsub.f32 %v237, %v2355
        %v2357 = vand.u32 %v2356, 4294901760
        %2358 = vmatpush1.msra.mxu0 %v2357
        %2359 = vmatprep.subr.mxu0 0.0
        %v2360 = vand.u32 %v236, 4294901760
        %v2361 = vsub.f32 %v236, %v2360
        %v2362 = vand.u32 %v2361, 4294901760
        %2363 = vmatpush1.msra.mxu0 %v2362
        %2364 = vmatprep.subr.mxu0 0.0
        %v2365 = vand.u32 %v235, 4294901760
        %v2366 = vsub.f32 %v235, %v2365
        %v2367 = vand.u32 %v2366, 4294901760
        %2368 = vmatpush1.msra.mxu0 %v2367
        %2369 = vmatprep.subr.mxu0 0.0
        %2370 = vmatpush2.msra.mxu0 0.0
        %2371 = vmatprep.subr.mxu0 0.0
        %2372 = vmatpush2.msra.mxu0 0.0
        %2373 = vmatprep.subr.mxu0 0.0
        %2374 = vmatpush2.msra.mxu0 0.0
        %2375 = vmatprep.subr.mxu0 0.0
        %2376 = vmatpush2.msra.mxu0 0.0
        %2377 = vmatprep.subr.mxu0 0.0
        %2378 = vmatpush2.msra.mxu0 0.0
        %2379 = vmatprep.subr.mxu0 0.0
        %2380 = vmatpush2.msra.mxu0 0.0
        %2381 = vmatprep.subr.mxu0 0.0
        %2382 = vmatpush2.msra.mxu0 0.0
        %2383 = vmatprep.subr.mxu0 0.0
        %2384 = vmatpush2.msra.mxu0 0.0
        %2385 = vmatprep.subr.mxu0 0.0
        %2386 = vmatpush2.msra.mxu0 0.0
        %2387 = vmatprep.subr.mxu0 0.0
        %2388 = vmatpush2.msra.mxu0 0.0
        %2389 = vmatprep.subr.mxu0 0.0
        %2390 = vmatpush2.msra.mxu0 0.0
        %2391 = vmatprep.subr.mxu0 0.0
        %2392 = vmatpush2.msra.mxu0 0.0
        %2393 = vmatprep.subr.mxu0 0.0
        %2394 = vmatpush2.msra.mxu0 0.0
        %2395 = vmatprep.subr.mxu0 0.0
        %2396 = vmatpush2.msra.mxu0 0.0
        %2397 = vmatprep.subr.mxu0 0.0
        %2398 = vmatpush2.msra.mxu0 0.0
        %2399 = vmatprep.subr.mxu0 0.0
        %2400 = vmatpush2.msra.mxu0 0.0
        %2401 = vmatprep.mubr.f32.mxu0 0.0
        %v2402 = vand.u32 %v1851, 4294901760
        %2403 = vmatmul.mubr.f32.gmra.mxu0 %v2402
        %v2404 = vpop.f32.mrf.mxu0
        %v2405 = vadd.f32 %v2286, %v2404
        %v2406 = vpop.f32.mrf.mxu0
        %2407 = vdwg.mxu0
        %2408 = vmatprep.subr.mxu0 0.0
        %v2409 = vand.u32 %v250, 4294901760
        %2410 = vmatpush1.msra.mxu0 %v2409
        %2411 = vmatprep.subr.mxu0 0.0
        %v2412 = vand.u32 %v249, 4294901760
        %2413 = vmatpush1.msra.mxu0 %v2412
        %2414 = vmatprep.subr.mxu0 0.0
        %v2415 = vand.u32 %v248, 4294901760
        %2416 = vmatpush1.msra.mxu0 %v2415
        %2417 = vmatprep.subr.mxu0 0.0
        %v2418 = vand.u32 %v247, 4294901760
        %2419 = vmatpush1.msra.mxu0 %v2418
        %2420 = vmatprep.subr.mxu0 0.0
        %v2421 = vand.u32 %v246, 4294901760
        %2422 = vmatpush1.msra.mxu0 %v2421
        %2423 = vmatprep.subr.mxu0 0.0
        %v2424 = vand.u32 %v245, 4294901760
        %2425 = vmatpush1.msra.mxu0 %v2424
        %2426 = vmatprep.subr.mxu0 0.0
        %v2427 = vand.u32 %v244, 4294901760
        %2428 = vmatpush1.msra.mxu0 %v2427
        %2429 = vmatprep.subr.mxu0 0.0
        %v2430 = vand.u32 %v243, 4294901760
        %2431 = vmatpush1.msra.mxu0 %v2430
        %2432 = vmatprep.subr.mxu0 0.0
        %v2433 = vand.u32 %v242, 4294901760
        %2434 = vmatpush1.msra.mxu0 %v2433
        %2435 = vmatprep.subr.mxu0 0.0
        %v2436 = vand.u32 %v241, 4294901760
        %2437 = vmatpush1.msra.mxu0 %v2436
        %2438 = vmatprep.subr.mxu0 0.0
        %v2439 = vand.u32 %v240, 4294901760
        %2440 = vmatpush1.msra.mxu0 %v2439
        %2441 = vmatprep.subr.mxu0 0.0
        %v2442 = vand.u32 %v239, 4294901760
        %2443 = vmatpush1.msra.mxu0 %v2442
        %2444 = vmatprep.subr.mxu0 0.0
        %v2445 = vand.u32 %v238, 4294901760
        %2446 = vmatpush1.msra.mxu0 %v2445
        %2447 = vmatprep.subr.mxu0 0.0
        %v2448 = vand.u32 %v237, 4294901760
        %2449 = vmatpush1.msra.mxu0 %v2448
        %2450 = vmatprep.subr.mxu0 0.0
        %v2451 = vand.u32 %v236, 4294901760
        %2452 = vmatpush1.msra.mxu0 %v2451
        %2453 = vmatprep.subr.mxu0 0.0
        %v2454 = vand.u32 %v235, 4294901760
        %2455 = vmatpush1.msra.mxu0 %v2454
        %2456 = vmatprep.subr.mxu0 0.0
        %2457 = vmatpush2.msra.mxu0 0.0
        %2458 = vmatprep.subr.mxu0 0.0
        %2459 = vmatpush2.msra.mxu0 0.0
        %2460 = vmatprep.subr.mxu0 0.0
        %2461 = vmatpush2.msra.mxu0 0.0
        %2462 = vmatprep.subr.mxu0 0.0
        %2463 = vmatpush2.msra.mxu0 0.0
        %2464 = vmatprep.subr.mxu0 0.0
        %2465 = vmatpush2.msra.mxu0 0.0
        %2466 = vmatprep.subr.mxu0 0.0
        %2467 = vmatpush2.msra.mxu0 0.0
        %2468 = vmatprep.subr.mxu0 0.0
        %2469 = vmatpush2.msra.mxu0 0.0
        %2470 = vmatprep.subr.mxu0 0.0
        %2471 = vmatpush2.msra.mxu0 0.0
        %2472 = vmatprep.subr.mxu0 0.0
        %2473 = vmatpush2.msra.mxu0 0.0
        %2474 = vmatprep.subr.mxu0 0.0
        %2475 = vmatpush2.msra.mxu0 0.0
        %2476 = vmatprep.subr.mxu0 0.0
        %2477 = vmatpush2.msra.mxu0 0.0
        %2478 = vmatprep.subr.mxu0 0.0
        %2479 = vmatpush2.msra.mxu0 0.0
        %2480 = vmatprep.subr.mxu0 0.0
        %2481 = vmatpush2.msra.mxu0 0.0
        %2482 = vmatprep.subr.mxu0 0.0
        %2483 = vmatpush2.msra.mxu0 0.0
        %2484 = vmatprep.subr.mxu0 0.0
        %2485 = vmatpush2.msra.mxu0 0.0
        %2486 = vmatprep.subr.mxu0 0.0
        %2487 = vmatpush2.msra.mxu0 0.0
        %2488 = vmatprep.mubr.f32.mxu0 0.0
        %v2489 = vand.u32 %v1851, 4294901760
        %2490 = vmatmul.mubr.f32.gmra.mxu0 %v2489
        %v2491 = vpop.f32.mrf.mxu0
        %v2492 = vadd.f32 %v2405, %v2491
        %v2493 = vpop.f32.mrf.mxu0
        %2494 = vdwg.mxu0
        %v2495 = vmul.f32 %v269, %v269
        %v2496 = vmul.f32 %v270, %v270
        %2497 = vmatprep.subr.mxu0 0.0
        %2498 = vmatpush1.msra.mxu0 0.0
        %2499 = vmatprep.subr.mxu0 0.0
        %2500 = vmatpush1.msra.mxu0 0.0
        %2501 = vmatprep.subr.mxu0 0.0
        %2502 = vmatpush1.msra.mxu0 0.0
        %2503 = vmatprep.subr.mxu0 0.0
        %2504 = vmatpush1.msra.mxu0 0.0
        %2505 = vmatprep.subr.mxu0 0.0
        %2506 = vmatpush1.msra.mxu0 0.0
        %2507 = vmatprep.subr.mxu0 0.0
        %2508 = vmatpush1.msra.mxu0 0.0
        %2509 = vmatprep.subr.mxu0 0.0
        %2510 = vmatpush1.msra.mxu0 0.0
        %2511 = vmatprep.subr.mxu0 0.0
        %2512 = vmatpush1.msra.mxu0 0.0
        %2513 = vmatprep.subr.mxu0 0.0
        %2514 = vmatpush1.msra.mxu0 0.0
        %2515 = vmatprep.subr.mxu0 0.0
        %2516 = vmatpush1.msra.mxu0 0.0
        %2517 = vmatprep.subr.mxu0 0.0
        %2518 = vmatpush1.msra.mxu0 0.0
        %2519 = vmatprep.subr.mxu0 0.0
        %2520 = vmatpush1.msra.mxu0 0.0
        %2521 = vmatprep.subr.mxu0 0.0
        %2522 = vmatpush1.msra.mxu0 0.0
        %2523 = vmatprep.subr.mxu0 0.0
        %2524 = vmatpush1.msra.mxu0 0.0
        %2525 = vmatprep.subr.mxu0 0.0
        %v2526 = vand.u32 %v2496, 4294901760
        %2527 = vmatpush1.msra.mxu0 %v2526
        %2528 = vmatprep.subr.mxu0 0.0
        %v2529 = vand.u32 %v2495, 4294901760
        %2530 = vmatpush1.msra.mxu0 %v2529
        %2531 = vmatprep.subr.mxu0 0.0
        %2532 = vmatpush2.msra.mxu0 0.0
        %2533 = vmatprep.subr.mxu0 0.0
        %2534 = vmatpush2.msra.mxu0 0.0
        %2535 = vmatprep.subr.mxu0 0.0
        %2536 = vmatpush2.msra.mxu0 0.0
        %2537 = vmatprep.subr.mxu0 0.0
        %2538 = vmatpush2.msra.mxu0 0.0
        %2539 = vmatprep.subr.mxu0 0.0
        %2540 = vmatpush2.msra.mxu0 0.0
        %2541 = vmatprep.subr.mxu0 0.0
        %2542 = vmatpush2.msra.mxu0 0.0
        %2543 = vmatprep.subr.mxu0 0.0
        %2544 = vmatpush2.msra.mxu0 0.0
        %2545 = vmatprep.subr.mxu0 0.0
        %2546 = vmatpush2.msra.mxu0 0.0
        %2547 = vmatprep.subr.mxu0 0.0
        %2548 = vmatpush2.msra.mxu0 0.0
        %2549 = vmatprep.subr.mxu0 0.0
        %2550 = vmatpush2.msra.mxu0 0.0
        %2551 = vmatprep.subr.mxu0 0.0
        %2552 = vmatpush2.msra.mxu0 0.0
        %2553 = vmatprep.subr.mxu0 0.0
        %2554 = vmatpush2.msra.mxu0 0.0
        %2555 = vmatprep.subr.mxu0 0.0
        %2556 = vmatpush2.msra.mxu0 0.0
        %2557 = vmatprep.subr.mxu0 0.0
        %2558 = vmatpush2.msra.mxu0 0.0
        %2559 = vmatprep.subr.mxu0 0.0
        %2560 = vmatpush2.msra.mxu0 0.0
        %2561 = vmatprep.subr.mxu0 0.0
        %2562 = vmatpush2.msra.mxu0 0.0
        %2563 = vmatprep.mubr.f32.mxu0 0.0
        %v2564 = vand.u32 %v293, 4294901760
        %v2565 = vsub.f32 %v293, %v2564
        %v2566 = vand.u32 %v2565, 4294901760
        %v2567 = vsub.f32 %v2565, %v2566
        %v2568 = vand.u32 %v2567, 4294901760
        %2569 = vmatmul.mubr.f32.gmra.mxu0 %v2568
        %v2570 = vpop.f32.mrf.mxu0
        %v2571 = vadd.f32 0.0, %v2570
        %v2572 = vpop.f32.mrf.mxu0
        %2573 = vdwg.mxu0
        %2574 = vmatprep.subr.mxu0 0.0
        %2575 = vmatpush1.msra.mxu0 0.0
        %2576 = vmatprep.subr.mxu0 0.0
        %2577 = vmatpush1.msra.mxu0 0.0
        %2578 = vmatprep.subr.mxu0 0.0
        %2579 = vmatpush1.msra.mxu0 0.0
        %2580 = vmatprep.subr.mxu0 0.0
        %2581 = vmatpush1.msra.mxu0 0.0
        %2582 = vmatprep.subr.mxu0 0.0
        %2583 = vmatpush1.msra.mxu0 0.0
        %2584 = vmatprep.subr.mxu0 0.0
        %2585 = vmatpush1.msra.mxu0 0.0
        %2586 = vmatprep.subr.mxu0 0.0
        %2587 = vmatpush1.msra.mxu0 0.0
        %2588 = vmatprep.subr.mxu0 0.0
        %2589 = vmatpush1.msra.mxu0 0.0
        %2590 = vmatprep.subr.mxu0 0.0
        %2591 = vmatpush1.msra.mxu0 0.0
        %2592 = vmatprep.subr.mxu0 0.0
        %2593 = vmatpush1.msra.mxu0 0.0
        %2594 = vmatprep.subr.mxu0 0.0
        %2595 = vmatpush1.msra.mxu0 0.0
        %2596 = vmatprep.subr.mxu0 0.0
        %2597 = vmatpush1.msra.mxu0 0.0
        %2598 = vmatprep.subr.mxu0 0.0
        %2599 = vmatpush1.msra.mxu0 0.0
        %2600 = vmatprep.subr.mxu0 0.0
        %2601 = vmatpush1.msra.mxu0 0.0
        %2602 = vmatprep.subr.mxu0 0.0
        %v2603 = vand.u32 %v2496, 4294901760
        %v2604 = vsub.f32 %v2496, %v2603
        %v2605 = vand.u32 %v2604, 4294901760
        %v2606 = vsub.f32 %v2604, %v2605
        %v2607 = vand.u32 %v2606, 4294901760
        %2608 = vmatpush1.msra.mxu0 %v2607
        %2609 = vmatprep.subr.mxu0 0.0
        %v2610 = vand.u32 %v2495, 4294901760
        %v2611 = vsub.f32 %v2495, %v2610
        %v2612 = vand.u32 %v2611, 4294901760
        %v2613 = vsub.f32 %v2611, %v2612
        %v2614 = vand.u32 %v2613, 4294901760
        %2615 = vmatpush1.msra.mxu0 %v2614
        %2616 = vmatprep.subr.mxu0 0.0
        %2617 = vmatpush2.msra.mxu0 0.0
        %2618 = vmatprep.subr.mxu0 0.0
        %2619 = vmatpush2.msra.mxu0 0.0
        %2620 = vmatprep.subr.mxu0 0.0
        %2621 = vmatpush2.msra.mxu0 0.0
        %2622 = vmatprep.subr.mxu0 0.0
        %2623 = vmatpush2.msra.mxu0 0.0
        %2624 = vmatprep.subr.mxu0 0.0
        %2625 = vmatpush2.msra.mxu0 0.0
        %2626 = vmatprep.subr.mxu0 0.0
        %2627 = vmatpush2.msra.mxu0 0.0
        %2628 = vmatprep.subr.mxu0 0.0
        %2629 = vmatpush2.msra.mxu0 0.0
        %2630 = vmatprep.subr.mxu0 0.0
        %2631 = vmatpush2.msra.mxu0 0.0
        %2632 = vmatprep.subr.mxu0 0.0
        %2633 = vmatpush2.msra.mxu0 0.0
        %2634 = vmatprep.subr.mxu0 0.0
        %2635 = vmatpush2.msra.mxu0 0.0
        %2636 = vmatprep.subr.mxu0 0.0
        %2637 = vmatpush2.msra.mxu0 0.0
        %2638 = vmatprep.subr.mxu0 0.0
        %2639 = vmatpush2.msra.mxu0 0.0
        %2640 = vmatprep.subr.mxu0 0.0
        %2641 = vmatpush2.msra.mxu0 0.0
        %2642 = vmatprep.subr.mxu0 0.0
        %2643 = vmatpush2.msra.mxu0 0.0
        %2644 = vmatprep.subr.mxu0 0.0
        %2645 = vmatpush2.msra.mxu0 0.0
        %2646 = vmatprep.subr.mxu0 0.0
        %2647 = vmatpush2.msra.mxu0 0.0
        %2648 = vmatprep.mubr.f32.mxu0 0.0
        %v2649 = vand.u32 %v293, 4294901760
        %2650 = vmatmul.mubr.f32.gmra.mxu0 %v2649
        %v2651 = vpop.f32.mrf.mxu0
        %v2652 = vadd.f32 %v2571, %v2651
        %v2653 = vpop.f32.mrf.mxu0
        %2654 = vdwg.mxu0
        %2655 = vmatprep.subr.mxu0 0.0
        %2656 = vmatpush1.msra.mxu0 0.0
        %2657 = vmatprep.subr.mxu0 0.0
        %2658 = vmatpush1.msra.mxu0 0.0
        %2659 = vmatprep.subr.mxu0 0.0
        %2660 = vmatpush1.msra.mxu0 0.0
        %2661 = vmatprep.subr.mxu0 0.0
        %2662 = vmatpush1.msra.mxu0 0.0
        %2663 = vmatprep.subr.mxu0 0.0
        %2664 = vmatpush1.msra.mxu0 0.0
        %2665 = vmatprep.subr.mxu0 0.0
        %2666 = vmatpush1.msra.mxu0 0.0
        %2667 = vmatprep.subr.mxu0 0.0
        %2668 = vmatpush1.msra.mxu0 0.0
        %2669 = vmatprep.subr.mxu0 0.0
        %2670 = vmatpush1.msra.mxu0 0.0
        %2671 = vmatprep.subr.mxu0 0.0
        %2672 = vmatpush1.msra.mxu0 0.0
        %2673 = vmatprep.subr.mxu0 0.0
        %2674 = vmatpush1.msra.mxu0 0.0
        %2675 = vmatprep.subr.mxu0 0.0
        %2676 = vmatpush1.msra.mxu0 0.0
        %2677 = vmatprep.subr.mxu0 0.0
        %2678 = vmatpush1.msra.mxu0 0.0
        %2679 = vmatprep.subr.mxu0 0.0
        %2680 = vmatpush1.msra.mxu0 0.0
        %2681 = vmatprep.subr.mxu0 0.0
        %2682 = vmatpush1.msra.mxu0 0.0
        %2683 = vmatprep.subr.mxu0 0.0
        %v2684 = vand.u32 %v2496, 4294901760
        %v2685 = vsub.f32 %v2496, %v2684
        %2686 = vmatpush1.msra.mxu0 %v2685
        %2687 = vmatprep.subr.mxu0 0.0
        %v2688 = vand.u32 %v2495, 4294901760
        %v2689 = vsub.f32 %v2495, %v2688
        %2690 = vmatpush1.msra.mxu0 %v2689
        %2691 = vmatprep.subr.mxu0 0.0
        %2692 = vmatpush2.msra.mxu0 0.0
        %2693 = vmatprep.subr.mxu0 0.0
        %2694 = vmatpush2.msra.mxu0 0.0
        %2695 = vmatprep.subr.mxu0 0.0
        %2696 = vmatpush2.msra.mxu0 0.0
        %2697 = vmatprep.subr.mxu0 0.0
        %2698 = vmatpush2.msra.mxu0 0.0
        %2699 = vmatprep.subr.mxu0 0.0
        %2700 = vmatpush2.msra.mxu0 0.0
        %2701 = vmatprep.subr.mxu0 0.0
        %2702 = vmatpush2.msra.mxu0 0.0
        %2703 = vmatprep.subr.mxu0 0.0
        %2704 = vmatpush2.msra.mxu0 0.0
        %2705 = vmatprep.subr.mxu0 0.0
        %2706 = vmatpush2.msra.mxu0 0.0
        %2707 = vmatprep.subr.mxu0 0.0
        %2708 = vmatpush2.msra.mxu0 0.0
        %2709 = vmatprep.subr.mxu0 0.0
        %2710 = vmatpush2.msra.mxu0 0.0
        %2711 = vmatprep.subr.mxu0 0.0
        %2712 = vmatpush2.msra.mxu0 0.0
        %2713 = vmatprep.subr.mxu0 0.0
        %2714 = vmatpush2.msra.mxu0 0.0
        %2715 = vmatprep.subr.mxu0 0.0
        %2716 = vmatpush2.msra.mxu0 0.0
        %2717 = vmatprep.subr.mxu0 0.0
        %2718 = vmatpush2.msra.mxu0 0.0
        %2719 = vmatprep.subr.mxu0 0.0
        %2720 = vmatpush2.msra.mxu0 0.0
        %2721 = vmatprep.subr.mxu0 0.0
        %2722 = vmatpush2.msra.mxu0 0.0
        %2723 = vmatprep.mubr.f32.mxu0 0.0
        %v2724 = vand.u32 %v293, 4294901760
        %v2725 = vsub.f32 %v293, %v2724
        %2726 = vmatmul.mubr.f32.gmra.mxu0 %v2725
        %v2727 = vpop.f32.mrf.mxu0
        %v2728 = vadd.f32 %v2652, %v2727
        %v2729 = vpop.f32.mrf.mxu0
        %2730 = vdwg.mxu0
        %2731 = vmatprep.subr.mxu0 0.0
        %2732 = vmatpush1.msra.mxu0 0.0
        %2733 = vmatprep.subr.mxu0 0.0
        %2734 = vmatpush1.msra.mxu0 0.0
        %2735 = vmatprep.subr.mxu0 0.0
        %2736 = vmatpush1.msra.mxu0 0.0
        %2737 = vmatprep.subr.mxu0 0.0
        %2738 = vmatpush1.msra.mxu0 0.0
        %2739 = vmatprep.subr.mxu0 0.0
        %2740 = vmatpush1.msra.mxu0 0.0
        %2741 = vmatprep.subr.mxu0 0.0
        %2742 = vmatpush1.msra.mxu0 0.0
        %2743 = vmatprep.subr.mxu0 0.0
        %2744 = vmatpush1.msra.mxu0 0.0
        %2745 = vmatprep.subr.mxu0 0.0
        %2746 = vmatpush1.msra.mxu0 0.0
        %2747 = vmatprep.subr.mxu0 0.0
        %2748 = vmatpush1.msra.mxu0 0.0
        %2749 = vmatprep.subr.mxu0 0.0
        %2750 = vmatpush1.msra.mxu0 0.0
        %2751 = vmatprep.subr.mxu0 0.0
        %2752 = vmatpush1.msra.mxu0 0.0
        %2753 = vmatprep.subr.mxu0 0.0
        %2754 = vmatpush1.msra.mxu0 0.0
        %2755 = vmatprep.subr.mxu0 0.0
        %2756 = vmatpush1.msra.mxu0 0.0
        %2757 = vmatprep.subr.mxu0 0.0
        %2758 = vmatpush1.msra.mxu0 0.0
        %2759 = vmatprep.subr.mxu0 0.0
        %v2760 = vand.u32 %v2496, 4294901760
        %2761 = vmatpush1.msra.mxu0 %v2760
        %2762 = vmatprep.subr.mxu0 0.0
        %v2763 = vand.u32 %v2495, 4294901760
        %2764 = vmatpush1.msra.mxu0 %v2763
        %2765 = vmatprep.subr.mxu0 0.0
        %2766 = vmatpush2.msra.mxu0 0.0
        %2767 = vmatprep.subr.mxu0 0.0
        %2768 = vmatpush2.msra.mxu0 0.0
        %2769 = vmatprep.subr.mxu0 0.0
        %2770 = vmatpush2.msra.mxu0 0.0
        %2771 = vmatprep.subr.mxu0 0.0
        %2772 = vmatpush2.msra.mxu0 0.0
        %2773 = vmatprep.subr.mxu0 0.0
        %2774 = vmatpush2.msra.mxu0 0.0
        %2775 = vmatprep.subr.mxu0 0.0
        %2776 = vmatpush2.msra.mxu0 0.0
        %2777 = vmatprep.subr.mxu0 0.0
        %2778 = vmatpush2.msra.mxu0 0.0
        %2779 = vmatprep.subr.mxu0 0.0
        %2780 = vmatpush2.msra.mxu0 0.0
        %2781 = vmatprep.subr.mxu0 0.0
        %2782 = vmatpush2.msra.mxu0 0.0
        %2783 = vmatprep.subr.mxu0 0.0
        %2784 = vmatpush2.msra.mxu0 0.0
        %2785 = vmatprep.subr.mxu0 0.0
        %2786 = vmatpush2.msra.mxu0 0.0
        %2787 = vmatprep.subr.mxu0 0.0
        %2788 = vmatpush2.msra.mxu0 0.0
        %2789 = vmatprep.subr.mxu0 0.0
        %2790 = vmatpush2.msra.mxu0 0.0
        %2791 = vmatprep.subr.mxu0 0.0
        %2792 = vmatpush2.msra.mxu0 0.0
        %2793 = vmatprep.subr.mxu0 0.0
        %2794 = vmatpush2.msra.mxu0 0.0
        %2795 = vmatprep.subr.mxu0 0.0
        %2796 = vmatpush2.msra.mxu0 0.0
        %2797 = vmatprep.mubr.f32.mxu0 0.0
        %v2798 = vand.u32 %v293, 4294901760
        %v2799 = vsub.f32 %v293, %v2798
        %v2800 = vand.u32 %v2799, 4294901760
        %2801 = vmatmul.mubr.f32.gmra.mxu0 %v2800
        %v2802 = vpop.f32.mrf.mxu0
        %v2803 = vadd.f32 %v2728, %v2802
        %v2804 = vpop.f32.mrf.mxu0
        %2805 = vdwg.mxu0
        %2806 = vmatprep.subr.mxu0 0.0
        %2807 = vmatpush1.msra.mxu0 0.0
        %2808 = vmatprep.subr.mxu0 0.0
        %2809 = vmatpush1.msra.mxu0 0.0
        %2810 = vmatprep.subr.mxu0 0.0
        %2811 = vmatpush1.msra.mxu0 0.0
        %2812 = vmatprep.subr.mxu0 0.0
        %2813 = vmatpush1.msra.mxu0 0.0
        %2814 = vmatprep.subr.mxu0 0.0
        %2815 = vmatpush1.msra.mxu0 0.0
        %2816 = vmatprep.subr.mxu0 0.0
        %2817 = vmatpush1.msra.mxu0 0.0
        %2818 = vmatprep.subr.mxu0 0.0
        %2819 = vmatpush1.msra.mxu0 0.0
        %2820 = vmatprep.subr.mxu0 0.0
        %2821 = vmatpush1.msra.mxu0 0.0
        %2822 = vmatprep.subr.mxu0 0.0
        %2823 = vmatpush1.msra.mxu0 0.0
        %2824 = vmatprep.subr.mxu0 0.0
        %2825 = vmatpush1.msra.mxu0 0.0
        %2826 = vmatprep.subr.mxu0 0.0
        %2827 = vmatpush1.msra.mxu0 0.0
        %2828 = vmatprep.subr.mxu0 0.0
        %2829 = vmatpush1.msra.mxu0 0.0
        %2830 = vmatprep.subr.mxu0 0.0
        %2831 = vmatpush1.msra.mxu0 0.0
        %2832 = vmatprep.subr.mxu0 0.0
        %2833 = vmatpush1.msra.mxu0 0.0
        %2834 = vmatprep.subr.mxu0 0.0
        %v2835 = vand.u32 %v2496, 4294901760
        %v2836 = vsub.f32 %v2496, %v2835
        %v2837 = vand.u32 %v2836, 4294901760
        %2838 = vmatpush1.msra.mxu0 %v2837
        %2839 = vmatprep.subr.mxu0 0.0
        %v2840 = vand.u32 %v2495, 4294901760
        %v2841 = vsub.f32 %v2495, %v2840
        %v2842 = vand.u32 %v2841, 4294901760
        %2843 = vmatpush1.msra.mxu0 %v2842
        %2844 = vmatprep.subr.mxu0 0.0
        %2845 = vmatpush2.msra.mxu0 0.0
        %2846 = vmatprep.subr.mxu0 0.0
        %2847 = vmatpush2.msra.mxu0 0.0
        %2848 = vmatprep.subr.mxu0 0.0
        %2849 = vmatpush2.msra.mxu0 0.0
        %2850 = vmatprep.subr.mxu0 0.0
        %2851 = vmatpush2.msra.mxu0 0.0
        %2852 = vmatprep.subr.mxu0 0.0
        %2853 = vmatpush2.msra.mxu0 0.0
        %2854 = vmatprep.subr.mxu0 0.0
        %2855 = vmatpush2.msra.mxu0 0.0
        %2856 = vmatprep.subr.mxu0 0.0
        %2857 = vmatpush2.msra.mxu0 0.0
        %2858 = vmatprep.subr.mxu0 0.0
        %2859 = vmatpush2.msra.mxu0 0.0
        %2860 = vmatprep.subr.mxu0 0.0
        %2861 = vmatpush2.msra.mxu0 0.0
        %2862 = vmatprep.subr.mxu0 0.0
        %2863 = vmatpush2.msra.mxu0 0.0
        %2864 = vmatprep.subr.mxu0 0.0
        %2865 = vmatpush2.msra.mxu0 0.0
        %2866 = vmatprep.subr.mxu0 0.0
        %2867 = vmatpush2.msra.mxu0 0.0
        %2868 = vmatprep.subr.mxu0 0.0
        %2869 = vmatpush2.msra.mxu0 0.0
        %2870 = vmatprep.subr.mxu0 0.0
        %2871 = vmatpush2.msra.mxu0 0.0
        %2872 = vmatprep.subr.mxu0 0.0
        %2873 = vmatpush2.msra.mxu0 0.0
        %2874 = vmatprep.subr.mxu0 0.0
        %2875 = vmatpush2.msra.mxu0 0.0
        %2876 = vmatprep.mubr.f32.mxu0 0.0
        %v2877 = vand.u32 %v293, 4294901760
        %2878 = vmatmul.mubr.f32.gmra.mxu0 %v2877
        %v2879 = vpop.f32.mrf.mxu0
        %v2880 = vadd.f32 %v2803, %v2879
        %v2881 = vpop.f32.mrf.mxu0
        %2882 = vdwg.mxu0
        %2883 = vmatprep.subr.mxu0 0.0
        %2884 = vmatpush1.msra.mxu0 0.0
        %2885 = vmatprep.subr.mxu0 0.0
        %2886 = vmatpush1.msra.mxu0 0.0
        %2887 = vmatprep.subr.mxu0 0.0
        %2888 = vmatpush1.msra.mxu0 0.0
        %2889 = vmatprep.subr.mxu0 0.0
        %2890 = vmatpush1.msra.mxu0 0.0
        %2891 = vmatprep.subr.mxu0 0.0
        %2892 = vmatpush1.msra.mxu0 0.0
        %2893 = vmatprep.subr.mxu0 0.0
        %2894 = vmatpush1.msra.mxu0 0.0
        %2895 = vmatprep.subr.mxu0 0.0
        %2896 = vmatpush1.msra.mxu0 0.0
        %2897 = vmatprep.subr.mxu0 0.0
        %2898 = vmatpush1.msra.mxu0 0.0
        %2899 = vmatprep.subr.mxu0 0.0
        %2900 = vmatpush1.msra.mxu0 0.0
        %2901 = vmatprep.subr.mxu0 0.0
        %2902 = vmatpush1.msra.mxu0 0.0
        %2903 = vmatprep.subr.mxu0 0.0
        %2904 = vmatpush1.msra.mxu0 0.0
        %2905 = vmatprep.subr.mxu0 0.0
        %2906 = vmatpush1.msra.mxu0 0.0
        %2907 = vmatprep.subr.mxu0 0.0
        %2908 = vmatpush1.msra.mxu0 0.0
        %2909 = vmatprep.subr.mxu0 0.0
        %2910 = vmatpush1.msra.mxu0 0.0
        %2911 = vmatprep.subr.mxu0 0.0
        %v2912 = vand.u32 %v2496, 4294901760
        %2913 = vmatpush1.msra.mxu0 %v2912
        %2914 = vmatprep.subr.mxu0 0.0
        %v2915 = vand.u32 %v2495, 4294901760
        %2916 = vmatpush1.msra.mxu0 %v2915
        %2917 = vmatprep.subr.mxu0 0.0
        %2918 = vmatpush2.msra.mxu0 0.0
        %2919 = vmatprep.subr.mxu0 0.0
        %2920 = vmatpush2.msra.mxu0 0.0
        %2921 = vmatprep.subr.mxu0 0.0
        %2922 = vmatpush2.msra.mxu0 0.0
        %2923 = vmatprep.subr.mxu0 0.0
        %2924 = vmatpush2.msra.mxu0 0.0
        %2925 = vmatprep.subr.mxu0 0.0
        %2926 = vmatpush2.msra.mxu0 0.0
        %2927 = vmatprep.subr.mxu0 0.0
        %2928 = vmatpush2.msra.mxu0 0.0
        %2929 = vmatprep.subr.mxu0 0.0
        %2930 = vmatpush2.msra.mxu0 0.0
        %2931 = vmatprep.subr.mxu0 0.0
        %2932 = vmatpush2.msra.mxu0 0.0
        %2933 = vmatprep.subr.mxu0 0.0
        %2934 = vmatpush2.msra.mxu0 0.0
        %2935 = vmatprep.subr.mxu0 0.0
        %2936 = vmatpush2.msra.mxu0 0.0
        %2937 = vmatprep.subr.mxu0 0.0
        %2938 = vmatpush2.msra.mxu0 0.0
        %2939 = vmatprep.subr.mxu0 0.0
        %2940 = vmatpush2.msra.mxu0 0.0
        %2941 = vmatprep.subr.mxu0 0.0
        %2942 = vmatpush2.msra.mxu0 0.0
        %2943 = vmatprep.subr.mxu0 0.0
        %2944 = vmatpush2.msra.mxu0 0.0
        %2945 = vmatprep.subr.mxu0 0.0
        %2946 = vmatpush2.msra.mxu0 0.0
        %2947 = vmatprep.subr.mxu0 0.0
        %2948 = vmatpush2.msra.mxu0 0.0
        %2949 = vmatprep.mubr.f32.mxu0 0.0
        %v2950 = vand.u32 %v293, 4294901760
        %2951 = vmatmul.mubr.f32.gmra.mxu0 %v2950
        %v2952 = vpop.f32.mrf.mxu0
        %v2953 = vadd.f32 %v2880, %v2952
        %v2954 = vpop.f32.mrf.mxu0
        %2955 = vdwg.mxu0
        %2956 = vmatprep.subr.mxu0 0.0
        %v2957 = vand.u32 %v250, 4294901760
        %2958 = vmatpush1.msra.mxu0 %v2957
        %2959 = vmatprep.subr.mxu0 0.0
        %v2960 = vand.u32 %v249, 4294901760
        %2961 = vmatpush1.msra.mxu0 %v2960
        %2962 = vmatprep.subr.mxu0 0.0
        %v2963 = vand.u32 %v248, 4294901760
        %2964 = vmatpush1.msra.mxu0 %v2963
        %2965 = vmatprep.subr.mxu0 0.0
        %v2966 = vand.u32 %v247, 4294901760
        %2967 = vmatpush1.msra.mxu0 %v2966
        %2968 = vmatprep.subr.mxu0 0.0
        %v2969 = vand.u32 %v246, 4294901760
        %2970 = vmatpush1.msra.mxu0 %v2969
        %2971 = vmatprep.subr.mxu0 0.0
        %v2972 = vand.u32 %v245, 4294901760
        %2973 = vmatpush1.msra.mxu0 %v2972
        %2974 = vmatprep.subr.mxu0 0.0
        %v2975 = vand.u32 %v244, 4294901760
        %2976 = vmatpush1.msra.mxu0 %v2975
        %2977 = vmatprep.subr.mxu0 0.0
        %v2978 = vand.u32 %v243, 4294901760
        %2979 = vmatpush1.msra.mxu0 %v2978
        %2980 = vmatprep.subr.mxu0 0.0
        %v2981 = vand.u32 %v242, 4294901760
        %2982 = vmatpush1.msra.mxu0 %v2981
        %2983 = vmatprep.subr.mxu0 0.0
        %v2984 = vand.u32 %v241, 4294901760
        %2985 = vmatpush1.msra.mxu0 %v2984
        %2986 = vmatprep.subr.mxu0 0.0
        %v2987 = vand.u32 %v240, 4294901760
        %2988 = vmatpush1.msra.mxu0 %v2987
        %2989 = vmatprep.subr.mxu0 0.0
        %v2990 = vand.u32 %v239, 4294901760
        %2991 = vmatpush1.msra.mxu0 %v2990
        %2992 = vmatprep.subr.mxu0 0.0
        %v2993 = vand.u32 %v238, 4294901760
        %2994 = vmatpush1.msra.mxu0 %v2993
        %2995 = vmatprep.subr.mxu0 0.0
        %v2996 = vand.u32 %v237, 4294901760
        %2997 = vmatpush1.msra.mxu0 %v2996
        %2998 = vmatprep.subr.mxu0 0.0
        %v2999 = vand.u32 %v236, 4294901760
        %3000 = vmatpush1.msra.mxu0 %v2999
        %3001 = vmatprep.subr.mxu0 0.0
        %v3002 = vand.u32 %v235, 4294901760
        %3003 = vmatpush1.msra.mxu0 %v3002
        %3004 = vmatprep.subr.mxu0 0.0
        %3005 = vmatpush2.msra.mxu0 0.0
        %3006 = vmatprep.subr.mxu0 0.0
        %3007 = vmatpush2.msra.mxu0 0.0
        %3008 = vmatprep.subr.mxu0 0.0
        %3009 = vmatpush2.msra.mxu0 0.0
        %3010 = vmatprep.subr.mxu0 0.0
        %3011 = vmatpush2.msra.mxu0 0.0
        %3012 = vmatprep.subr.mxu0 0.0
        %3013 = vmatpush2.msra.mxu0 0.0
        %3014 = vmatprep.subr.mxu0 0.0
        %3015 = vmatpush2.msra.mxu0 0.0
        %3016 = vmatprep.subr.mxu0 0.0
        %3017 = vmatpush2.msra.mxu0 0.0
        %3018 = vmatprep.subr.mxu0 0.0
        %3019 = vmatpush2.msra.mxu0 0.0
        %3020 = vmatprep.subr.mxu0 0.0
        %3021 = vmatpush2.msra.mxu0 0.0
        %3022 = vmatprep.subr.mxu0 0.0
        %3023 = vmatpush2.msra.mxu0 0.0
        %3024 = vmatprep.subr.mxu0 0.0
        %3025 = vmatpush2.msra.mxu0 0.0
        %3026 = vmatprep.subr.mxu0 0.0
        %3027 = vmatpush2.msra.mxu0 0.0
        %3028 = vmatprep.subr.mxu0 0.0
        %3029 = vmatpush2.msra.mxu0 0.0
        %3030 = vmatprep.subr.mxu0 0.0
        %3031 = vmatpush2.msra.mxu0 0.0
        %3032 = vmatprep.subr.mxu0 0.0
        %3033 = vmatpush2.msra.mxu0 0.0
        %3034 = vmatprep.subr.mxu0 0.0
        %3035 = vmatpush2.msra.mxu0 0.0
        %3036 = vmatprep.mubr.f32.mxu0 0.0
        %v3037 = vand.u32 %v2953, 4294901760
        %v3038 = vsub.f32 %v2953, %v3037
        %v3039 = vand.u32 %v3038, 4294901760
        %v3040 = vsub.f32 %v3038, %v3039
        %v3041 = vand.u32 %v3040, 4294901760
        %3042 = vmatmul.mubr.f32.gmra.mxu0 %v3041
        %v3043 = vpop.f32.mrf.mxu0
        %v3044 = vadd.f32 0.0, %v3043
        %v3045 = vpop.f32.mrf.mxu0
        %3046 = vdwg.mxu0
        %3047 = vmatprep.subr.mxu0 0.0
        %v3048 = vand.u32 %v250, 4294901760
        %v3049 = vsub.f32 %v250, %v3048
        %v3050 = vand.u32 %v3049, 4294901760
        %v3051 = vsub.f32 %v3049, %v3050
        %v3052 = vand.u32 %v3051, 4294901760
        %3053 = vmatpush1.msra.mxu0 %v3052
        %3054 = vmatprep.subr.mxu0 0.0
        %v3055 = vand.u32 %v249, 4294901760
        %v3056 = vsub.f32 %v249, %v3055
        %v3057 = vand.u32 %v3056, 4294901760
        %v3058 = vsub.f32 %v3056, %v3057
        %v3059 = vand.u32 %v3058, 4294901760
        %3060 = vmatpush1.msra.mxu0 %v3059
        %3061 = vmatprep.subr.mxu0 0.0
        %v3062 = vand.u32 %v248, 4294901760
        %v3063 = vsub.f32 %v248, %v3062
        %v3064 = vand.u32 %v3063, 4294901760
        %v3065 = vsub.f32 %v3063, %v3064
        %v3066 = vand.u32 %v3065, 4294901760
        %3067 = vmatpush1.msra.mxu0 %v3066
        %3068 = vmatprep.subr.mxu0 0.0
        %v3069 = vand.u32 %v247, 4294901760
        %v3070 = vsub.f32 %v247, %v3069
        %v3071 = vand.u32 %v3070, 4294901760
        %v3072 = vsub.f32 %v3070, %v3071
        %v3073 = vand.u32 %v3072, 4294901760
        %3074 = vmatpush1.msra.mxu0 %v3073
        %3075 = vmatprep.subr.mxu0 0.0
        %v3076 = vand.u32 %v246, 4294901760
        %v3077 = vsub.f32 %v246, %v3076
        %v3078 = vand.u32 %v3077, 4294901760
        %v3079 = vsub.f32 %v3077, %v3078
        %v3080 = vand.u32 %v3079, 4294901760
        %3081 = vmatpush1.msra.mxu0 %v3080
        %3082 = vmatprep.subr.mxu0 0.0
        %v3083 = vand.u32 %v245, 4294901760
        %v3084 = vsub.f32 %v245, %v3083
        %v3085 = vand.u32 %v3084, 4294901760
        %v3086 = vsub.f32 %v3084, %v3085
        %v3087 = vand.u32 %v3086, 4294901760
        %3088 = vmatpush1.msra.mxu0 %v3087
        %3089 = vmatprep.subr.mxu0 0.0
        %v3090 = vand.u32 %v244, 4294901760
        %v3091 = vsub.f32 %v244, %v3090
        %v3092 = vand.u32 %v3091, 4294901760
        %v3093 = vsub.f32 %v3091, %v3092
        %v3094 = vand.u32 %v3093, 4294901760
        %3095 = vmatpush1.msra.mxu0 %v3094
        %3096 = vmatprep.subr.mxu0 0.0
        %v3097 = vand.u32 %v243, 4294901760
        %v3098 = vsub.f32 %v243, %v3097
        %v3099 = vand.u32 %v3098, 4294901760
        %v3100 = vsub.f32 %v3098, %v3099
        %v3101 = vand.u32 %v3100, 4294901760
        %3102 = vmatpush1.msra.mxu0 %v3101
        %3103 = vmatprep.subr.mxu0 0.0
        %v3104 = vand.u32 %v242, 4294901760
        %v3105 = vsub.f32 %v242, %v3104
        %v3106 = vand.u32 %v3105, 4294901760
        %v3107 = vsub.f32 %v3105, %v3106
        %v3108 = vand.u32 %v3107, 4294901760
        %3109 = vmatpush1.msra.mxu0 %v3108
        %3110 = vmatprep.subr.mxu0 0.0
        %v3111 = vand.u32 %v241, 4294901760
        %v3112 = vsub.f32 %v241, %v3111
        %v3113 = vand.u32 %v3112, 4294901760
        %v3114 = vsub.f32 %v3112, %v3113
        %v3115 = vand.u32 %v3114, 4294901760
        %3116 = vmatpush1.msra.mxu0 %v3115
        %3117 = vmatprep.subr.mxu0 0.0
        %v3118 = vand.u32 %v240, 4294901760
        %v3119 = vsub.f32 %v240, %v3118
        %v3120 = vand.u32 %v3119, 4294901760
        %v3121 = vsub.f32 %v3119, %v3120
        %v3122 = vand.u32 %v3121, 4294901760
        %3123 = vmatpush1.msra.mxu0 %v3122
        %3124 = vmatprep.subr.mxu0 0.0
        %v3125 = vand.u32 %v239, 4294901760
        %v3126 = vsub.f32 %v239, %v3125
        %v3127 = vand.u32 %v3126, 4294901760
        %v3128 = vsub.f32 %v3126, %v3127
        %v3129 = vand.u32 %v3128, 4294901760
        %3130 = vmatpush1.msra.mxu0 %v3129
        %3131 = vmatprep.subr.mxu0 0.0
        %v3132 = vand.u32 %v238, 4294901760
        %v3133 = vsub.f32 %v238, %v3132
        %v3134 = vand.u32 %v3133, 4294901760
        %v3135 = vsub.f32 %v3133, %v3134
        %v3136 = vand.u32 %v3135, 4294901760
        %3137 = vmatpush1.msra.mxu0 %v3136
        %3138 = vmatprep.subr.mxu0 0.0
        %v3139 = vand.u32 %v237, 4294901760
        %v3140 = vsub.f32 %v237, %v3139
        %v3141 = vand.u32 %v3140, 4294901760
        %v3142 = vsub.f32 %v3140, %v3141
        %v3143 = vand.u32 %v3142, 4294901760
        %3144 = vmatpush1.msra.mxu0 %v3143
        %3145 = vmatprep.subr.mxu0 0.0
        %v3146 = vand.u32 %v236, 4294901760
        %v3147 = vsub.f32 %v236, %v3146
        %v3148 = vand.u32 %v3147, 4294901760
        %v3149 = vsub.f32 %v3147, %v3148
        %v3150 = vand.u32 %v3149, 4294901760
        %3151 = vmatpush1.msra.mxu0 %v3150
        %3152 = vmatprep.subr.mxu0 0.0
        %v3153 = vand.u32 %v235, 4294901760
        %v3154 = vsub.f32 %v235, %v3153
        %v3155 = vand.u32 %v3154, 4294901760
        %v3156 = vsub.f32 %v3154, %v3155
        %v3157 = vand.u32 %v3156, 4294901760
        %3158 = vmatpush1.msra.mxu0 %v3157
        %3159 = vmatprep.subr.mxu0 0.0
        %3160 = vmatpush2.msra.mxu0 0.0
        %3161 = vmatprep.subr.mxu0 0.0
        %3162 = vmatpush2.msra.mxu0 0.0
        %3163 = vmatprep.subr.mxu0 0.0
        %3164 = vmatpush2.msra.mxu0 0.0
        %3165 = vmatprep.subr.mxu0 0.0
        %3166 = vmatpush2.msra.mxu0 0.0
        %3167 = vmatprep.subr.mxu0 0.0
        %3168 = vmatpush2.msra.mxu0 0.0
        %3169 = vmatprep.subr.mxu0 0.0
        %3170 = vmatpush2.msra.mxu0 0.0
        %3171 = vmatprep.subr.mxu0 0.0
        %3172 = vmatpush2.msra.mxu0 0.0
        %3173 = vmatprep.subr.mxu0 0.0
        %3174 = vmatpush2.msra.mxu0 0.0
        %3175 = vmatprep.subr.mxu0 0.0
        %3176 = vmatpush2.msra.mxu0 0.0
        %3177 = vmatprep.subr.mxu0 0.0
        %3178 = vmatpush2.msra.mxu0 0.0
        %3179 = vmatprep.subr.mxu0 0.0
        %3180 = vmatpush2.msra.mxu0 0.0
        %3181 = vmatprep.subr.mxu0 0.0
        %3182 = vmatpush2.msra.mxu0 0.0
        %3183 = vmatprep.subr.mxu0 0.0
        %3184 = vmatpush2.msra.mxu0 0.0
        %3185 = vmatprep.subr.mxu0 0.0
        %3186 = vmatpush2.msra.mxu0 0.0
        %3187 = vmatprep.subr.mxu0 0.0
        %3188 = vmatpush2.msra.mxu0 0.0
        %3189 = vmatprep.subr.mxu0 0.0
        %3190 = vmatpush2.msra.mxu0 0.0
        %3191 = vmatprep.mubr.f32.mxu0 0.0
        %v3192 = vand.u32 %v2953, 4294901760
        %3193 = vmatmul.mubr.f32.gmra.mxu0 %v3192
        %v3194 = vpop.f32.mrf.mxu0
        %v3195 = vadd.f32 %v3044, %v3194
        %v3196 = vpop.f32.mrf.mxu0
        %3197 = vdwg.mxu0
        %3198 = vmatprep.subr.mxu0 0.0
        %v3199 = vand.u32 %v250, 4294901760
        %v3200 = vsub.f32 %v250, %v3199
        %3201 = vmatpush1.msra.mxu0 %v3200
        %3202 = vmatprep.subr.mxu0 0.0
        %v3203 = vand.u32 %v249, 4294901760
        %v3204 = vsub.f32 %v249, %v3203
        %3205 = vmatpush1.msra.mxu0 %v3204
        %3206 = vmatprep.subr.mxu0 0.0
        %v3207 = vand.u32 %v248, 4294901760
        %v3208 = vsub.f32 %v248, %v3207
        %3209 = vmatpush1.msra.mxu0 %v3208
        %3210 = vmatprep.subr.mxu0 0.0
        %v3211 = vand.u32 %v247, 4294901760
        %v3212 = vsub.f32 %v247, %v3211
        %3213 = vmatpush1.msra.mxu0 %v3212
        %3214 = vmatprep.subr.mxu0 0.0
        %v3215 = vand.u32 %v246, 4294901760
        %v3216 = vsub.f32 %v246, %v3215
        %3217 = vmatpush1.msra.mxu0 %v3216
        %3218 = vmatprep.subr.mxu0 0.0
        %v3219 = vand.u32 %v245, 4294901760
        %v3220 = vsub.f32 %v245, %v3219
        %3221 = vmatpush1.msra.mxu0 %v3220
        %3222 = vmatprep.subr.mxu0 0.0
        %v3223 = vand.u32 %v244, 4294901760
        %v3224 = vsub.f32 %v244, %v3223
        %3225 = vmatpush1.msra.mxu0 %v3224
        %3226 = vmatprep.subr.mxu0 0.0
        %v3227 = vand.u32 %v243, 4294901760
        %v3228 = vsub.f32 %v243, %v3227
        %3229 = vmatpush1.msra.mxu0 %v3228
        %3230 = vmatprep.subr.mxu0 0.0
        %v3231 = vand.u32 %v242, 4294901760
        %v3232 = vsub.f32 %v242, %v3231
        %3233 = vmatpush1.msra.mxu0 %v3232
        %3234 = vmatprep.subr.mxu0 0.0
        %v3235 = vand.u32 %v241, 4294901760
        %v3236 = vsub.f32 %v241, %v3235
        %3237 = vmatpush1.msra.mxu0 %v3236
        %3238 = vmatprep.subr.mxu0 0.0
        %v3239 = vand.u32 %v240, 4294901760
        %v3240 = vsub.f32 %v240, %v3239
        %3241 = vmatpush1.msra.mxu0 %v3240
        %3242 = vmatprep.subr.mxu0 0.0
        %v3243 = vand.u32 %v239, 4294901760
        %v3244 = vsub.f32 %v239, %v3243
        %3245 = vmatpush1.msra.mxu0 %v3244
        %3246 = vmatprep.subr.mxu0 0.0
        %v3247 = vand.u32 %v238, 4294901760
        %v3248 = vsub.f32 %v238, %v3247
        %3249 = vmatpush1.msra.mxu0 %v3248
        %3250 = vmatprep.subr.mxu0 0.0
        %v3251 = vand.u32 %v237, 4294901760
        %v3252 = vsub.f32 %v237, %v3251
        %3253 = vmatpush1.msra.mxu0 %v3252
        %3254 = vmatprep.subr.mxu0 0.0
        %v3255 = vand.u32 %v236, 4294901760
        %v3256 = vsub.f32 %v236, %v3255
        %3257 = vmatpush1.msra.mxu0 %v3256
        %3258 = vmatprep.subr.mxu0 0.0
        %v3259 = vand.u32 %v235, 4294901760
        %v3260 = vsub.f32 %v235, %v3259
        %3261 = vmatpush1.msra.mxu0 %v3260
        %3262 = vmatprep.subr.mxu0 0.0
        %3263 = vmatpush2.msra.mxu0 0.0
        %3264 = vmatprep.subr.mxu0 0.0
        %3265 = vmatpush2.msra.mxu0 0.0
        %3266 = vmatprep.subr.mxu0 0.0
        %3267 = vmatpush2.msra.mxu0 0.0
        %3268 = vmatprep.subr.mxu0 0.0
        %3269 = vmatpush2.msra.mxu0 0.0
        %3270 = vmatprep.subr.mxu0 0.0
        %3271 = vmatpush2.msra.mxu0 0.0
        %3272 = vmatprep.subr.mxu0 0.0
        %3273 = vmatpush2.msra.mxu0 0.0
        %3274 = vmatprep.subr.mxu0 0.0
        %3275 = vmatpush2.msra.mxu0 0.0
        %3276 = vmatprep.subr.mxu0 0.0
        %3277 = vmatpush2.msra.mxu0 0.0
        %3278 = vmatprep.subr.mxu0 0.0
        %3279 = vmatpush2.msra.mxu0 0.0
        %3280 = vmatprep.subr.mxu0 0.0
        %3281 = vmatpush2.msra.mxu0 0.0
        %3282 = vmatprep.subr.mxu0 0.0
        %3283 = vmatpush2.msra.mxu0 0.0
        %3284 = vmatprep.subr.mxu0 0.0
        %3285 = vmatpush2.msra.mxu0 0.0
        %3286 = vmatprep.subr.mxu0 0.0
        %3287 = vmatpush2.msra.mxu0 0.0
        %3288 = vmatprep.subr.mxu0 0.0
        %3289 = vmatpush2.msra.mxu0 0.0
        %3290 = vmatprep.subr.mxu0 0.0
        %3291 = vmatpush2.msra.mxu0 0.0
        %3292 = vmatprep.subr.mxu0 0.0
        %3293 = vmatpush2.msra.mxu0 0.0
        %3294 = vmatprep.mubr.f32.mxu0 0.0
        %v3295 = vand.u32 %v2953, 4294901760
        %v3296 = vsub.f32 %v2953, %v3295
        %3297 = vmatmul.mubr.f32.gmra.mxu0 %v3296
        %v3298 = vpop.f32.mrf.mxu0
        %v3299 = vadd.f32 %v3195, %v3298
        %v3300 = vpop.f32.mrf.mxu0
        %3301 = vdwg.mxu0
        %3302 = vmatprep.subr.mxu0 0.0
        %v3303 = vand.u32 %v250, 4294901760
        %3304 = vmatpush1.msra.mxu0 %v3303
        %3305 = vmatprep.subr.mxu0 0.0
        %v3306 = vand.u32 %v249, 4294901760
        %3307 = vmatpush1.msra.mxu0 %v3306
        %3308 = vmatprep.subr.mxu0 0.0
        %v3309 = vand.u32 %v248, 4294901760
        %3310 = vmatpush1.msra.mxu0 %v3309
        %3311 = vmatprep.subr.mxu0 0.0
        %v3312 = vand.u32 %v247, 4294901760
        %3313 = vmatpush1.msra.mxu0 %v3312
        %3314 = vmatprep.subr.mxu0 0.0
        %v3315 = vand.u32 %v246, 4294901760
        %3316 = vmatpush1.msra.mxu0 %v3315
        %3317 = vmatprep.subr.mxu0 0.0
        %v3318 = vand.u32 %v245, 4294901760
        %3319 = vmatpush1.msra.mxu0 %v3318
        %3320 = vmatprep.subr.mxu0 0.0
        %v3321 = vand.u32 %v244, 4294901760
        %3322 = vmatpush1.msra.mxu0 %v3321
        %3323 = vmatprep.subr.mxu0 0.0
        %v3324 = vand.u32 %v243, 4294901760
        %3325 = vmatpush1.msra.mxu0 %v3324
        %3326 = vmatprep.subr.mxu0 0.0
        %v3327 = vand.u32 %v242, 4294901760
        %3328 = vmatpush1.msra.mxu0 %v3327
        %3329 = vmatprep.subr.mxu0 0.0
        %v3330 = vand.u32 %v241, 4294901760
        %3331 = vmatpush1.msra.mxu0 %v3330
        %3332 = vmatprep.subr.mxu0 0.0
        %v3333 = vand.u32 %v240, 4294901760
        %3334 = vmatpush1.msra.mxu0 %v3333
        %3335 = vmatprep.subr.mxu0 0.0
        %v3336 = vand.u32 %v239, 4294901760
        %3337 = vmatpush1.msra.mxu0 %v3336
        %3338 = vmatprep.subr.mxu0 0.0
        %v3339 = vand.u32 %v238, 4294901760
        %3340 = vmatpush1.msra.mxu0 %v3339
        %3341 = vmatprep.subr.mxu0 0.0
        %v3342 = vand.u32 %v237, 4294901760
        %3343 = vmatpush1.msra.mxu0 %v3342
        %3344 = vmatprep.subr.mxu0 0.0
        %v3345 = vand.u32 %v236, 4294901760
        %3346 = vmatpush1.msra.mxu0 %v3345
        %3347 = vmatprep.subr.mxu0 0.0
        %v3348 = vand.u32 %v235, 4294901760
        %3349 = vmatpush1.msra.mxu0 %v3348
        %3350 = vmatprep.subr.mxu0 0.0
        %3351 = vmatpush2.msra.mxu0 0.0
        %3352 = vmatprep.subr.mxu0 0.0
        %3353 = vmatpush2.msra.mxu0 0.0
        %3354 = vmatprep.subr.mxu0 0.0
        %3355 = vmatpush2.msra.mxu0 0.0
        %3356 = vmatprep.subr.mxu0 0.0
        %3357 = vmatpush2.msra.mxu0 0.0
        %3358 = vmatprep.subr.mxu0 0.0
        %3359 = vmatpush2.msra.mxu0 0.0
        %3360 = vmatprep.subr.mxu0 0.0
        %3361 = vmatpush2.msra.mxu0 0.0
        %3362 = vmatprep.subr.mxu0 0.0
        %3363 = vmatpush2.msra.mxu0 0.0
        %3364 = vmatprep.subr.mxu0 0.0
        %3365 = vmatpush2.msra.mxu0 0.0
        %3366 = vmatprep.subr.mxu0 0.0
        %3367 = vmatpush2.msra.mxu0 0.0
        %3368 = vmatprep.subr.mxu0 0.0
        %3369 = vmatpush2.msra.mxu0 0.0
        %3370 = vmatprep.subr.mxu0 0.0
        %3371 = vmatpush2.msra.mxu0 0.0
        %3372 = vmatprep.subr.mxu0 0.0
        %3373 = vmatpush2.msra.mxu0 0.0
        %3374 = vmatprep.subr.mxu0 0.0
        %3375 = vmatpush2.msra.mxu0 0.0
        %3376 = vmatprep.subr.mxu0 0.0
        %3377 = vmatpush2.msra.mxu0 0.0
        %3378 = vmatprep.subr.mxu0 0.0
        %3379 = vmatpush2.msra.mxu0 0.0
        %3380 = vmatprep.subr.mxu0 0.0
        %3381 = vmatpush2.msra.mxu0 0.0
        %3382 = vmatprep.mubr.f32.mxu0 0.0
        %v3383 = vand.u32 %v2953, 4294901760
        %v3384 = vsub.f32 %v2953, %v3383
        %v3385 = vand.u32 %v3384, 4294901760
        %3386 = vmatmul.mubr.f32.gmra.mxu0 %v3385
        %v3387 = vpop.f32.mrf.mxu0
        %v3388 = vadd.f32 %v3299, %v3387
        %v3389 = vpop.f32.mrf.mxu0
        %3390 = vdwg.mxu0
        %3391 = vmatprep.subr.mxu0 0.0
        %v3392 = vand.u32 %v250, 4294901760
        %v3393 = vsub.f32 %v250, %v3392
        %v3394 = vand.u32 %v3393, 4294901760
        %3395 = vmatpush1.msra.mxu0 %v3394
        %3396 = vmatprep.subr.mxu0 0.0
        %v3397 = vand.u32 %v249, 4294901760
        %v3398 = vsub.f32 %v249, %v3397
        %v3399 = vand.u32 %v3398, 4294901760
        %3400 = vmatpush1.msra.mxu0 %v3399
        %3401 = vmatprep.subr.mxu0 0.0
        %v3402 = vand.u32 %v248, 4294901760
        %v3403 = vsub.f32 %v248, %v3402
        %v3404 = vand.u32 %v3403, 4294901760
        %3405 = vmatpush1.msra.mxu0 %v3404
        %3406 = vmatprep.subr.mxu0 0.0
        %v3407 = vand.u32 %v247, 4294901760
        %v3408 = vsub.f32 %v247, %v3407
        %v3409 = vand.u32 %v3408, 4294901760
        %3410 = vmatpush1.msra.mxu0 %v3409
        %3411 = vmatprep.subr.mxu0 0.0
        %v3412 = vand.u32 %v246, 4294901760
        %v3413 = vsub.f32 %v246, %v3412
        %v3414 = vand.u32 %v3413, 4294901760
        %3415 = vmatpush1.msra.mxu0 %v3414
        %3416 = vmatprep.subr.mxu0 0.0
        %v3417 = vand.u32 %v245, 4294901760
        %v3418 = vsub.f32 %v245, %v3417
        %v3419 = vand.u32 %v3418, 4294901760
        %3420 = vmatpush1.msra.mxu0 %v3419
        %3421 = vmatprep.subr.mxu0 0.0
        %v3422 = vand.u32 %v244, 4294901760
        %v3423 = vsub.f32 %v244, %v3422
        %v3424 = vand.u32 %v3423, 4294901760
        %3425 = vmatpush1.msra.mxu0 %v3424
        %3426 = vmatprep.subr.mxu0 0.0
        %v3427 = vand.u32 %v243, 4294901760
        %v3428 = vsub.f32 %v243, %v3427
        %v3429 = vand.u32 %v3428, 4294901760
        %3430 = vmatpush1.msra.mxu0 %v3429
        %3431 = vmatprep.subr.mxu0 0.0
        %v3432 = vand.u32 %v242, 4294901760
        %v3433 = vsub.f32 %v242, %v3432
        %v3434 = vand.u32 %v3433, 4294901760
        %3435 = vmatpush1.msra.mxu0 %v3434
        %3436 = vmatprep.subr.mxu0 0.0
        %v3437 = vand.u32 %v241, 4294901760
        %v3438 = vsub.f32 %v241, %v3437
        %v3439 = vand.u32 %v3438, 4294901760
        %3440 = vmatpush1.msra.mxu0 %v3439
        %3441 = vmatprep.subr.mxu0 0.0
        %v3442 = vand.u32 %v240, 4294901760
        %v3443 = vsub.f32 %v240, %v3442
        %v3444 = vand.u32 %v3443, 4294901760
        %3445 = vmatpush1.msra.mxu0 %v3444
        %3446 = vmatprep.subr.mxu0 0.0
        %v3447 = vand.u32 %v239, 4294901760
        %v3448 = vsub.f32 %v239, %v3447
        %v3449 = vand.u32 %v3448, 4294901760
        %3450 = vmatpush1.msra.mxu0 %v3449
        %3451 = vmatprep.subr.mxu0 0.0
        %v3452 = vand.u32 %v238, 4294901760
        %v3453 = vsub.f32 %v238, %v3452
        %v3454 = vand.u32 %v3453, 4294901760
        %3455 = vmatpush1.msra.mxu0 %v3454
        %3456 = vmatprep.subr.mxu0 0.0
        %v3457 = vand.u32 %v237, 4294901760
        %v3458 = vsub.f32 %v237, %v3457
        %v3459 = vand.u32 %v3458, 4294901760
        %3460 = vmatpush1.msra.mxu0 %v3459
        %3461 = vmatprep.subr.mxu0 0.0
        %v3462 = vand.u32 %v236, 4294901760
        %v3463 = vsub.f32 %v236, %v3462
        %v3464 = vand.u32 %v3463, 4294901760
        %3465 = vmatpush1.msra.mxu0 %v3464
        %3466 = vmatprep.subr.mxu0 0.0
        %v3467 = vand.u32 %v235, 4294901760
        %v3468 = vsub.f32 %v235, %v3467
        %v3469 = vand.u32 %v3468, 4294901760
        %3470 = vmatpush1.msra.mxu0 %v3469
        %3471 = vmatprep.subr.mxu0 0.0
        %3472 = vmatpush2.msra.mxu0 0.0
        %3473 = vmatprep.subr.mxu0 0.0
        %3474 = vmatpush2.msra.mxu0 0.0
        %3475 = vmatprep.subr.mxu0 0.0
        %3476 = vmatpush2.msra.mxu0 0.0
        %3477 = vmatprep.subr.mxu0 0.0
        %3478 = vmatpush2.msra.mxu0 0.0
        %3479 = vmatprep.subr.mxu0 0.0
        %3480 = vmatpush2.msra.mxu0 0.0
        %3481 = vmatprep.subr.mxu0 0.0
        %3482 = vmatpush2.msra.mxu0 0.0
        %3483 = vmatprep.subr.mxu0 0.0
        %3484 = vmatpush2.msra.mxu0 0.0
        %3485 = vmatprep.subr.mxu0 0.0
        %3486 = vmatpush2.msra.mxu0 0.0
        %3487 = vmatprep.subr.mxu0 0.0
        %3488 = vmatpush2.msra.mxu0 0.0
        %3489 = vmatprep.subr.mxu0 0.0
        %3490 = vmatpush2.msra.mxu0 0.0
        %3491 = vmatprep.subr.mxu0 0.0
        %3492 = vmatpush2.msra.mxu0 0.0
        %3493 = vmatprep.subr.mxu0 0.0
        %3494 = vmatpush2.msra.mxu0 0.0
        %3495 = vmatprep.subr.mxu0 0.0
        %3496 = vmatpush2.msra.mxu0 0.0
        %3497 = vmatprep.subr.mxu0 0.0
        %3498 = vmatpush2.msra.mxu0 0.0
        %3499 = vmatprep.subr.mxu0 0.0
        %3500 = vmatpush2.msra.mxu0 0.0
        %3501 = vmatprep.subr.mxu0 0.0
        %3502 = vmatpush2.msra.mxu0 0.0
        %3503 = vmatprep.mubr.f32.mxu0 0.0
        %v3504 = vand.u32 %v2953, 4294901760
        %3505 = vmatmul.mubr.f32.gmra.mxu0 %v3504
        %v3506 = vpop.f32.mrf.mxu0
        %v3507 = vadd.f32 %v3388, %v3506
        %v3508 = vpop.f32.mrf.mxu0
        %3509 = vdwg.mxu0
        %3510 = vmatprep.subr.mxu0 0.0
        %v3511 = vand.u32 %v250, 4294901760
        %3512 = vmatpush1.msra.mxu0 %v3511
        %3513 = vmatprep.subr.mxu0 0.0
        %v3514 = vand.u32 %v249, 4294901760
        %3515 = vmatpush1.msra.mxu0 %v3514
        %3516 = vmatprep.subr.mxu0 0.0
        %v3517 = vand.u32 %v248, 4294901760
        %3518 = vmatpush1.msra.mxu0 %v3517
        %3519 = vmatprep.subr.mxu0 0.0
        %v3520 = vand.u32 %v247, 4294901760
        %3521 = vmatpush1.msra.mxu0 %v3520
        %3522 = vmatprep.subr.mxu0 0.0
        %v3523 = vand.u32 %v246, 4294901760
        %3524 = vmatpush1.msra.mxu0 %v3523
        %3525 = vmatprep.subr.mxu0 0.0
        %v3526 = vand.u32 %v245, 4294901760
        %3527 = vmatpush1.msra.mxu0 %v3526
        %3528 = vmatprep.subr.mxu0 0.0
        %v3529 = vand.u32 %v244, 4294901760
        %3530 = vmatpush1.msra.mxu0 %v3529
        %3531 = vmatprep.subr.mxu0 0.0
        %v3532 = vand.u32 %v243, 4294901760
        %3533 = vmatpush1.msra.mxu0 %v3532
        %3534 = vmatprep.subr.mxu0 0.0
        %v3535 = vand.u32 %v242, 4294901760
        %3536 = vmatpush1.msra.mxu0 %v3535
        %3537 = vmatprep.subr.mxu0 0.0
        %v3538 = vand.u32 %v241, 4294901760
        %3539 = vmatpush1.msra.mxu0 %v3538
        %3540 = vmatprep.subr.mxu0 0.0
        %v3541 = vand.u32 %v240, 4294901760
        %3542 = vmatpush1.msra.mxu0 %v3541
        %3543 = vmatprep.subr.mxu0 0.0
        %v3544 = vand.u32 %v239, 4294901760
        %3545 = vmatpush1.msra.mxu0 %v3544
        %3546 = vmatprep.subr.mxu0 0.0
        %v3547 = vand.u32 %v238, 4294901760
        %3548 = vmatpush1.msra.mxu0 %v3547
        %3549 = vmatprep.subr.mxu0 0.0
        %v3550 = vand.u32 %v237, 4294901760
        %3551 = vmatpush1.msra.mxu0 %v3550
        %3552 = vmatprep.subr.mxu0 0.0
        %v3553 = vand.u32 %v236, 4294901760
        %3554 = vmatpush1.msra.mxu0 %v3553
        %3555 = vmatprep.subr.mxu0 0.0
        %v3556 = vand.u32 %v235, 4294901760
        %3557 = vmatpush1.msra.mxu0 %v3556
        %3558 = vmatprep.subr.mxu0 0.0
        %3559 = vmatpush2.msra.mxu0 0.0
        %3560 = vmatprep.subr.mxu0 0.0
        %3561 = vmatpush2.msra.mxu0 0.0
        %3562 = vmatprep.subr.mxu0 0.0
        %3563 = vmatpush2.msra.mxu0 0.0
        %3564 = vmatprep.subr.mxu0 0.0
        %3565 = vmatpush2.msra.mxu0 0.0
        %3566 = vmatprep.subr.mxu0 0.0
        %3567 = vmatpush2.msra.mxu0 0.0
        %3568 = vmatprep.subr.mxu0 0.0
        %3569 = vmatpush2.msra.mxu0 0.0
        %3570 = vmatprep.subr.mxu0 0.0
        %3571 = vmatpush2.msra.mxu0 0.0
        %3572 = vmatprep.subr.mxu0 0.0
        %3573 = vmatpush2.msra.mxu0 0.0
        %3574 = vmatprep.subr.mxu0 0.0
        %3575 = vmatpush2.msra.mxu0 0.0
        %3576 = vmatprep.subr.mxu0 0.0
        %3577 = vmatpush2.msra.mxu0 0.0
        %3578 = vmatprep.subr.mxu0 0.0
        %3579 = vmatpush2.msra.mxu0 0.0
        %3580 = vmatprep.subr.mxu0 0.0
        %3581 = vmatpush2.msra.mxu0 0.0
        %3582 = vmatprep.subr.mxu0 0.0
        %3583 = vmatpush2.msra.mxu0 0.0
        %3584 = vmatprep.subr.mxu0 0.0
        %3585 = vmatpush2.msra.mxu0 0.0
        %3586 = vmatprep.subr.mxu0 0.0
        %3587 = vmatpush2.msra.mxu0 0.0
        %3588 = vmatprep.subr.mxu0 0.0
        %3589 = vmatpush2.msra.mxu0 0.0
        %3590 = vmatprep.mubr.f32.mxu0 0.0
        %v3591 = vand.u32 %v2953, 4294901760
        %3592 = vmatmul.mubr.f32.gmra.mxu0 %v3591
        %v3593 = vpop.f32.mrf.mxu0
        %v3594 = vadd.f32 %v3507, %v3593
        %v3595 = vpop.f32.mrf.mxu0
        %3596 = vdwg.mxu0
        %v3597 = vmul.f32 %v289, %v289
        %v3598 = vmul.f32 %v290, %v290
        %3599 = vmatprep.subr.mxu0 0.0
        %3600 = vmatpush1.msra.mxu0 0.0
        %3601 = vmatprep.subr.mxu0 0.0
        %3602 = vmatpush1.msra.mxu0 0.0
        %3603 = vmatprep.subr.mxu0 0.0
        %3604 = vmatpush1.msra.mxu0 0.0
        %3605 = vmatprep.subr.mxu0 0.0
        %3606 = vmatpush1.msra.mxu0 0.0
        %3607 = vmatprep.subr.mxu0 0.0
        %3608 = vmatpush1.msra.mxu0 0.0
        %3609 = vmatprep.subr.mxu0 0.0
        %3610 = vmatpush1.msra.mxu0 0.0
        %3611 = vmatprep.subr.mxu0 0.0
        %3612 = vmatpush1.msra.mxu0 0.0
        %3613 = vmatprep.subr.mxu0 0.0
        %3614 = vmatpush1.msra.mxu0 0.0
        %3615 = vmatprep.subr.mxu0 0.0
        %3616 = vmatpush1.msra.mxu0 0.0
        %3617 = vmatprep.subr.mxu0 0.0
        %3618 = vmatpush1.msra.mxu0 0.0
        %3619 = vmatprep.subr.mxu0 0.0
        %3620 = vmatpush1.msra.mxu0 0.0
        %3621 = vmatprep.subr.mxu0 0.0
        %3622 = vmatpush1.msra.mxu0 0.0
        %3623 = vmatprep.subr.mxu0 0.0
        %3624 = vmatpush1.msra.mxu0 0.0
        %3625 = vmatprep.subr.mxu0 0.0
        %3626 = vmatpush1.msra.mxu0 0.0
        %3627 = vmatprep.subr.mxu0 0.0
        %v3628 = vand.u32 %v3598, 4294901760
        %3629 = vmatpush1.msra.mxu0 %v3628
        %3630 = vmatprep.subr.mxu0 0.0
        %v3631 = vand.u32 %v3597, 4294901760
        %3632 = vmatpush1.msra.mxu0 %v3631
        %3633 = vmatprep.subr.mxu0 0.0
        %3634 = vmatpush2.msra.mxu0 0.0
        %3635 = vmatprep.subr.mxu0 0.0
        %3636 = vmatpush2.msra.mxu0 0.0
        %3637 = vmatprep.subr.mxu0 0.0
        %3638 = vmatpush2.msra.mxu0 0.0
        %3639 = vmatprep.subr.mxu0 0.0
        %3640 = vmatpush2.msra.mxu0 0.0
        %3641 = vmatprep.subr.mxu0 0.0
        %3642 = vmatpush2.msra.mxu0 0.0
        %3643 = vmatprep.subr.mxu0 0.0
        %3644 = vmatpush2.msra.mxu0 0.0
        %3645 = vmatprep.subr.mxu0 0.0
        %3646 = vmatpush2.msra.mxu0 0.0
        %3647 = vmatprep.subr.mxu0 0.0
        %3648 = vmatpush2.msra.mxu0 0.0
        %3649 = vmatprep.subr.mxu0 0.0
        %3650 = vmatpush2.msra.mxu0 0.0
        %3651 = vmatprep.subr.mxu0 0.0
        %3652 = vmatpush2.msra.mxu0 0.0
        %3653 = vmatprep.subr.mxu0 0.0
        %3654 = vmatpush2.msra.mxu0 0.0
        %3655 = vmatprep.subr.mxu0 0.0
        %3656 = vmatpush2.msra.mxu0 0.0
        %3657 = vmatprep.subr.mxu0 0.0
        %3658 = vmatpush2.msra.mxu0 0.0
        %3659 = vmatprep.subr.mxu0 0.0
        %3660 = vmatpush2.msra.mxu0 0.0
        %3661 = vmatprep.subr.mxu0 0.0
        %3662 = vmatpush2.msra.mxu0 0.0
        %3663 = vmatprep.subr.mxu0 0.0
        %3664 = vmatpush2.msra.mxu0 0.0
        %3665 = vmatprep.mubr.f32.mxu0 0.0
        %v3666 = vand.u32 %v293, 4294901760
        %v3667 = vsub.f32 %v293, %v3666
        %v3668 = vand.u32 %v3667, 4294901760
        %v3669 = vsub.f32 %v3667, %v3668
        %v3670 = vand.u32 %v3669, 4294901760
        %3671 = vmatmul.mubr.f32.gmra.mxu0 %v3670
        %v3672 = vpop.f32.mrf.mxu0
        %v3673 = vadd.f32 0.0, %v3672
        %v3674 = vpop.f32.mrf.mxu0
        %3675 = vdwg.mxu0
        %3676 = vmatprep.subr.mxu0 0.0
        %3677 = vmatpush1.msra.mxu0 0.0
        %3678 = vmatprep.subr.mxu0 0.0
        %3679 = vmatpush1.msra.mxu0 0.0
        %3680 = vmatprep.subr.mxu0 0.0
        %3681 = vmatpush1.msra.mxu0 0.0
        %3682 = vmatprep.subr.mxu0 0.0
        %3683 = vmatpush1.msra.mxu0 0.0
        %3684 = vmatprep.subr.mxu0 0.0
        %3685 = vmatpush1.msra.mxu0 0.0
        %3686 = vmatprep.subr.mxu0 0.0
        %3687 = vmatpush1.msra.mxu0 0.0
        %3688 = vmatprep.subr.mxu0 0.0
        %3689 = vmatpush1.msra.mxu0 0.0
        %3690 = vmatprep.subr.mxu0 0.0
        %3691 = vmatpush1.msra.mxu0 0.0
        %3692 = vmatprep.subr.mxu0 0.0
        %3693 = vmatpush1.msra.mxu0 0.0
        %3694 = vmatprep.subr.mxu0 0.0
        %3695 = vmatpush1.msra.mxu0 0.0
        %3696 = vmatprep.subr.mxu0 0.0
        %3697 = vmatpush1.msra.mxu0 0.0
        %3698 = vmatprep.subr.mxu0 0.0
        %3699 = vmatpush1.msra.mxu0 0.0
        %3700 = vmatprep.subr.mxu0 0.0
        %3701 = vmatpush1.msra.mxu0 0.0
        %3702 = vmatprep.subr.mxu0 0.0
        %3703 = vmatpush1.msra.mxu0 0.0
        %3704 = vmatprep.subr.mxu0 0.0
        %v3705 = vand.u32 %v3598, 4294901760
        %v3706 = vsub.f32 %v3598, %v3705
        %v3707 = vand.u32 %v3706, 4294901760
        %v3708 = vsub.f32 %v3706, %v3707
        %v3709 = vand.u32 %v3708, 4294901760
        %3710 = vmatpush1.msra.mxu0 %v3709
        %3711 = vmatprep.subr.mxu0 0.0
        %v3712 = vand.u32 %v3597, 4294901760
        %v3713 = vsub.f32 %v3597, %v3712
        %v3714 = vand.u32 %v3713, 4294901760
        %v3715 = vsub.f32 %v3713, %v3714
        %v3716 = vand.u32 %v3715, 4294901760
        %3717 = vmatpush1.msra.mxu0 %v3716
        %3718 = vmatprep.subr.mxu0 0.0
        %3719 = vmatpush2.msra.mxu0 0.0
        %3720 = vmatprep.subr.mxu0 0.0
        %3721 = vmatpush2.msra.mxu0 0.0
        %3722 = vmatprep.subr.mxu0 0.0
        %3723 = vmatpush2.msra.mxu0 0.0
        %3724 = vmatprep.subr.mxu0 0.0
        %3725 = vmatpush2.msra.mxu0 0.0
        %3726 = vmatprep.subr.mxu0 0.0
        %3727 = vmatpush2.msra.mxu0 0.0
        %3728 = vmatprep.subr.mxu0 0.0
        %3729 = vmatpush2.msra.mxu0 0.0
        %3730 = vmatprep.subr.mxu0 0.0
        %3731 = vmatpush2.msra.mxu0 0.0
        %3732 = vmatprep.subr.mxu0 0.0
        %3733 = vmatpush2.msra.mxu0 0.0
        %3734 = vmatprep.subr.mxu0 0.0
        %3735 = vmatpush2.msra.mxu0 0.0
        %3736 = vmatprep.subr.mxu0 0.0
        %3737 = vmatpush2.msra.mxu0 0.0
        %3738 = vmatprep.subr.mxu0 0.0
        %3739 = vmatpush2.msra.mxu0 0.0
        %3740 = vmatprep.subr.mxu0 0.0
        %3741 = vmatpush2.msra.mxu0 0.0
        %3742 = vmatprep.subr.mxu0 0.0
        %3743 = vmatpush2.msra.mxu0 0.0
        %3744 = vmatprep.subr.mxu0 0.0
        %3745 = vmatpush2.msra.mxu0 0.0
        %3746 = vmatprep.subr.mxu0 0.0
        %3747 = vmatpush2.msra.mxu0 0.0
        %3748 = vmatprep.subr.mxu0 0.0
        %3749 = vmatpush2.msra.mxu0 0.0
        %3750 = vmatprep.mubr.f32.mxu0 0.0
        %v3751 = vand.u32 %v293, 4294901760
        %3752 = vmatmul.mubr.f32.gmra.mxu0 %v3751
        %v3753 = vpop.f32.mrf.mxu0
        %v3754 = vadd.f32 %v3673, %v3753
        %v3755 = vpop.f32.mrf.mxu0
        %3756 = vdwg.mxu0
        %3757 = vmatprep.subr.mxu0 0.0
        %3758 = vmatpush1.msra.mxu0 0.0
        %3759 = vmatprep.subr.mxu0 0.0
        %3760 = vmatpush1.msra.mxu0 0.0
        %3761 = vmatprep.subr.mxu0 0.0
        %3762 = vmatpush1.msra.mxu0 0.0
        %3763 = vmatprep.subr.mxu0 0.0
        %3764 = vmatpush1.msra.mxu0 0.0
        %3765 = vmatprep.subr.mxu0 0.0
        %3766 = vmatpush1.msra.mxu0 0.0
        %3767 = vmatprep.subr.mxu0 0.0
        %3768 = vmatpush1.msra.mxu0 0.0
        %3769 = vmatprep.subr.mxu0 0.0
        %3770 = vmatpush1.msra.mxu0 0.0
        %3771 = vmatprep.subr.mxu0 0.0
        %3772 = vmatpush1.msra.mxu0 0.0
        %3773 = vmatprep.subr.mxu0 0.0
        %3774 = vmatpush1.msra.mxu0 0.0
        %3775 = vmatprep.subr.mxu0 0.0
        %3776 = vmatpush1.msra.mxu0 0.0
        %3777 = vmatprep.subr.mxu0 0.0
        %3778 = vmatpush1.msra.mxu0 0.0
        %3779 = vmatprep.subr.mxu0 0.0
        %3780 = vmatpush1.msra.mxu0 0.0
        %3781 = vmatprep.subr.mxu0 0.0
        %3782 = vmatpush1.msra.mxu0 0.0
        %3783 = vmatprep.subr.mxu0 0.0
        %3784 = vmatpush1.msra.mxu0 0.0
        %3785 = vmatprep.subr.mxu0 0.0
        %v3786 = vand.u32 %v3598, 4294901760
        %v3787 = vsub.f32 %v3598, %v3786
        %3788 = vmatpush1.msra.mxu0 %v3787
        %3789 = vmatprep.subr.mxu0 0.0
        %v3790 = vand.u32 %v3597, 4294901760
        %v3791 = vsub.f32 %v3597, %v3790
        %3792 = vmatpush1.msra.mxu0 %v3791
        %3793 = vmatprep.subr.mxu0 0.0
        %3794 = vmatpush2.msra.mxu0 0.0
        %3795 = vmatprep.subr.mxu0 0.0
        %3796 = vmatpush2.msra.mxu0 0.0
        %3797 = vmatprep.subr.mxu0 0.0
        %3798 = vmatpush2.msra.mxu0 0.0
        %3799 = vmatprep.subr.mxu0 0.0
        %3800 = vmatpush2.msra.mxu0 0.0
        %3801 = vmatprep.subr.mxu0 0.0
        %3802 = vmatpush2.msra.mxu0 0.0
        %3803 = vmatprep.subr.mxu0 0.0
        %3804 = vmatpush2.msra.mxu0 0.0
        %3805 = vmatprep.subr.mxu0 0.0
        %3806 = vmatpush2.msra.mxu0 0.0
        %3807 = vmatprep.subr.mxu0 0.0
        %3808 = vmatpush2.msra.mxu0 0.0
        %3809 = vmatprep.subr.mxu0 0.0
        %3810 = vmatpush2.msra.mxu0 0.0
        %3811 = vmatprep.subr.mxu0 0.0
        %3812 = vmatpush2.msra.mxu0 0.0
        %3813 = vmatprep.subr.mxu0 0.0
        %3814 = vmatpush2.msra.mxu0 0.0
        %3815 = vmatprep.subr.mxu0 0.0
        %3816 = vmatpush2.msra.mxu0 0.0
        %3817 = vmatprep.subr.mxu0 0.0
        %3818 = vmatpush2.msra.mxu0 0.0
        %3819 = vmatprep.subr.mxu0 0.0
        %3820 = vmatpush2.msra.mxu0 0.0
        %3821 = vmatprep.subr.mxu0 0.0
        %3822 = vmatpush2.msra.mxu0 0.0
        %3823 = vmatprep.subr.mxu0 0.0
        %3824 = vmatpush2.msra.mxu0 0.0
        %3825 = vmatprep.mubr.f32.mxu0 0.0
        %v3826 = vand.u32 %v293, 4294901760
        %v3827 = vsub.f32 %v293, %v3826
        %3828 = vmatmul.mubr.f32.gmra.mxu0 %v3827
        %v3829 = vpop.f32.mrf.mxu0
        %v3830 = vadd.f32 %v3754, %v3829
        %v3831 = vpop.f32.mrf.mxu0
        %3832 = vdwg.mxu0
        %3833 = vmatprep.subr.mxu0 0.0
        %3834 = vmatpush1.msra.mxu0 0.0
        %3835 = vmatprep.subr.mxu0 0.0
        %3836 = vmatpush1.msra.mxu0 0.0
        %3837 = vmatprep.subr.mxu0 0.0
        %3838 = vmatpush1.msra.mxu0 0.0
        %3839 = vmatprep.subr.mxu0 0.0
        %3840 = vmatpush1.msra.mxu0 0.0
        %3841 = vmatprep.subr.mxu0 0.0
        %3842 = vmatpush1.msra.mxu0 0.0
        %3843 = vmatprep.subr.mxu0 0.0
        %3844 = vmatpush1.msra.mxu0 0.0
        %3845 = vmatprep.subr.mxu0 0.0
        %3846 = vmatpush1.msra.mxu0 0.0
        %3847 = vmatprep.subr.mxu0 0.0
        %3848 = vmatpush1.msra.mxu0 0.0
        %3849 = vmatprep.subr.mxu0 0.0
        %3850 = vmatpush1.msra.mxu0 0.0
        %3851 = vmatprep.subr.mxu0 0.0
        %3852 = vmatpush1.msra.mxu0 0.0
        %3853 = vmatprep.subr.mxu0 0.0
        %3854 = vmatpush1.msra.mxu0 0.0
        %3855 = vmatprep.subr.mxu0 0.0
        %3856 = vmatpush1.msra.mxu0 0.0
        %3857 = vmatprep.subr.mxu0 0.0
        %3858 = vmatpush1.msra.mxu0 0.0
        %3859 = vmatprep.subr.mxu0 0.0
        %3860 = vmatpush1.msra.mxu0 0.0
        %3861 = vmatprep.subr.mxu0 0.0
        %v3862 = vand.u32 %v3598, 4294901760
        %3863 = vmatpush1.msra.mxu0 %v3862
        %3864 = vmatprep.subr.mxu0 0.0
        %v3865 = vand.u32 %v3597, 4294901760
        %3866 = vmatpush1.msra.mxu0 %v3865
        %3867 = vmatprep.subr.mxu0 0.0
        %3868 = vmatpush2.msra.mxu0 0.0
        %3869 = vmatprep.subr.mxu0 0.0
        %3870 = vmatpush2.msra.mxu0 0.0
        %3871 = vmatprep.subr.mxu0 0.0
        %3872 = vmatpush2.msra.mxu0 0.0
        %3873 = vmatprep.subr.mxu0 0.0
        %3874 = vmatpush2.msra.mxu0 0.0
        %3875 = vmatprep.subr.mxu0 0.0
        %3876 = vmatpush2.msra.mxu0 0.0
        %3877 = vmatprep.subr.mxu0 0.0
        %3878 = vmatpush2.msra.mxu0 0.0
        %3879 = vmatprep.subr.mxu0 0.0
        %3880 = vmatpush2.msra.mxu0 0.0
        %3881 = vmatprep.subr.mxu0 0.0
        %3882 = vmatpush2.msra.mxu0 0.0
        %3883 = vmatprep.subr.mxu0 0.0
        %3884 = vmatpush2.msra.mxu0 0.0
        %3885 = vmatprep.subr.mxu0 0.0
        %3886 = vmatpush2.msra.mxu0 0.0
        %3887 = vmatprep.subr.mxu0 0.0
        %3888 = vmatpush2.msra.mxu0 0.0
        %3889 = vmatprep.subr.mxu0 0.0
        %3890 = vmatpush2.msra.mxu0 0.0
        %3891 = vmatprep.subr.mxu0 0.0
        %3892 = vmatpush2.msra.mxu0 0.0
        %3893 = vmatprep.subr.mxu0 0.0
        %3894 = vmatpush2.msra.mxu0 0.0
        %3895 = vmatprep.subr.mxu0 0.0
        %3896 = vmatpush2.msra.mxu0 0.0
        %3897 = vmatprep.subr.mxu0 0.0
        %3898 = vmatpush2.msra.mxu0 0.0
        %3899 = vmatprep.mubr.f32.mxu0 0.0
        %v3900 = vand.u32 %v293, 4294901760
        %v3901 = vsub.f32 %v293, %v3900
        %v3902 = vand.u32 %v3901, 4294901760
        %3903 = vmatmul.mubr.f32.gmra.mxu0 %v3902
        %v3904 = vpop.f32.mrf.mxu0
        %v3905 = vadd.f32 %v3830, %v3904
        %v3906 = vpop.f32.mrf.mxu0
        %3907 = vdwg.mxu0
        %3908 = vmatprep.subr.mxu0 0.0
        %3909 = vmatpush1.msra.mxu0 0.0
        %3910 = vmatprep.subr.mxu0 0.0
        %3911 = vmatpush1.msra.mxu0 0.0
        %3912 = vmatprep.subr.mxu0 0.0
        %3913 = vmatpush1.msra.mxu0 0.0
        %3914 = vmatprep.subr.mxu0 0.0
        %3915 = vmatpush1.msra.mxu0 0.0
        %3916 = vmatprep.subr.mxu0 0.0
        %3917 = vmatpush1.msra.mxu0 0.0
        %3918 = vmatprep.subr.mxu0 0.0
        %3919 = vmatpush1.msra.mxu0 0.0
        %3920 = vmatprep.subr.mxu0 0.0
        %3921 = vmatpush1.msra.mxu0 0.0
        %3922 = vmatprep.subr.mxu0 0.0
        %3923 = vmatpush1.msra.mxu0 0.0
        %3924 = vmatprep.subr.mxu0 0.0
        %3925 = vmatpush1.msra.mxu0 0.0
        %3926 = vmatprep.subr.mxu0 0.0
        %3927 = vmatpush1.msra.mxu0 0.0
        %3928 = vmatprep.subr.mxu0 0.0
        %3929 = vmatpush1.msra.mxu0 0.0
        %3930 = vmatprep.subr.mxu0 0.0
        %3931 = vmatpush1.msra.mxu0 0.0
        %3932 = vmatprep.subr.mxu0 0.0
        %3933 = vmatpush1.msra.mxu0 0.0
        %3934 = vmatprep.subr.mxu0 0.0
        %3935 = vmatpush1.msra.mxu0 0.0
        %3936 = vmatprep.subr.mxu0 0.0
        %v3937 = vand.u32 %v3598, 4294901760
        %v3938 = vsub.f32 %v3598, %v3937
        %v3939 = vand.u32 %v3938, 4294901760
        %3940 = vmatpush1.msra.mxu0 %v3939
        %3941 = vmatprep.subr.mxu0 0.0
        %v3942 = vand.u32 %v3597, 4294901760
        %v3943 = vsub.f32 %v3597, %v3942
        %v3944 = vand.u32 %v3943, 4294901760
        %3945 = vmatpush1.msra.mxu0 %v3944
        %3946 = vmatprep.subr.mxu0 0.0
        %3947 = vmatpush2.msra.mxu0 0.0
        %3948 = vmatprep.subr.mxu0 0.0
        %3949 = vmatpush2.msra.mxu0 0.0
        %3950 = vmatprep.subr.mxu0 0.0
        %3951 = vmatpush2.msra.mxu0 0.0
        %3952 = vmatprep.subr.mxu0 0.0
        %3953 = vmatpush2.msra.mxu0 0.0
        %3954 = vmatprep.subr.mxu0 0.0
        %3955 = vmatpush2.msra.mxu0 0.0
        %3956 = vmatprep.subr.mxu0 0.0
        %3957 = vmatpush2.msra.mxu0 0.0
        %3958 = vmatprep.subr.mxu0 0.0
        %3959 = vmatpush2.msra.mxu0 0.0
        %3960 = vmatprep.subr.mxu0 0.0
        %3961 = vmatpush2.msra.mxu0 0.0
        %3962 = vmatprep.subr.mxu0 0.0
        %3963 = vmatpush2.msra.mxu0 0.0
        %3964 = vmatprep.subr.mxu0 0.0
        %3965 = vmatpush2.msra.mxu0 0.0
        %3966 = vmatprep.subr.mxu0 0.0
        %3967 = vmatpush2.msra.mxu0 0.0
        %3968 = vmatprep.subr.mxu0 0.0
        %3969 = vmatpush2.msra.mxu0 0.0
        %3970 = vmatprep.subr.mxu0 0.0
        %3971 = vmatpush2.msra.mxu0 0.0
        %3972 = vmatprep.subr.mxu0 0.0
        %3973 = vmatpush2.msra.mxu0 0.0
        %3974 = vmatprep.subr.mxu0 0.0
        %3975 = vmatpush2.msra.mxu0 0.0
        %3976 = vmatprep.subr.mxu0 0.0
        %3977 = vmatpush2.msra.mxu0 0.0
        %3978 = vmatprep.mubr.f32.mxu0 0.0
        %v3979 = vand.u32 %v293, 4294901760
        %3980 = vmatmul.mubr.f32.gmra.mxu0 %v3979
        %v3981 = vpop.f32.mrf.mxu0
        %v3982 = vadd.f32 %v3905, %v3981
        %v3983 = vpop.f32.mrf.mxu0
        %3984 = vdwg.mxu0
        %3985 = vmatprep.subr.mxu0 0.0
        %3986 = vmatpush1.msra.mxu0 0.0
        %3987 = vmatprep.subr.mxu0 0.0
        %3988 = vmatpush1.msra.mxu0 0.0
        %3989 = vmatprep.subr.mxu0 0.0
        %3990 = vmatpush1.msra.mxu0 0.0
        %3991 = vmatprep.subr.mxu0 0.0
        %3992 = vmatpush1.msra.mxu0 0.0
        %3993 = vmatprep.subr.mxu0 0.0
        %3994 = vmatpush1.msra.mxu0 0.0
        %3995 = vmatprep.subr.mxu0 0.0
        %3996 = vmatpush1.msra.mxu0 0.0
        %3997 = vmatprep.subr.mxu0 0.0
        %3998 = vmatpush1.msra.mxu0 0.0
        %3999 = vmatprep.subr.mxu0 0.0
        %4000 = vmatpush1.msra.mxu0 0.0
        %4001 = vmatprep.subr.mxu0 0.0
        %4002 = vmatpush1.msra.mxu0 0.0
        %4003 = vmatprep.subr.mxu0 0.0
        %4004 = vmatpush1.msra.mxu0 0.0
        %4005 = vmatprep.subr.mxu0 0.0
        %4006 = vmatpush1.msra.mxu0 0.0
        %4007 = vmatprep.subr.mxu0 0.0
        %4008 = vmatpush1.msra.mxu0 0.0
        %4009 = vmatprep.subr.mxu0 0.0
        %4010 = vmatpush1.msra.mxu0 0.0
        %4011 = vmatprep.subr.mxu0 0.0
        %4012 = vmatpush1.msra.mxu0 0.0
        %4013 = vmatprep.subr.mxu0 0.0
        %v4014 = vand.u32 %v3598, 4294901760
        %4015 = vmatpush1.msra.mxu0 %v4014
        %4016 = vmatprep.subr.mxu0 0.0
        %v4017 = vand.u32 %v3597, 4294901760
        %4018 = vmatpush1.msra.mxu0 %v4017
        %4019 = vmatprep.subr.mxu0 0.0
        %4020 = vmatpush2.msra.mxu0 0.0
        %4021 = vmatprep.subr.mxu0 0.0
        %4022 = vmatpush2.msra.mxu0 0.0
        %4023 = vmatprep.subr.mxu0 0.0
        %4024 = vmatpush2.msra.mxu0 0.0
        %4025 = vmatprep.subr.mxu0 0.0
        %4026 = vmatpush2.msra.mxu0 0.0
        %4027 = vmatprep.subr.mxu0 0.0
        %4028 = vmatpush2.msra.mxu0 0.0
        %4029 = vmatprep.subr.mxu0 0.0
        %4030 = vmatpush2.msra.mxu0 0.0
        %4031 = vmatprep.subr.mxu0 0.0
        %4032 = vmatpush2.msra.mxu0 0.0
        %4033 = vmatprep.subr.mxu0 0.0
        %4034 = vmatpush2.msra.mxu0 0.0
        %4035 = vmatprep.subr.mxu0 0.0
        %4036 = vmatpush2.msra.mxu0 0.0
        %4037 = vmatprep.subr.mxu0 0.0
        %4038 = vmatpush2.msra.mxu0 0.0
        %4039 = vmatprep.subr.mxu0 0.0
        %4040 = vmatpush2.msra.mxu0 0.0
        %4041 = vmatprep.subr.mxu0 0.0
        %4042 = vmatpush2.msra.mxu0 0.0
        %4043 = vmatprep.subr.mxu0 0.0
        %4044 = vmatpush2.msra.mxu0 0.0
        %4045 = vmatprep.subr.mxu0 0.0
        %4046 = vmatpush2.msra.mxu0 0.0
        %4047 = vmatprep.subr.mxu0 0.0
        %4048 = vmatpush2.msra.mxu0 0.0
        %4049 = vmatprep.subr.mxu0 0.0
        %4050 = vmatpush2.msra.mxu0 0.0
        %4051 = vmatprep.mubr.f32.mxu0 0.0
        %v4052 = vand.u32 %v293, 4294901760
        %4053 = vmatmul.mubr.f32.gmra.mxu0 %v4052
        %v4054 = vpop.f32.mrf.mxu0
        %v4055 = vadd.f32 %v3982, %v4054
        %v4056 = vpop.f32.mrf.mxu0
        %4057 = vdwg.mxu0
        %4058 = vmatprep.subr.mxu0 0.0
        %v4059 = vand.u32 %v250, 4294901760
        %4060 = vmatpush1.msra.mxu0 %v4059
        %4061 = vmatprep.subr.mxu0 0.0
        %v4062 = vand.u32 %v249, 4294901760
        %4063 = vmatpush1.msra.mxu0 %v4062
        %4064 = vmatprep.subr.mxu0 0.0
        %v4065 = vand.u32 %v248, 4294901760
        %4066 = vmatpush1.msra.mxu0 %v4065
        %4067 = vmatprep.subr.mxu0 0.0
        %v4068 = vand.u32 %v247, 4294901760
        %4069 = vmatpush1.msra.mxu0 %v4068
        %4070 = vmatprep.subr.mxu0 0.0
        %v4071 = vand.u32 %v246, 4294901760
        %4072 = vmatpush1.msra.mxu0 %v4071
        %4073 = vmatprep.subr.mxu0 0.0
        %v4074 = vand.u32 %v245, 4294901760
        %4075 = vmatpush1.msra.mxu0 %v4074
        %4076 = vmatprep.subr.mxu0 0.0
        %v4077 = vand.u32 %v244, 4294901760
        %4078 = vmatpush1.msra.mxu0 %v4077
        %4079 = vmatprep.subr.mxu0 0.0
        %v4080 = vand.u32 %v243, 4294901760
        %4081 = vmatpush1.msra.mxu0 %v4080
        %4082 = vmatprep.subr.mxu0 0.0
        %v4083 = vand.u32 %v242, 4294901760
        %4084 = vmatpush1.msra.mxu0 %v4083
        %4085 = vmatprep.subr.mxu0 0.0
        %v4086 = vand.u32 %v241, 4294901760
        %4087 = vmatpush1.msra.mxu0 %v4086
        %4088 = vmatprep.subr.mxu0 0.0
        %v4089 = vand.u32 %v240, 4294901760
        %4090 = vmatpush1.msra.mxu0 %v4089
        %4091 = vmatprep.subr.mxu0 0.0
        %v4092 = vand.u32 %v239, 4294901760
        %4093 = vmatpush1.msra.mxu0 %v4092
        %4094 = vmatprep.subr.mxu0 0.0
        %v4095 = vand.u32 %v238, 4294901760
        %4096 = vmatpush1.msra.mxu0 %v4095
        %4097 = vmatprep.subr.mxu0 0.0
        %v4098 = vand.u32 %v237, 4294901760
        %4099 = vmatpush1.msra.mxu0 %v4098
        %4100 = vmatprep.subr.mxu0 0.0
        %v4101 = vand.u32 %v236, 4294901760
        %4102 = vmatpush1.msra.mxu0 %v4101
        %4103 = vmatprep.subr.mxu0 0.0
        %v4104 = vand.u32 %v235, 4294901760
        %4105 = vmatpush1.msra.mxu0 %v4104
        %4106 = vmatprep.subr.mxu0 0.0
        %4107 = vmatpush2.msra.mxu0 0.0
        %4108 = vmatprep.subr.mxu0 0.0
        %4109 = vmatpush2.msra.mxu0 0.0
        %4110 = vmatprep.subr.mxu0 0.0
        %4111 = vmatpush2.msra.mxu0 0.0
        %4112 = vmatprep.subr.mxu0 0.0
        %4113 = vmatpush2.msra.mxu0 0.0
        %4114 = vmatprep.subr.mxu0 0.0
        %4115 = vmatpush2.msra.mxu0 0.0
        %4116 = vmatprep.subr.mxu0 0.0
        %4117 = vmatpush2.msra.mxu0 0.0
        %4118 = vmatprep.subr.mxu0 0.0
        %4119 = vmatpush2.msra.mxu0 0.0
        %4120 = vmatprep.subr.mxu0 0.0
        %4121 = vmatpush2.msra.mxu0 0.0
        %4122 = vmatprep.subr.mxu0 0.0
        %4123 = vmatpush2.msra.mxu0 0.0
        %4124 = vmatprep.subr.mxu0 0.0
        %4125 = vmatpush2.msra.mxu0 0.0
        %4126 = vmatprep.subr.mxu0 0.0
        %4127 = vmatpush2.msra.mxu0 0.0
        %4128 = vmatprep.subr.mxu0 0.0
        %4129 = vmatpush2.msra.mxu0 0.0
        %4130 = vmatprep.subr.mxu0 0.0
        %4131 = vmatpush2.msra.mxu0 0.0
        %4132 = vmatprep.subr.mxu0 0.0
        %4133 = vmatpush2.msra.mxu0 0.0
        %4134 = vmatprep.subr.mxu0 0.0
        %4135 = vmatpush2.msra.mxu0 0.0
        %4136 = vmatprep.subr.mxu0 0.0
        %4137 = vmatpush2.msra.mxu0 0.0
        %4138 = vmatprep.mubr.f32.mxu0 0.0
        %v4139 = vand.u32 %v4055, 4294901760
        %v4140 = vsub.f32 %v4055, %v4139
        %v4141 = vand.u32 %v4140, 4294901760
        %v4142 = vsub.f32 %v4140, %v4141
        %v4143 = vand.u32 %v4142, 4294901760
        %4144 = vmatmul.mubr.f32.gmra.mxu0 %v4143
        %v4145 = vpop.f32.mrf.mxu0
        %v4146 = vadd.f32 0.0, %v4145
        %v4147 = vpop.f32.mrf.mxu0
        %4148 = vdwg.mxu0
        %4149 = vmatprep.subr.mxu0 0.0
        %v4150 = vand.u32 %v250, 4294901760
        %v4151 = vsub.f32 %v250, %v4150
        %v4152 = vand.u32 %v4151, 4294901760
        %v4153 = vsub.f32 %v4151, %v4152
        %v4154 = vand.u32 %v4153, 4294901760
        %4155 = vmatpush1.msra.mxu0 %v4154
        %4156 = vmatprep.subr.mxu0 0.0
        %v4157 = vand.u32 %v249, 4294901760
        %v4158 = vsub.f32 %v249, %v4157
        %v4159 = vand.u32 %v4158, 4294901760
        %v4160 = vsub.f32 %v4158, %v4159
        %v4161 = vand.u32 %v4160, 4294901760
        %4162 = vmatpush1.msra.mxu0 %v4161
        %4163 = vmatprep.subr.mxu0 0.0
        %v4164 = vand.u32 %v248, 4294901760
        %v4165 = vsub.f32 %v248, %v4164
        %v4166 = vand.u32 %v4165, 4294901760
        %v4167 = vsub.f32 %v4165, %v4166
        %v4168 = vand.u32 %v4167, 4294901760
        %4169 = vmatpush1.msra.mxu0 %v4168
        %4170 = vmatprep.subr.mxu0 0.0
        %v4171 = vand.u32 %v247, 4294901760
        %v4172 = vsub.f32 %v247, %v4171
        %v4173 = vand.u32 %v4172, 4294901760
        %v4174 = vsub.f32 %v4172, %v4173
        %v4175 = vand.u32 %v4174, 4294901760
        %4176 = vmatpush1.msra.mxu0 %v4175
        %4177 = vmatprep.subr.mxu0 0.0
        %v4178 = vand.u32 %v246, 4294901760
        %v4179 = vsub.f32 %v246, %v4178
        %v4180 = vand.u32 %v4179, 4294901760
        %v4181 = vsub.f32 %v4179, %v4180
        %v4182 = vand.u32 %v4181, 4294901760
        %4183 = vmatpush1.msra.mxu0 %v4182
        %4184 = vmatprep.subr.mxu0 0.0
        %v4185 = vand.u32 %v245, 4294901760
        %v4186 = vsub.f32 %v245, %v4185
        %v4187 = vand.u32 %v4186, 4294901760
        %v4188 = vsub.f32 %v4186, %v4187
        %v4189 = vand.u32 %v4188, 4294901760
        %4190 = vmatpush1.msra.mxu0 %v4189
        %4191 = vmatprep.subr.mxu0 0.0
        %v4192 = vand.u32 %v244, 4294901760
        %v4193 = vsub.f32 %v244, %v4192
        %v4194 = vand.u32 %v4193, 4294901760
        %v4195 = vsub.f32 %v4193, %v4194
        %v4196 = vand.u32 %v4195, 4294901760
        %4197 = vmatpush1.msra.mxu0 %v4196
        %4198 = vmatprep.subr.mxu0 0.0
        %v4199 = vand.u32 %v243, 4294901760
        %v4200 = vsub.f32 %v243, %v4199
        %v4201 = vand.u32 %v4200, 4294901760
        %v4202 = vsub.f32 %v4200, %v4201
        %v4203 = vand.u32 %v4202, 4294901760
        %4204 = vmatpush1.msra.mxu0 %v4203
        %4205 = vmatprep.subr.mxu0 0.0
        %v4206 = vand.u32 %v242, 4294901760
        %v4207 = vsub.f32 %v242, %v4206
        %v4208 = vand.u32 %v4207, 4294901760
        %v4209 = vsub.f32 %v4207, %v4208
        %v4210 = vand.u32 %v4209, 4294901760
        %4211 = vmatpush1.msra.mxu0 %v4210
        %4212 = vmatprep.subr.mxu0 0.0
        %v4213 = vand.u32 %v241, 4294901760
        %v4214 = vsub.f32 %v241, %v4213
        %v4215 = vand.u32 %v4214, 4294901760
        %v4216 = vsub.f32 %v4214, %v4215
        %v4217 = vand.u32 %v4216, 4294901760
        %4218 = vmatpush1.msra.mxu0 %v4217
        %4219 = vmatprep.subr.mxu0 0.0
        %v4220 = vand.u32 %v240, 4294901760
        %v4221 = vsub.f32 %v240, %v4220
        %v4222 = vand.u32 %v4221, 4294901760
        %v4223 = vsub.f32 %v4221, %v4222
        %v4224 = vand.u32 %v4223, 4294901760
        %4225 = vmatpush1.msra.mxu0 %v4224
        %4226 = vmatprep.subr.mxu0 0.0
        %v4227 = vand.u32 %v239, 4294901760
        %v4228 = vsub.f32 %v239, %v4227
        %v4229 = vand.u32 %v4228, 4294901760
        %v4230 = vsub.f32 %v4228, %v4229
        %v4231 = vand.u32 %v4230, 4294901760
        %4232 = vmatpush1.msra.mxu0 %v4231
        %4233 = vmatprep.subr.mxu0 0.0
        %v4234 = vand.u32 %v238, 4294901760
        %v4235 = vsub.f32 %v238, %v4234
        %v4236 = vand.u32 %v4235, 4294901760
        %v4237 = vsub.f32 %v4235, %v4236
        %v4238 = vand.u32 %v4237, 4294901760
        %4239 = vmatpush1.msra.mxu0 %v4238
        %4240 = vmatprep.subr.mxu0 0.0
        %v4241 = vand.u32 %v237, 4294901760
        %v4242 = vsub.f32 %v237, %v4241
        %v4243 = vand.u32 %v4242, 4294901760
        %v4244 = vsub.f32 %v4242, %v4243
        %v4245 = vand.u32 %v4244, 4294901760
        %4246 = vmatpush1.msra.mxu0 %v4245
        %4247 = vmatprep.subr.mxu0 0.0
        %v4248 = vand.u32 %v236, 4294901760
        %v4249 = vsub.f32 %v236, %v4248
        %v4250 = vand.u32 %v4249, 4294901760
        %v4251 = vsub.f32 %v4249, %v4250
        %v4252 = vand.u32 %v4251, 4294901760
        %4253 = vmatpush1.msra.mxu0 %v4252
        %4254 = vmatprep.subr.mxu0 0.0
        %v4255 = vand.u32 %v235, 4294901760
        %v4256 = vsub.f32 %v235, %v4255
        %v4257 = vand.u32 %v4256, 4294901760
        %v4258 = vsub.f32 %v4256, %v4257
        %v4259 = vand.u32 %v4258, 4294901760
        %4260 = vmatpush1.msra.mxu0 %v4259
        %4261 = vmatprep.subr.mxu0 0.0
        %4262 = vmatpush2.msra.mxu0 0.0
        %4263 = vmatprep.subr.mxu0 0.0
        %4264 = vmatpush2.msra.mxu0 0.0
        %4265 = vmatprep.subr.mxu0 0.0
        %4266 = vmatpush2.msra.mxu0 0.0
        %4267 = vmatprep.subr.mxu0 0.0
        %4268 = vmatpush2.msra.mxu0 0.0
        %4269 = vmatprep.subr.mxu0 0.0
        %4270 = vmatpush2.msra.mxu0 0.0
        %4271 = vmatprep.subr.mxu0 0.0
        %4272 = vmatpush2.msra.mxu0 0.0
        %4273 = vmatprep.subr.mxu0 0.0
        %4274 = vmatpush2.msra.mxu0 0.0
        %4275 = vmatprep.subr.mxu0 0.0
        %4276 = vmatpush2.msra.mxu0 0.0
        %4277 = vmatprep.subr.mxu0 0.0
        %4278 = vmatpush2.msra.mxu0 0.0
        %4279 = vmatprep.subr.mxu0 0.0
        %4280 = vmatpush2.msra.mxu0 0.0
        %4281 = vmatprep.subr.mxu0 0.0
        %4282 = vmatpush2.msra.mxu0 0.0
        %4283 = vmatprep.subr.mxu0 0.0
        %4284 = vmatpush2.msra.mxu0 0.0
        %4285 = vmatprep.subr.mxu0 0.0
        %4286 = vmatpush2.msra.mxu0 0.0
        %4287 = vmatprep.subr.mxu0 0.0
        %4288 = vmatpush2.msra.mxu0 0.0
        %4289 = vmatprep.subr.mxu0 0.0
        %4290 = vmatpush2.msra.mxu0 0.0
        %4291 = vmatprep.subr.mxu0 0.0
        %4292 = vmatpush2.msra.mxu0 0.0
        %4293 = vmatprep.mubr.f32.mxu0 0.0
        %v4294 = vand.u32 %v4055, 4294901760
        %4295 = vmatmul.mubr.f32.gmra.mxu0 %v4294
        %v4296 = vpop.f32.mrf.mxu0
        %v4297 = vadd.f32 %v4146, %v4296
        %v4298 = vpop.f32.mrf.mxu0
        %4299 = vdwg.mxu0
        %4300 = vmatprep.subr.mxu0 0.0
        %v4301 = vand.u32 %v250, 4294901760
        %v4302 = vsub.f32 %v250, %v4301
        %4303 = vmatpush1.msra.mxu0 %v4302
        %4304 = vmatprep.subr.mxu0 0.0
        %v4305 = vand.u32 %v249, 4294901760
        %v4306 = vsub.f32 %v249, %v4305
        %4307 = vmatpush1.msra.mxu0 %v4306
        %4308 = vmatprep.subr.mxu0 0.0
        %v4309 = vand.u32 %v248, 4294901760
        %v4310 = vsub.f32 %v248, %v4309
        %4311 = vmatpush1.msra.mxu0 %v4310
        %4312 = vmatprep.subr.mxu0 0.0
        %v4313 = vand.u32 %v247, 4294901760
        %v4314 = vsub.f32 %v247, %v4313
        %4315 = vmatpush1.msra.mxu0 %v4314
        %4316 = vmatprep.subr.mxu0 0.0
        %v4317 = vand.u32 %v246, 4294901760
        %v4318 = vsub.f32 %v246, %v4317
        %4319 = vmatpush1.msra.mxu0 %v4318
        %4320 = vmatprep.subr.mxu0 0.0
        %v4321 = vand.u32 %v245, 4294901760
        %v4322 = vsub.f32 %v245, %v4321
        %4323 = vmatpush1.msra.mxu0 %v4322
        %4324 = vmatprep.subr.mxu0 0.0
        %v4325 = vand.u32 %v244, 4294901760
        %v4326 = vsub.f32 %v244, %v4325
        %4327 = vmatpush1.msra.mxu0 %v4326
        %4328 = vmatprep.subr.mxu0 0.0
        %v4329 = vand.u32 %v243, 4294901760
        %v4330 = vsub.f32 %v243, %v4329
        %4331 = vmatpush1.msra.mxu0 %v4330
        %4332 = vmatprep.subr.mxu0 0.0
        %v4333 = vand.u32 %v242, 4294901760
        %v4334 = vsub.f32 %v242, %v4333
        %4335 = vmatpush1.msra.mxu0 %v4334
        %4336 = vmatprep.subr.mxu0 0.0
        %v4337 = vand.u32 %v241, 4294901760
        %v4338 = vsub.f32 %v241, %v4337
        %4339 = vmatpush1.msra.mxu0 %v4338
        %4340 = vmatprep.subr.mxu0 0.0
        %v4341 = vand.u32 %v240, 4294901760
        %v4342 = vsub.f32 %v240, %v4341
        %4343 = vmatpush1.msra.mxu0 %v4342
        %4344 = vmatprep.subr.mxu0 0.0
        %v4345 = vand.u32 %v239, 4294901760
        %v4346 = vsub.f32 %v239, %v4345
        %4347 = vmatpush1.msra.mxu0 %v4346
        %4348 = vmatprep.subr.mxu0 0.0
        %v4349 = vand.u32 %v238, 4294901760
        %v4350 = vsub.f32 %v238, %v4349
        %4351 = vmatpush1.msra.mxu0 %v4350
        %4352 = vmatprep.subr.mxu0 0.0
        %v4353 = vand.u32 %v237, 4294901760
        %v4354 = vsub.f32 %v237, %v4353
        %4355 = vmatpush1.msra.mxu0 %v4354
        %4356 = vmatprep.subr.mxu0 0.0
        %v4357 = vand.u32 %v236, 4294901760
        %v4358 = vsub.f32 %v236, %v4357
        %4359 = vmatpush1.msra.mxu0 %v4358
        %4360 = vmatprep.subr.mxu0 0.0
        %v4361 = vand.u32 %v235, 4294901760
        %v4362 = vsub.f32 %v235, %v4361
        %4363 = vmatpush1.msra.mxu0 %v4362
        %4364 = vmatprep.subr.mxu0 0.0
        %4365 = vmatpush2.msra.mxu0 0.0
        %4366 = vmatprep.subr.mxu0 0.0
        %4367 = vmatpush2.msra.mxu0 0.0
        %4368 = vmatprep.subr.mxu0 0.0
        %4369 = vmatpush2.msra.mxu0 0.0
        %4370 = vmatprep.subr.mxu0 0.0
        %4371 = vmatpush2.msra.mxu0 0.0
        %4372 = vmatprep.subr.mxu0 0.0
        %4373 = vmatpush2.msra.mxu0 0.0
        %4374 = vmatprep.subr.mxu0 0.0
        %4375 = vmatpush2.msra.mxu0 0.0
        %4376 = vmatprep.subr.mxu0 0.0
        %4377 = vmatpush2.msra.mxu0 0.0
        %4378 = vmatprep.subr.mxu0 0.0
        %4379 = vmatpush2.msra.mxu0 0.0
        %4380 = vmatprep.subr.mxu0 0.0
        %4381 = vmatpush2.msra.mxu0 0.0
        %4382 = vmatprep.subr.mxu0 0.0
        %4383 = vmatpush2.msra.mxu0 0.0
        %4384 = vmatprep.subr.mxu0 0.0
        %4385 = vmatpush2.msra.mxu0 0.0
        %4386 = vmatprep.subr.mxu0 0.0
        %4387 = vmatpush2.msra.mxu0 0.0
        %4388 = vmatprep.subr.mxu0 0.0
        %4389 = vmatpush2.msra.mxu0 0.0
        %4390 = vmatprep.subr.mxu0 0.0
        %4391 = vmatpush2.msra.mxu0 0.0
        %4392 = vmatprep.subr.mxu0 0.0
        %4393 = vmatpush2.msra.mxu0 0.0
        %4394 = vmatprep.subr.mxu0 0.0
        %4395 = vmatpush2.msra.mxu0 0.0
        %4396 = vmatprep.mubr.f32.mxu0 0.0
        %v4397 = vand.u32 %v4055, 4294901760
        %v4398 = vsub.f32 %v4055, %v4397
        %4399 = vmatmul.mubr.f32.gmra.mxu0 %v4398
        %v4400 = vpop.f32.mrf.mxu0
        %v4401 = vadd.f32 %v4297, %v4400
        %v4402 = vpop.f32.mrf.mxu0
        %4403 = vdwg.mxu0
        %4404 = vmatprep.subr.mxu0 0.0
        %v4405 = vand.u32 %v250, 4294901760
        %4406 = vmatpush1.msra.mxu0 %v4405
        %4407 = vmatprep.subr.mxu0 0.0
        %v4408 = vand.u32 %v249, 4294901760
        %4409 = vmatpush1.msra.mxu0 %v4408
        %4410 = vmatprep.subr.mxu0 0.0
        %v4411 = vand.u32 %v248, 4294901760
        %4412 = vmatpush1.msra.mxu0 %v4411
        %4413 = vmatprep.subr.mxu0 0.0
        %v4414 = vand.u32 %v247, 4294901760
        %4415 = vmatpush1.msra.mxu0 %v4414
        %4416 = vmatprep.subr.mxu0 0.0
        %v4417 = vand.u32 %v246, 4294901760
        %4418 = vmatpush1.msra.mxu0 %v4417
        %4419 = vmatprep.subr.mxu0 0.0
        %v4420 = vand.u32 %v245, 4294901760
        %4421 = vmatpush1.msra.mxu0 %v4420
        %4422 = vmatprep.subr.mxu0 0.0
        %v4423 = vand.u32 %v244, 4294901760
        %4424 = vmatpush1.msra.mxu0 %v4423
        %4425 = vmatprep.subr.mxu0 0.0
        %v4426 = vand.u32 %v243, 4294901760
        %4427 = vmatpush1.msra.mxu0 %v4426
        %4428 = vmatprep.subr.mxu0 0.0
        %v4429 = vand.u32 %v242, 4294901760
        %4430 = vmatpush1.msra.mxu0 %v4429
        %4431 = vmatprep.subr.mxu0 0.0
        %v4432 = vand.u32 %v241, 4294901760
        %4433 = vmatpush1.msra.mxu0 %v4432
        %4434 = vmatprep.subr.mxu0 0.0
        %v4435 = vand.u32 %v240, 4294901760
        %4436 = vmatpush1.msra.mxu0 %v4435
        %4437 = vmatprep.subr.mxu0 0.0
        %v4438 = vand.u32 %v239, 4294901760
        %4439 = vmatpush1.msra.mxu0 %v4438
        %4440 = vmatprep.subr.mxu0 0.0
        %v4441 = vand.u32 %v238, 4294901760
        %4442 = vmatpush1.msra.mxu0 %v4441
        %4443 = vmatprep.subr.mxu0 0.0
        %v4444 = vand.u32 %v237, 4294901760
        %4445 = vmatpush1.msra.mxu0 %v4444
        %4446 = vmatprep.subr.mxu0 0.0
        %v4447 = vand.u32 %v236, 4294901760
        %4448 = vmatpush1.msra.mxu0 %v4447
        %4449 = vmatprep.subr.mxu0 0.0
        %v4450 = vand.u32 %v235, 4294901760
        %4451 = vmatpush1.msra.mxu0 %v4450
        %4452 = vmatprep.subr.mxu0 0.0
        %4453 = vmatpush2.msra.mxu0 0.0
        %4454 = vmatprep.subr.mxu0 0.0
        %4455 = vmatpush2.msra.mxu0 0.0
        %4456 = vmatprep.subr.mxu0 0.0
        %4457 = vmatpush2.msra.mxu0 0.0
        %4458 = vmatprep.subr.mxu0 0.0
        %4459 = vmatpush2.msra.mxu0 0.0
        %4460 = vmatprep.subr.mxu0 0.0
        %4461 = vmatpush2.msra.mxu0 0.0
        %4462 = vmatprep.subr.mxu0 0.0
        %4463 = vmatpush2.msra.mxu0 0.0
        %4464 = vmatprep.subr.mxu0 0.0
        %4465 = vmatpush2.msra.mxu0 0.0
        %4466 = vmatprep.subr.mxu0 0.0
        %4467 = vmatpush2.msra.mxu0 0.0
        %4468 = vmatprep.subr.mxu0 0.0
        %4469 = vmatpush2.msra.mxu0 0.0
        %4470 = vmatprep.subr.mxu0 0.0
        %4471 = vmatpush2.msra.mxu0 0.0
        %4472 = vmatprep.subr.mxu0 0.0
        %4473 = vmatpush2.msra.mxu0 0.0
        %4474 = vmatprep.subr.mxu0 0.0
        %4475 = vmatpush2.msra.mxu0 0.0
        %4476 = vmatprep.subr.mxu0 0.0
        %4477 = vmatpush2.msra.mxu0 0.0
        %4478 = vmatprep.subr.mxu0 0.0
        %4479 = vmatpush2.msra.mxu0 0.0
        %4480 = vmatprep.subr.mxu0 0.0
        %4481 = vmatpush2.msra.mxu0 0.0
        %4482 = vmatprep.subr.mxu0 0.0
        %4483 = vmatpush2.msra.mxu0 0.0
        %4484 = vmatprep.mubr.f32.mxu0 0.0
        %v4485 = vand.u32 %v4055, 4294901760
        %v4486 = vsub.f32 %v4055, %v4485
        %v4487 = vand.u32 %v4486, 4294901760
        %4488 = vmatmul.mubr.f32.gmra.mxu0 %v4487
        %v4489 = vpop.f32.mrf.mxu0
        %v4490 = vadd.f32 %v4401, %v4489
        %v4491 = vpop.f32.mrf.mxu0
        %4492 = vdwg.mxu0
        %4493 = vmatprep.subr.mxu0 0.0
        %v4494 = vand.u32 %v250, 4294901760
        %v4495 = vsub.f32 %v250, %v4494
        %v4496 = vand.u32 %v4495, 4294901760
        %4497 = vmatpush1.msra.mxu0 %v4496
        %4498 = vmatprep.subr.mxu0 0.0
        %v4499 = vand.u32 %v249, 4294901760
        %v4500 = vsub.f32 %v249, %v4499
        %v4501 = vand.u32 %v4500, 4294901760
        %4502 = vmatpush1.msra.mxu0 %v4501
        %4503 = vmatprep.subr.mxu0 0.0
        %v4504 = vand.u32 %v248, 4294901760
        %v4505 = vsub.f32 %v248, %v4504
        %v4506 = vand.u32 %v4505, 4294901760
        %4507 = vmatpush1.msra.mxu0 %v4506
        %4508 = vmatprep.subr.mxu0 0.0
        %v4509 = vand.u32 %v247, 4294901760
        %v4510 = vsub.f32 %v247, %v4509
        %v4511 = vand.u32 %v4510, 4294901760
        %4512 = vmatpush1.msra.mxu0 %v4511
        %4513 = vmatprep.subr.mxu0 0.0
        %v4514 = vand.u32 %v246, 4294901760
        %v4515 = vsub.f32 %v246, %v4514
        %v4516 = vand.u32 %v4515, 4294901760
        %4517 = vmatpush1.msra.mxu0 %v4516
        %4518 = vmatprep.subr.mxu0 0.0
        %v4519 = vand.u32 %v245, 4294901760
        %v4520 = vsub.f32 %v245, %v4519
        %v4521 = vand.u32 %v4520, 4294901760
        %4522 = vmatpush1.msra.mxu0 %v4521
        %4523 = vmatprep.subr.mxu0 0.0
        %v4524 = vand.u32 %v244, 4294901760
        %v4525 = vsub.f32 %v244, %v4524
        %v4526 = vand.u32 %v4525, 4294901760
        %4527 = vmatpush1.msra.mxu0 %v4526
        %4528 = vmatprep.subr.mxu0 0.0
        %v4529 = vand.u32 %v243, 4294901760
        %v4530 = vsub.f32 %v243, %v4529
        %v4531 = vand.u32 %v4530, 4294901760
        %4532 = vmatpush1.msra.mxu0 %v4531
        %4533 = vmatprep.subr.mxu0 0.0
        %v4534 = vand.u32 %v242, 4294901760
        %v4535 = vsub.f32 %v242, %v4534
        %v4536 = vand.u32 %v4535, 4294901760
        %4537 = vmatpush1.msra.mxu0 %v4536
        %4538 = vmatprep.subr.mxu0 0.0
        %v4539 = vand.u32 %v241, 4294901760
        %v4540 = vsub.f32 %v241, %v4539
        %v4541 = vand.u32 %v4540, 4294901760
        %4542 = vmatpush1.msra.mxu0 %v4541
        %4543 = vmatprep.subr.mxu0 0.0
        %v4544 = vand.u32 %v240, 4294901760
        %v4545 = vsub.f32 %v240, %v4544
        %v4546 = vand.u32 %v4545, 4294901760
        %4547 = vmatpush1.msra.mxu0 %v4546
        %4548 = vmatprep.subr.mxu0 0.0
        %v4549 = vand.u32 %v239, 4294901760
        %v4550 = vsub.f32 %v239, %v4549
        %v4551 = vand.u32 %v4550, 4294901760
        %4552 = vmatpush1.msra.mxu0 %v4551
        %4553 = vmatprep.subr.mxu0 0.0
        %v4554 = vand.u32 %v238, 4294901760
        %v4555 = vsub.f32 %v238, %v4554
        %v4556 = vand.u32 %v4555, 4294901760
        %4557 = vmatpush1.msra.mxu0 %v4556
        %4558 = vmatprep.subr.mxu0 0.0
        %v4559 = vand.u32 %v237, 4294901760
        %v4560 = vsub.f32 %v237, %v4559
        %v4561 = vand.u32 %v4560, 4294901760
        %4562 = vmatpush1.msra.mxu0 %v4561
        %4563 = vmatprep.subr.mxu0 0.0
        %v4564 = vand.u32 %v236, 4294901760
        %v4565 = vsub.f32 %v236, %v4564
        %v4566 = vand.u32 %v4565, 4294901760
        %4567 = vmatpush1.msra.mxu0 %v4566
        %4568 = vmatprep.subr.mxu0 0.0
        %v4569 = vand.u32 %v235, 4294901760
        %v4570 = vsub.f32 %v235, %v4569
        %v4571 = vand.u32 %v4570, 4294901760
        %4572 = vmatpush1.msra.mxu0 %v4571
        %4573 = vmatprep.subr.mxu0 0.0
        %4574 = vmatpush2.msra.mxu0 0.0
        %4575 = vmatprep.subr.mxu0 0.0
        %4576 = vmatpush2.msra.mxu0 0.0
        %4577 = vmatprep.subr.mxu0 0.0
        %4578 = vmatpush2.msra.mxu0 0.0
        %4579 = vmatprep.subr.mxu0 0.0
        %4580 = vmatpush2.msra.mxu0 0.0
        %4581 = vmatprep.subr.mxu0 0.0
        %4582 = vmatpush2.msra.mxu0 0.0
        %4583 = vmatprep.subr.mxu0 0.0
        %4584 = vmatpush2.msra.mxu0 0.0
        %4585 = vmatprep.subr.mxu0 0.0
        %4586 = vmatpush2.msra.mxu0 0.0
        %4587 = vmatprep.subr.mxu0 0.0
        %4588 = vmatpush2.msra.mxu0 0.0
        %4589 = vmatprep.subr.mxu0 0.0
        %4590 = vmatpush2.msra.mxu0 0.0
        %4591 = vmatprep.subr.mxu0 0.0
        %4592 = vmatpush2.msra.mxu0 0.0
        %4593 = vmatprep.subr.mxu0 0.0
        %4594 = vmatpush2.msra.mxu0 0.0
        %4595 = vmatprep.subr.mxu0 0.0
        %4596 = vmatpush2.msra.mxu0 0.0
        %4597 = vmatprep.subr.mxu0 0.0
        %4598 = vmatpush2.msra.mxu0 0.0
        %4599 = vmatprep.subr.mxu0 0.0
        %4600 = vmatpush2.msra.mxu0 0.0
        %4601 = vmatprep.subr.mxu0 0.0
        %4602 = vmatpush2.msra.mxu0 0.0
        %4603 = vmatprep.subr.mxu0 0.0
        %4604 = vmatpush2.msra.mxu0 0.0
        %4605 = vmatprep.mubr.f32.mxu0 0.0
        %v4606 = vand.u32 %v4055, 4294901760
        %4607 = vmatmul.mubr.f32.gmra.mxu0 %v4606
        %v4608 = vpop.f32.mrf.mxu0
        %v4609 = vadd.f32 %v4490, %v4608
        %v4610 = vpop.f32.mrf.mxu0
        %4611 = vdwg.mxu0
        %4612 = vmatprep.subr.mxu0 0.0
        %v4613 = vand.u32 %v250, 4294901760
        %4614 = vmatpush1.msra.mxu0 %v4613
        %4615 = vmatprep.subr.mxu0 0.0
        %v4616 = vand.u32 %v249, 4294901760
        %4617 = vmatpush1.msra.mxu0 %v4616
        %4618 = vmatprep.subr.mxu0 0.0
        %v4619 = vand.u32 %v248, 4294901760
        %4620 = vmatpush1.msra.mxu0 %v4619
        %4621 = vmatprep.subr.mxu0 0.0
        %v4622 = vand.u32 %v247, 4294901760
        %4623 = vmatpush1.msra.mxu0 %v4622
        %4624 = vmatprep.subr.mxu0 0.0
        %v4625 = vand.u32 %v246, 4294901760
        %4626 = vmatpush1.msra.mxu0 %v4625
        %4627 = vmatprep.subr.mxu0 0.0
        %v4628 = vand.u32 %v245, 4294901760
        %4629 = vmatpush1.msra.mxu0 %v4628
        %4630 = vmatprep.subr.mxu0 0.0
        %v4631 = vand.u32 %v244, 4294901760
        %4632 = vmatpush1.msra.mxu0 %v4631
        %4633 = vmatprep.subr.mxu0 0.0
        %v4634 = vand.u32 %v243, 4294901760
        %4635 = vmatpush1.msra.mxu0 %v4634
        %4636 = vmatprep.subr.mxu0 0.0
        %v4637 = vand.u32 %v242, 4294901760
        %4638 = vmatpush1.msra.mxu0 %v4637
        %4639 = vmatprep.subr.mxu0 0.0
        %v4640 = vand.u32 %v241, 4294901760
        %4641 = vmatpush1.msra.mxu0 %v4640
        %4642 = vmatprep.subr.mxu0 0.0
        %v4643 = vand.u32 %v240, 4294901760
        %4644 = vmatpush1.msra.mxu0 %v4643
        %4645 = vmatprep.subr.mxu0 0.0
        %v4646 = vand.u32 %v239, 4294901760
        %4647 = vmatpush1.msra.mxu0 %v4646
        %4648 = vmatprep.subr.mxu0 0.0
        %v4649 = vand.u32 %v238, 4294901760
        %4650 = vmatpush1.msra.mxu0 %v4649
        %4651 = vmatprep.subr.mxu0 0.0
        %v4652 = vand.u32 %v237, 4294901760
        %4653 = vmatpush1.msra.mxu0 %v4652
        %4654 = vmatprep.subr.mxu0 0.0
        %v4655 = vand.u32 %v236, 4294901760
        %4656 = vmatpush1.msra.mxu0 %v4655
        %4657 = vmatprep.subr.mxu0 0.0
        %v4658 = vand.u32 %v235, 4294901760
        %4659 = vmatpush1.msra.mxu0 %v4658
        %4660 = vmatprep.subr.mxu0 0.0
        %4661 = vmatpush2.msra.mxu0 0.0
        %4662 = vmatprep.subr.mxu0 0.0
        %4663 = vmatpush2.msra.mxu0 0.0
        %4664 = vmatprep.subr.mxu0 0.0
        %4665 = vmatpush2.msra.mxu0 0.0
        %4666 = vmatprep.subr.mxu0 0.0
        %4667 = vmatpush2.msra.mxu0 0.0
        %4668 = vmatprep.subr.mxu0 0.0
        %4669 = vmatpush2.msra.mxu0 0.0
        %4670 = vmatprep.subr.mxu0 0.0
        %4671 = vmatpush2.msra.mxu0 0.0
        %4672 = vmatprep.subr.mxu0 0.0
        %4673 = vmatpush2.msra.mxu0 0.0
        %4674 = vmatprep.subr.mxu0 0.0
        %4675 = vmatpush2.msra.mxu0 0.0
        %4676 = vmatprep.subr.mxu0 0.0
        %4677 = vmatpush2.msra.mxu0 0.0
        %4678 = vmatprep.subr.mxu0 0.0
        %4679 = vmatpush2.msra.mxu0 0.0
        %4680 = vmatprep.subr.mxu0 0.0
        %4681 = vmatpush2.msra.mxu0 0.0
        %4682 = vmatprep.subr.mxu0 0.0
        %4683 = vmatpush2.msra.mxu0 0.0
        %4684 = vmatprep.subr.mxu0 0.0
        %4685 = vmatpush2.msra.mxu0 0.0
        %4686 = vmatprep.subr.mxu0 0.0
        %4687 = vmatpush2.msra.mxu0 0.0
        %4688 = vmatprep.subr.mxu0 0.0
        %4689 = vmatpush2.msra.mxu0 0.0
        %4690 = vmatprep.subr.mxu0 0.0
        %4691 = vmatpush2.msra.mxu0 0.0
        %4692 = vmatprep.mubr.f32.mxu0 0.0
        %v4693 = vand.u32 %v4055, 4294901760
        %4694 = vmatmul.mubr.f32.gmra.mxu0 %v4693
        %v4695 = vpop.f32.mrf.mxu0
        %v4696 = vadd.f32 %v4609, %v4695
        %v4697 = vpop.f32.mrf.mxu0
        %4698 = vdwg.mxu0
        %v4699 = vmul.f32 %v269, %v289
        %v4700 = vmul.f32 %v270, %v290
        %4701 = vmatprep.subr.mxu0 0.0
        %4702 = vmatpush1.msra.mxu0 0.0
        %4703 = vmatprep.subr.mxu0 0.0
        %4704 = vmatpush1.msra.mxu0 0.0
        %4705 = vmatprep.subr.mxu0 0.0
        %4706 = vmatpush1.msra.mxu0 0.0
        %4707 = vmatprep.subr.mxu0 0.0
        %4708 = vmatpush1.msra.mxu0 0.0
        %4709 = vmatprep.subr.mxu0 0.0
        %4710 = vmatpush1.msra.mxu0 0.0
        %4711 = vmatprep.subr.mxu0 0.0
        %4712 = vmatpush1.msra.mxu0 0.0
        %4713 = vmatprep.subr.mxu0 0.0
        %4714 = vmatpush1.msra.mxu0 0.0
        %4715 = vmatprep.subr.mxu0 0.0
        %4716 = vmatpush1.msra.mxu0 0.0
        %4717 = vmatprep.subr.mxu0 0.0
        %4718 = vmatpush1.msra.mxu0 0.0
        %4719 = vmatprep.subr.mxu0 0.0
        %4720 = vmatpush1.msra.mxu0 0.0
        %4721 = vmatprep.subr.mxu0 0.0
        %4722 = vmatpush1.msra.mxu0 0.0
        %4723 = vmatprep.subr.mxu0 0.0
        %4724 = vmatpush1.msra.mxu0 0.0
        %4725 = vmatprep.subr.mxu0 0.0
        %4726 = vmatpush1.msra.mxu0 0.0
        %4727 = vmatprep.subr.mxu0 0.0
        %4728 = vmatpush1.msra.mxu0 0.0
        %4729 = vmatprep.subr.mxu0 0.0
        %v4730 = vand.u32 %v4700, 4294901760
        %4731 = vmatpush1.msra.mxu0 %v4730
        %4732 = vmatprep.subr.mxu0 0.0
        %v4733 = vand.u32 %v4699, 4294901760
        %4734 = vmatpush1.msra.mxu0 %v4733
        %4735 = vmatprep.subr.mxu0 0.0
        %4736 = vmatpush2.msra.mxu0 0.0
        %4737 = vmatprep.subr.mxu0 0.0
        %4738 = vmatpush2.msra.mxu0 0.0
        %4739 = vmatprep.subr.mxu0 0.0
        %4740 = vmatpush2.msra.mxu0 0.0
        %4741 = vmatprep.subr.mxu0 0.0
        %4742 = vmatpush2.msra.mxu0 0.0
        %4743 = vmatprep.subr.mxu0 0.0
        %4744 = vmatpush2.msra.mxu0 0.0
        %4745 = vmatprep.subr.mxu0 0.0
        %4746 = vmatpush2.msra.mxu0 0.0
        %4747 = vmatprep.subr.mxu0 0.0
        %4748 = vmatpush2.msra.mxu0 0.0
        %4749 = vmatprep.subr.mxu0 0.0
        %4750 = vmatpush2.msra.mxu0 0.0
        %4751 = vmatprep.subr.mxu0 0.0
        %4752 = vmatpush2.msra.mxu0 0.0
        %4753 = vmatprep.subr.mxu0 0.0
        %4754 = vmatpush2.msra.mxu0 0.0
        %4755 = vmatprep.subr.mxu0 0.0
        %4756 = vmatpush2.msra.mxu0 0.0
        %4757 = vmatprep.subr.mxu0 0.0
        %4758 = vmatpush2.msra.mxu0 0.0
        %4759 = vmatprep.subr.mxu0 0.0
        %4760 = vmatpush2.msra.mxu0 0.0
        %4761 = vmatprep.subr.mxu0 0.0
        %4762 = vmatpush2.msra.mxu0 0.0
        %4763 = vmatprep.subr.mxu0 0.0
        %4764 = vmatpush2.msra.mxu0 0.0
        %4765 = vmatprep.subr.mxu0 0.0
        %4766 = vmatpush2.msra.mxu0 0.0
        %4767 = vmatprep.mubr.f32.mxu0 0.0
        %v4768 = vand.u32 %v293, 4294901760
        %v4769 = vsub.f32 %v293, %v4768
        %v4770 = vand.u32 %v4769, 4294901760
        %v4771 = vsub.f32 %v4769, %v4770
        %v4772 = vand.u32 %v4771, 4294901760
        %4773 = vmatmul.mubr.f32.gmra.mxu0 %v4772
        %v4774 = vpop.f32.mrf.mxu0
        %v4775 = vadd.f32 0.0, %v4774
        %v4776 = vpop.f32.mrf.mxu0
        %4777 = vdwg.mxu0
        %4778 = vmatprep.subr.mxu0 0.0
        %4779 = vmatpush1.msra.mxu0 0.0
        %4780 = vmatprep.subr.mxu0 0.0
        %4781 = vmatpush1.msra.mxu0 0.0
        %4782 = vmatprep.subr.mxu0 0.0
        %4783 = vmatpush1.msra.mxu0 0.0
        %4784 = vmatprep.subr.mxu0 0.0
        %4785 = vmatpush1.msra.mxu0 0.0
        %4786 = vmatprep.subr.mxu0 0.0
        %4787 = vmatpush1.msra.mxu0 0.0
        %4788 = vmatprep.subr.mxu0 0.0
        %4789 = vmatpush1.msra.mxu0 0.0
        %4790 = vmatprep.subr.mxu0 0.0
        %4791 = vmatpush1.msra.mxu0 0.0
        %4792 = vmatprep.subr.mxu0 0.0
        %4793 = vmatpush1.msra.mxu0 0.0
        %4794 = vmatprep.subr.mxu0 0.0
        %4795 = vmatpush1.msra.mxu0 0.0
        %4796 = vmatprep.subr.mxu0 0.0
        %4797 = vmatpush1.msra.mxu0 0.0
        %4798 = vmatprep.subr.mxu0 0.0
        %4799 = vmatpush1.msra.mxu0 0.0
        %4800 = vmatprep.subr.mxu0 0.0
        %4801 = vmatpush1.msra.mxu0 0.0
        %4802 = vmatprep.subr.mxu0 0.0
        %4803 = vmatpush1.msra.mxu0 0.0
        %4804 = vmatprep.subr.mxu0 0.0
        %4805 = vmatpush1.msra.mxu0 0.0
        %4806 = vmatprep.subr.mxu0 0.0
        %v4807 = vand.u32 %v4700, 4294901760
        %v4808 = vsub.f32 %v4700, %v4807
        %v4809 = vand.u32 %v4808, 4294901760
        %v4810 = vsub.f32 %v4808, %v4809
        %v4811 = vand.u32 %v4810, 4294901760
        %4812 = vmatpush1.msra.mxu0 %v4811
        %4813 = vmatprep.subr.mxu0 0.0
        %v4814 = vand.u32 %v4699, 4294901760
        %v4815 = vsub.f32 %v4699, %v4814
        %v4816 = vand.u32 %v4815, 4294901760
        %v4817 = vsub.f32 %v4815, %v4816
        %v4818 = vand.u32 %v4817, 4294901760
        %4819 = vmatpush1.msra.mxu0 %v4818
        %4820 = vmatprep.subr.mxu0 0.0
        %4821 = vmatpush2.msra.mxu0 0.0
        %4822 = vmatprep.subr.mxu0 0.0
        %4823 = vmatpush2.msra.mxu0 0.0
        %4824 = vmatprep.subr.mxu0 0.0
        %4825 = vmatpush2.msra.mxu0 0.0
        %4826 = vmatprep.subr.mxu0 0.0
        %4827 = vmatpush2.msra.mxu0 0.0
        %4828 = vmatprep.subr.mxu0 0.0
        %4829 = vmatpush2.msra.mxu0 0.0
        %4830 = vmatprep.subr.mxu0 0.0
        %4831 = vmatpush2.msra.mxu0 0.0
        %4832 = vmatprep.subr.mxu0 0.0
        %4833 = vmatpush2.msra.mxu0 0.0
        %4834 = vmatprep.subr.mxu0 0.0
        %4835 = vmatpush2.msra.mxu0 0.0
        %4836 = vmatprep.subr.mxu0 0.0
        %4837 = vmatpush2.msra.mxu0 0.0
        %4838 = vmatprep.subr.mxu0 0.0
        %4839 = vmatpush2.msra.mxu0 0.0
        %4840 = vmatprep.subr.mxu0 0.0
        %4841 = vmatpush2.msra.mxu0 0.0
        %4842 = vmatprep.subr.mxu0 0.0
        %4843 = vmatpush2.msra.mxu0 0.0
        %4844 = vmatprep.subr.mxu0 0.0
        %4845 = vmatpush2.msra.mxu0 0.0
        %4846 = vmatprep.subr.mxu0 0.0
        %4847 = vmatpush2.msra.mxu0 0.0
        %4848 = vmatprep.subr.mxu0 0.0
        %4849 = vmatpush2.msra.mxu0 0.0
        %4850 = vmatprep.subr.mxu0 0.0
        %4851 = vmatpush2.msra.mxu0 0.0
        %4852 = vmatprep.mubr.f32.mxu0 0.0
        %v4853 = vand.u32 %v293, 4294901760
        %4854 = vmatmul.mubr.f32.gmra.mxu0 %v4853
        %v4855 = vpop.f32.mrf.mxu0
        %v4856 = vadd.f32 %v4775, %v4855
        %v4857 = vpop.f32.mrf.mxu0
        %4858 = vdwg.mxu0
        %4859 = vmatprep.subr.mxu0 0.0
        %4860 = vmatpush1.msra.mxu0 0.0
        %4861 = vmatprep.subr.mxu0 0.0
        %4862 = vmatpush1.msra.mxu0 0.0
        %4863 = vmatprep.subr.mxu0 0.0
        %4864 = vmatpush1.msra.mxu0 0.0
        %4865 = vmatprep.subr.mxu0 0.0
        %4866 = vmatpush1.msra.mxu0 0.0
        %4867 = vmatprep.subr.mxu0 0.0
        %4868 = vmatpush1.msra.mxu0 0.0
        %4869 = vmatprep.subr.mxu0 0.0
        %4870 = vmatpush1.msra.mxu0 0.0
        %4871 = vmatprep.subr.mxu0 0.0
        %4872 = vmatpush1.msra.mxu0 0.0
        %4873 = vmatprep.subr.mxu0 0.0
        %4874 = vmatpush1.msra.mxu0 0.0
        %4875 = vmatprep.subr.mxu0 0.0
        %4876 = vmatpush1.msra.mxu0 0.0
        %4877 = vmatprep.subr.mxu0 0.0
        %4878 = vmatpush1.msra.mxu0 0.0
        %4879 = vmatprep.subr.mxu0 0.0
        %4880 = vmatpush1.msra.mxu0 0.0
        %4881 = vmatprep.subr.mxu0 0.0
        %4882 = vmatpush1.msra.mxu0 0.0
        %4883 = vmatprep.subr.mxu0 0.0
        %4884 = vmatpush1.msra.mxu0 0.0
        %4885 = vmatprep.subr.mxu0 0.0
        %4886 = vmatpush1.msra.mxu0 0.0
        %4887 = vmatprep.subr.mxu0 0.0
        %v4888 = vand.u32 %v4700, 4294901760
        %v4889 = vsub.f32 %v4700, %v4888
        %4890 = vmatpush1.msra.mxu0 %v4889
        %4891 = vmatprep.subr.mxu0 0.0
        %v4892 = vand.u32 %v4699, 4294901760
        %v4893 = vsub.f32 %v4699, %v4892
        %4894 = vmatpush1.msra.mxu0 %v4893
        %4895 = vmatprep.subr.mxu0 0.0
        %4896 = vmatpush2.msra.mxu0 0.0
        %4897 = vmatprep.subr.mxu0 0.0
        %4898 = vmatpush2.msra.mxu0 0.0
        %4899 = vmatprep.subr.mxu0 0.0
        %4900 = vmatpush2.msra.mxu0 0.0
        %4901 = vmatprep.subr.mxu0 0.0
        %4902 = vmatpush2.msra.mxu0 0.0
        %4903 = vmatprep.subr.mxu0 0.0
        %4904 = vmatpush2.msra.mxu0 0.0
        %4905 = vmatprep.subr.mxu0 0.0
        %4906 = vmatpush2.msra.mxu0 0.0
        %4907 = vmatprep.subr.mxu0 0.0
        %4908 = vmatpush2.msra.mxu0 0.0
        %4909 = vmatprep.subr.mxu0 0.0
        %4910 = vmatpush2.msra.mxu0 0.0
        %4911 = vmatprep.subr.mxu0 0.0
        %4912 = vmatpush2.msra.mxu0 0.0
        %4913 = vmatprep.subr.mxu0 0.0
        %4914 = vmatpush2.msra.mxu0 0.0
        %4915 = vmatprep.subr.mxu0 0.0
        %4916 = vmatpush2.msra.mxu0 0.0
        %4917 = vmatprep.subr.mxu0 0.0
        %4918 = vmatpush2.msra.mxu0 0.0
        %4919 = vmatprep.subr.mxu0 0.0
        %4920 = vmatpush2.msra.mxu0 0.0
        %4921 = vmatprep.subr.mxu0 0.0
        %4922 = vmatpush2.msra.mxu0 0.0
        %4923 = vmatprep.subr.mxu0 0.0
        %4924 = vmatpush2.msra.mxu0 0.0
        %4925 = vmatprep.subr.mxu0 0.0
        %4926 = vmatpush2.msra.mxu0 0.0
        %4927 = vmatprep.mubr.f32.mxu0 0.0
        %v4928 = vand.u32 %v293, 4294901760
        %v4929 = vsub.f32 %v293, %v4928
        %4930 = vmatmul.mubr.f32.gmra.mxu0 %v4929
        %v4931 = vpop.f32.mrf.mxu0
        %v4932 = vadd.f32 %v4856, %v4931
        %v4933 = vpop.f32.mrf.mxu0
        %4934 = vdwg.mxu0
        %4935 = vmatprep.subr.mxu0 0.0
        %4936 = vmatpush1.msra.mxu0 0.0
        %4937 = vmatprep.subr.mxu0 0.0
        %4938 = vmatpush1.msra.mxu0 0.0
        %4939 = vmatprep.subr.mxu0 0.0
        %4940 = vmatpush1.msra.mxu0 0.0
        %4941 = vmatprep.subr.mxu0 0.0
        %4942 = vmatpush1.msra.mxu0 0.0
        %4943 = vmatprep.subr.mxu0 0.0
        %4944 = vmatpush1.msra.mxu0 0.0
        %4945 = vmatprep.subr.mxu0 0.0
        %4946 = vmatpush1.msra.mxu0 0.0
        %4947 = vmatprep.subr.mxu0 0.0
        %4948 = vmatpush1.msra.mxu0 0.0
        %4949 = vmatprep.subr.mxu0 0.0
        %4950 = vmatpush1.msra.mxu0 0.0
        %4951 = vmatprep.subr.mxu0 0.0
        %4952 = vmatpush1.msra.mxu0 0.0
        %4953 = vmatprep.subr.mxu0 0.0
        %4954 = vmatpush1.msra.mxu0 0.0
        %4955 = vmatprep.subr.mxu0 0.0
        %4956 = vmatpush1.msra.mxu0 0.0
        %4957 = vmatprep.subr.mxu0 0.0
        %4958 = vmatpush1.msra.mxu0 0.0
        %4959 = vmatprep.subr.mxu0 0.0
        %4960 = vmatpush1.msra.mxu0 0.0
        %4961 = vmatprep.subr.mxu0 0.0
        %4962 = vmatpush1.msra.mxu0 0.0
        %4963 = vmatprep.subr.mxu0 0.0
        %v4964 = vand.u32 %v4700, 4294901760
        %4965 = vmatpush1.msra.mxu0 %v4964
        %4966 = vmatprep.subr.mxu0 0.0
        %v4967 = vand.u32 %v4699, 4294901760
        %4968 = vmatpush1.msra.mxu0 %v4967
        %4969 = vmatprep.subr.mxu0 0.0
        %4970 = vmatpush2.msra.mxu0 0.0
        %4971 = vmatprep.subr.mxu0 0.0
        %4972 = vmatpush2.msra.mxu0 0.0
        %4973 = vmatprep.subr.mxu0 0.0
        %4974 = vmatpush2.msra.mxu0 0.0
        %4975 = vmatprep.subr.mxu0 0.0
        %4976 = vmatpush2.msra.mxu0 0.0
        %4977 = vmatprep.subr.mxu0 0.0
        %4978 = vmatpush2.msra.mxu0 0.0
        %4979 = vmatprep.subr.mxu0 0.0
        %4980 = vmatpush2.msra.mxu0 0.0
        %4981 = vmatprep.subr.mxu0 0.0
        %4982 = vmatpush2.msra.mxu0 0.0
        %4983 = vmatprep.subr.mxu0 0.0
        %4984 = vmatpush2.msra.mxu0 0.0
        %4985 = vmatprep.subr.mxu0 0.0
        %4986 = vmatpush2.msra.mxu0 0.0
        %4987 = vmatprep.subr.mxu0 0.0
        %4988 = vmatpush2.msra.mxu0 0.0
        %4989 = vmatprep.subr.mxu0 0.0
        %4990 = vmatpush2.msra.mxu0 0.0
        %4991 = vmatprep.subr.mxu0 0.0
        %4992 = vmatpush2.msra.mxu0 0.0
        %4993 = vmatprep.subr.mxu0 0.0
        %4994 = vmatpush2.msra.mxu0 0.0
        %4995 = vmatprep.subr.mxu0 0.0
        %4996 = vmatpush2.msra.mxu0 0.0
        %4997 = vmatprep.subr.mxu0 0.0
        %4998 = vmatpush2.msra.mxu0 0.0
        %4999 = vmatprep.subr.mxu0 0.0
        %5000 = vmatpush2.msra.mxu0 0.0
        %5001 = vmatprep.mubr.f32.mxu0 0.0
        %v5002 = vand.u32 %v293, 4294901760
        %v5003 = vsub.f32 %v293, %v5002
        %v5004 = vand.u32 %v5003, 4294901760
        %5005 = vmatmul.mubr.f32.gmra.mxu0 %v5004
        %v5006 = vpop.f32.mrf.mxu0
        %v5007 = vadd.f32 %v4932, %v5006
        %v5008 = vpop.f32.mrf.mxu0
        %5009 = vdwg.mxu0
        %5010 = vmatprep.subr.mxu0 0.0
        %5011 = vmatpush1.msra.mxu0 0.0
        %5012 = vmatprep.subr.mxu0 0.0
        %5013 = vmatpush1.msra.mxu0 0.0
        %5014 = vmatprep.subr.mxu0 0.0
        %5015 = vmatpush1.msra.mxu0 0.0
        %5016 = vmatprep.subr.mxu0 0.0
        %5017 = vmatpush1.msra.mxu0 0.0
        %5018 = vmatprep.subr.mxu0 0.0
        %5019 = vmatpush1.msra.mxu0 0.0
        %5020 = vmatprep.subr.mxu0 0.0
        %5021 = vmatpush1.msra.mxu0 0.0
        %5022 = vmatprep.subr.mxu0 0.0
        %5023 = vmatpush1.msra.mxu0 0.0
        %5024 = vmatprep.subr.mxu0 0.0
        %5025 = vmatpush1.msra.mxu0 0.0
        %5026 = vmatprep.subr.mxu0 0.0
        %5027 = vmatpush1.msra.mxu0 0.0
        %5028 = vmatprep.subr.mxu0 0.0
        %5029 = vmatpush1.msra.mxu0 0.0
        %5030 = vmatprep.subr.mxu0 0.0
        %5031 = vmatpush1.msra.mxu0 0.0
        %5032 = vmatprep.subr.mxu0 0.0
        %5033 = vmatpush1.msra.mxu0 0.0
        %5034 = vmatprep.subr.mxu0 0.0
        %5035 = vmatpush1.msra.mxu0 0.0
        %5036 = vmatprep.subr.mxu0 0.0
        %5037 = vmatpush1.msra.mxu0 0.0
        %5038 = vmatprep.subr.mxu0 0.0
        %v5039 = vand.u32 %v4700, 4294901760
        %v5040 = vsub.f32 %v4700, %v5039
        %v5041 = vand.u32 %v5040, 4294901760
        %5042 = vmatpush1.msra.mxu0 %v5041
        %5043 = vmatprep.subr.mxu0 0.0
        %v5044 = vand.u32 %v4699, 4294901760
        %v5045 = vsub.f32 %v4699, %v5044
        %v5046 = vand.u32 %v5045, 4294901760
        %5047 = vmatpush1.msra.mxu0 %v5046
        %5048 = vmatprep.subr.mxu0 0.0
        %5049 = vmatpush2.msra.mxu0 0.0
        %5050 = vmatprep.subr.mxu0 0.0
        %5051 = vmatpush2.msra.mxu0 0.0
        %5052 = vmatprep.subr.mxu0 0.0
        %5053 = vmatpush2.msra.mxu0 0.0
        %5054 = vmatprep.subr.mxu0 0.0
        %5055 = vmatpush2.msra.mxu0 0.0
        %5056 = vmatprep.subr.mxu0 0.0
        %5057 = vmatpush2.msra.mxu0 0.0
        %5058 = vmatprep.subr.mxu0 0.0
        %5059 = vmatpush2.msra.mxu0 0.0
        %5060 = vmatprep.subr.mxu0 0.0
        %5061 = vmatpush2.msra.mxu0 0.0
        %5062 = vmatprep.subr.mxu0 0.0
        %5063 = vmatpush2.msra.mxu0 0.0
        %5064 = vmatprep.subr.mxu0 0.0
        %5065 = vmatpush2.msra.mxu0 0.0
        %5066 = vmatprep.subr.mxu0 0.0
        %5067 = vmatpush2.msra.mxu0 0.0
        %5068 = vmatprep.subr.mxu0 0.0
        %5069 = vmatpush2.msra.mxu0 0.0
        %5070 = vmatprep.subr.mxu0 0.0
        %5071 = vmatpush2.msra.mxu0 0.0
        %5072 = vmatprep.subr.mxu0 0.0
        %5073 = vmatpush2.msra.mxu0 0.0
        %5074 = vmatprep.subr.mxu0 0.0
        %5075 = vmatpush2.msra.mxu0 0.0
        %5076 = vmatprep.subr.mxu0 0.0
        %5077 = vmatpush2.msra.mxu0 0.0
        %5078 = vmatprep.subr.mxu0 0.0
        %5079 = vmatpush2.msra.mxu0 0.0
        %5080 = vmatprep.mubr.f32.mxu0 0.0
        %v5081 = vand.u32 %v293, 4294901760
        %5082 = vmatmul.mubr.f32.gmra.mxu0 %v5081
        %v5083 = vpop.f32.mrf.mxu0
        %v5084 = vadd.f32 %v5007, %v5083
        %v5085 = vpop.f32.mrf.mxu0
        %5086 = vdwg.mxu0
        %5087 = vmatprep.subr.mxu0 0.0
        %5088 = vmatpush1.msra.mxu0 0.0
        %5089 = vmatprep.subr.mxu0 0.0
        %5090 = vmatpush1.msra.mxu0 0.0
        %5091 = vmatprep.subr.mxu0 0.0
        %5092 = vmatpush1.msra.mxu0 0.0
        %5093 = vmatprep.subr.mxu0 0.0
        %5094 = vmatpush1.msra.mxu0 0.0
        %5095 = vmatprep.subr.mxu0 0.0
        %5096 = vmatpush1.msra.mxu0 0.0
        %5097 = vmatprep.subr.mxu0 0.0
        %5098 = vmatpush1.msra.mxu0 0.0
        %5099 = vmatprep.subr.mxu0 0.0
        %5100 = vmatpush1.msra.mxu0 0.0
        %5101 = vmatprep.subr.mxu0 0.0
        %5102 = vmatpush1.msra.mxu0 0.0
        %5103 = vmatprep.subr.mxu0 0.0
        %5104 = vmatpush1.msra.mxu0 0.0
        %5105 = vmatprep.subr.mxu0 0.0
        %5106 = vmatpush1.msra.mxu0 0.0
        %5107 = vmatprep.subr.mxu0 0.0
        %5108 = vmatpush1.msra.mxu0 0.0
        %5109 = vmatprep.subr.mxu0 0.0
        %5110 = vmatpush1.msra.mxu0 0.0
        %5111 = vmatprep.subr.mxu0 0.0
        %5112 = vmatpush1.msra.mxu0 0.0
        %5113 = vmatprep.subr.mxu0 0.0
        %5114 = vmatpush1.msra.mxu0 0.0
        %5115 = vmatprep.subr.mxu0 0.0
        %v5116 = vand.u32 %v4700, 4294901760
        %5117 = vmatpush1.msra.mxu0 %v5116
        %5118 = vmatprep.subr.mxu0 0.0
        %v5119 = vand.u32 %v4699, 4294901760
        %5120 = vmatpush1.msra.mxu0 %v5119
        %5121 = vmatprep.subr.mxu0 0.0
        %5122 = vmatpush2.msra.mxu0 0.0
        %5123 = vmatprep.subr.mxu0 0.0
        %5124 = vmatpush2.msra.mxu0 0.0
        %5125 = vmatprep.subr.mxu0 0.0
        %5126 = vmatpush2.msra.mxu0 0.0
        %5127 = vmatprep.subr.mxu0 0.0
        %5128 = vmatpush2.msra.mxu0 0.0
        %5129 = vmatprep.subr.mxu0 0.0
        %5130 = vmatpush2.msra.mxu0 0.0
        %5131 = vmatprep.subr.mxu0 0.0
        %5132 = vmatpush2.msra.mxu0 0.0
        %5133 = vmatprep.subr.mxu0 0.0
        %5134 = vmatpush2.msra.mxu0 0.0
        %5135 = vmatprep.subr.mxu0 0.0
        %5136 = vmatpush2.msra.mxu0 0.0
        %5137 = vmatprep.subr.mxu0 0.0
        %5138 = vmatpush2.msra.mxu0 0.0
        %5139 = vmatprep.subr.mxu0 0.0
        %5140 = vmatpush2.msra.mxu0 0.0
        %5141 = vmatprep.subr.mxu0 0.0
        %5142 = vmatpush2.msra.mxu0 0.0
        %5143 = vmatprep.subr.mxu0 0.0
        %5144 = vmatpush2.msra.mxu0 0.0
        %5145 = vmatprep.subr.mxu0 0.0
        %5146 = vmatpush2.msra.mxu0 0.0
        %5147 = vmatprep.subr.mxu0 0.0
        %5148 = vmatpush2.msra.mxu0 0.0
        %5149 = vmatprep.subr.mxu0 0.0
        %5150 = vmatpush2.msra.mxu0 0.0
        %5151 = vmatprep.subr.mxu0 0.0
        %5152 = vmatpush2.msra.mxu0 0.0
        %5153 = vmatprep.mubr.f32.mxu0 0.0
        %v5154 = vand.u32 %v293, 4294901760
        %5155 = vmatmul.mubr.f32.gmra.mxu0 %v5154
        %v5156 = vpop.f32.mrf.mxu0
        %v5157 = vadd.f32 %v5084, %v5156
        %v5158 = vpop.f32.mrf.mxu0
        %5159 = vdwg.mxu0
        %5160 = vmatprep.subr.mxu0 0.0
        %v5161 = vand.u32 %v250, 4294901760
        %5162 = vmatpush1.msra.mxu0 %v5161
        %5163 = vmatprep.subr.mxu0 0.0
        %v5164 = vand.u32 %v249, 4294901760
        %5165 = vmatpush1.msra.mxu0 %v5164
        %5166 = vmatprep.subr.mxu0 0.0
        %v5167 = vand.u32 %v248, 4294901760
        %5168 = vmatpush1.msra.mxu0 %v5167
        %5169 = vmatprep.subr.mxu0 0.0
        %v5170 = vand.u32 %v247, 4294901760
        %5171 = vmatpush1.msra.mxu0 %v5170
        %5172 = vmatprep.subr.mxu0 0.0
        %v5173 = vand.u32 %v246, 4294901760
        %5174 = vmatpush1.msra.mxu0 %v5173
        %5175 = vmatprep.subr.mxu0 0.0
        %v5176 = vand.u32 %v245, 4294901760
        %5177 = vmatpush1.msra.mxu0 %v5176
        %5178 = vmatprep.subr.mxu0 0.0
        %v5179 = vand.u32 %v244, 4294901760
        %5180 = vmatpush1.msra.mxu0 %v5179
        %5181 = vmatprep.subr.mxu0 0.0
        %v5182 = vand.u32 %v243, 4294901760
        %5183 = vmatpush1.msra.mxu0 %v5182
        %5184 = vmatprep.subr.mxu0 0.0
        %v5185 = vand.u32 %v242, 4294901760
        %5186 = vmatpush1.msra.mxu0 %v5185
        %5187 = vmatprep.subr.mxu0 0.0
        %v5188 = vand.u32 %v241, 4294901760
        %5189 = vmatpush1.msra.mxu0 %v5188
        %5190 = vmatprep.subr.mxu0 0.0
        %v5191 = vand.u32 %v240, 4294901760
        %5192 = vmatpush1.msra.mxu0 %v5191
        %5193 = vmatprep.subr.mxu0 0.0
        %v5194 = vand.u32 %v239, 4294901760
        %5195 = vmatpush1.msra.mxu0 %v5194
        %5196 = vmatprep.subr.mxu0 0.0
        %v5197 = vand.u32 %v238, 4294901760
        %5198 = vmatpush1.msra.mxu0 %v5197
        %5199 = vmatprep.subr.mxu0 0.0
        %v5200 = vand.u32 %v237, 4294901760
        %5201 = vmatpush1.msra.mxu0 %v5200
        %5202 = vmatprep.subr.mxu0 0.0
        %v5203 = vand.u32 %v236, 4294901760
        %5204 = vmatpush1.msra.mxu0 %v5203
        %5205 = vmatprep.subr.mxu0 0.0
        %v5206 = vand.u32 %v235, 4294901760
        %5207 = vmatpush1.msra.mxu0 %v5206
        %5208 = vmatprep.subr.mxu0 0.0
        %5209 = vmatpush2.msra.mxu0 0.0
        %5210 = vmatprep.subr.mxu0 0.0
        %5211 = vmatpush2.msra.mxu0 0.0
        %5212 = vmatprep.subr.mxu0 0.0
        %5213 = vmatpush2.msra.mxu0 0.0
        %5214 = vmatprep.subr.mxu0 0.0
        %5215 = vmatpush2.msra.mxu0 0.0
        %5216 = vmatprep.subr.mxu0 0.0
        %5217 = vmatpush2.msra.mxu0 0.0
        %5218 = vmatprep.subr.mxu0 0.0
        %5219 = vmatpush2.msra.mxu0 0.0
        %5220 = vmatprep.subr.mxu0 0.0
        %5221 = vmatpush2.msra.mxu0 0.0
        %5222 = vmatprep.subr.mxu0 0.0
        %5223 = vmatpush2.msra.mxu0 0.0
        %5224 = vmatprep.subr.mxu0 0.0
        %5225 = vmatpush2.msra.mxu0 0.0
        %5226 = vmatprep.subr.mxu0 0.0
        %5227 = vmatpush2.msra.mxu0 0.0
        %5228 = vmatprep.subr.mxu0 0.0
        %5229 = vmatpush2.msra.mxu0 0.0
        %5230 = vmatprep.subr.mxu0 0.0
        %5231 = vmatpush2.msra.mxu0 0.0
        %5232 = vmatprep.subr.mxu0 0.0
        %5233 = vmatpush2.msra.mxu0 0.0
        %5234 = vmatprep.subr.mxu0 0.0
        %5235 = vmatpush2.msra.mxu0 0.0
        %5236 = vmatprep.subr.mxu0 0.0
        %5237 = vmatpush2.msra.mxu0 0.0
        %5238 = vmatprep.subr.mxu0 0.0
        %5239 = vmatpush2.msra.mxu0 0.0
        %5240 = vmatprep.mubr.f32.mxu0 0.0
        %v5241 = vand.u32 %v5157, 4294901760
        %v5242 = vsub.f32 %v5157, %v5241
        %v5243 = vand.u32 %v5242, 4294901760
        %v5244 = vsub.f32 %v5242, %v5243
        %v5245 = vand.u32 %v5244, 4294901760
        %5246 = vmatmul.mubr.f32.gmra.mxu0 %v5245
        %v5247 = vpop.f32.mrf.mxu0
        %v5248 = vadd.f32 0.0, %v5247
        %v5249 = vpop.f32.mrf.mxu0
        %5250 = vdwg.mxu0
        %5251 = vmatprep.subr.mxu0 0.0
        %v5252 = vand.u32 %v250, 4294901760
        %v5253 = vsub.f32 %v250, %v5252
        %v5254 = vand.u32 %v5253, 4294901760
        %v5255 = vsub.f32 %v5253, %v5254
        %v5256 = vand.u32 %v5255, 4294901760
        %5257 = vmatpush1.msra.mxu0 %v5256
        %5258 = vmatprep.subr.mxu0 0.0
        %v5259 = vand.u32 %v249, 4294901760
        %v5260 = vsub.f32 %v249, %v5259
        %v5261 = vand.u32 %v5260, 4294901760
        %v5262 = vsub.f32 %v5260, %v5261
        %v5263 = vand.u32 %v5262, 4294901760
        %5264 = vmatpush1.msra.mxu0 %v5263
        %5265 = vmatprep.subr.mxu0 0.0
        %v5266 = vand.u32 %v248, 4294901760
        %v5267 = vsub.f32 %v248, %v5266
        %v5268 = vand.u32 %v5267, 4294901760
        %v5269 = vsub.f32 %v5267, %v5268
        %v5270 = vand.u32 %v5269, 4294901760
        %5271 = vmatpush1.msra.mxu0 %v5270
        %5272 = vmatprep.subr.mxu0 0.0
        %v5273 = vand.u32 %v247, 4294901760
        %v5274 = vsub.f32 %v247, %v5273
        %v5275 = vand.u32 %v5274, 4294901760
        %v5276 = vsub.f32 %v5274, %v5275
        %v5277 = vand.u32 %v5276, 4294901760
        %5278 = vmatpush1.msra.mxu0 %v5277
        %5279 = vmatprep.subr.mxu0 0.0
        %v5280 = vand.u32 %v246, 4294901760
        %v5281 = vsub.f32 %v246, %v5280
        %v5282 = vand.u32 %v5281, 4294901760
        %v5283 = vsub.f32 %v5281, %v5282
        %v5284 = vand.u32 %v5283, 4294901760
        %5285 = vmatpush1.msra.mxu0 %v5284
        %5286 = vmatprep.subr.mxu0 0.0
        %v5287 = vand.u32 %v245, 4294901760
        %v5288 = vsub.f32 %v245, %v5287
        %v5289 = vand.u32 %v5288, 4294901760
        %v5290 = vsub.f32 %v5288, %v5289
        %v5291 = vand.u32 %v5290, 4294901760
        %5292 = vmatpush1.msra.mxu0 %v5291
        %5293 = vmatprep.subr.mxu0 0.0
        %v5294 = vand.u32 %v244, 4294901760
        %v5295 = vsub.f32 %v244, %v5294
        %v5296 = vand.u32 %v5295, 4294901760
        %v5297 = vsub.f32 %v5295, %v5296
        %v5298 = vand.u32 %v5297, 4294901760
        %5299 = vmatpush1.msra.mxu0 %v5298
        %5300 = vmatprep.subr.mxu0 0.0
        %v5301 = vand.u32 %v243, 4294901760
        %v5302 = vsub.f32 %v243, %v5301
        %v5303 = vand.u32 %v5302, 4294901760
        %v5304 = vsub.f32 %v5302, %v5303
        %v5305 = vand.u32 %v5304, 4294901760
        %5306 = vmatpush1.msra.mxu0 %v5305
        %5307 = vmatprep.subr.mxu0 0.0
        %v5308 = vand.u32 %v242, 4294901760
        %v5309 = vsub.f32 %v242, %v5308
        %v5310 = vand.u32 %v5309, 4294901760
        %v5311 = vsub.f32 %v5309, %v5310
        %v5312 = vand.u32 %v5311, 4294901760
        %5313 = vmatpush1.msra.mxu0 %v5312
        %5314 = vmatprep.subr.mxu0 0.0
        %v5315 = vand.u32 %v241, 4294901760
        %v5316 = vsub.f32 %v241, %v5315
        %v5317 = vand.u32 %v5316, 4294901760
        %v5318 = vsub.f32 %v5316, %v5317
        %v5319 = vand.u32 %v5318, 4294901760
        %5320 = vmatpush1.msra.mxu0 %v5319
        %5321 = vmatprep.subr.mxu0 0.0
        %v5322 = vand.u32 %v240, 4294901760
        %v5323 = vsub.f32 %v240, %v5322
        %v5324 = vand.u32 %v5323, 4294901760
        %v5325 = vsub.f32 %v5323, %v5324
        %v5326 = vand.u32 %v5325, 4294901760
        %5327 = vmatpush1.msra.mxu0 %v5326
        %5328 = vmatprep.subr.mxu0 0.0
        %v5329 = vand.u32 %v239, 4294901760
        %v5330 = vsub.f32 %v239, %v5329
        %v5331 = vand.u32 %v5330, 4294901760
        %v5332 = vsub.f32 %v5330, %v5331
        %v5333 = vand.u32 %v5332, 4294901760
        %5334 = vmatpush1.msra.mxu0 %v5333
        %5335 = vmatprep.subr.mxu0 0.0
        %v5336 = vand.u32 %v238, 4294901760
        %v5337 = vsub.f32 %v238, %v5336
        %v5338 = vand.u32 %v5337, 4294901760
        %v5339 = vsub.f32 %v5337, %v5338
        %v5340 = vand.u32 %v5339, 4294901760
        %5341 = vmatpush1.msra.mxu0 %v5340
        %5342 = vmatprep.subr.mxu0 0.0
        %v5343 = vand.u32 %v237, 4294901760
        %v5344 = vsub.f32 %v237, %v5343
        %v5345 = vand.u32 %v5344, 4294901760
        %v5346 = vsub.f32 %v5344, %v5345
        %v5347 = vand.u32 %v5346, 4294901760
        %5348 = vmatpush1.msra.mxu0 %v5347
        %5349 = vmatprep.subr.mxu0 0.0
        %v5350 = vand.u32 %v236, 4294901760
        %v5351 = vsub.f32 %v236, %v5350
        %v5352 = vand.u32 %v5351, 4294901760
        %v5353 = vsub.f32 %v5351, %v5352
        %v5354 = vand.u32 %v5353, 4294901760
        %5355 = vmatpush1.msra.mxu0 %v5354
        %5356 = vmatprep.subr.mxu0 0.0
        %v5357 = vand.u32 %v235, 4294901760
        %v5358 = vsub.f32 %v235, %v5357
        %v5359 = vand.u32 %v5358, 4294901760
        %v5360 = vsub.f32 %v5358, %v5359
        %v5361 = vand.u32 %v5360, 4294901760
        %5362 = vmatpush1.msra.mxu0 %v5361
        %5363 = vmatprep.subr.mxu0 0.0
        %5364 = vmatpush2.msra.mxu0 0.0
        %5365 = vmatprep.subr.mxu0 0.0
        %5366 = vmatpush2.msra.mxu0 0.0
        %5367 = vmatprep.subr.mxu0 0.0
        %5368 = vmatpush2.msra.mxu0 0.0
        %5369 = vmatprep.subr.mxu0 0.0
        %5370 = vmatpush2.msra.mxu0 0.0
        %5371 = vmatprep.subr.mxu0 0.0
        %5372 = vmatpush2.msra.mxu0 0.0
        %5373 = vmatprep.subr.mxu0 0.0
        %5374 = vmatpush2.msra.mxu0 0.0
        %5375 = vmatprep.subr.mxu0 0.0
        %5376 = vmatpush2.msra.mxu0 0.0
        %5377 = vmatprep.subr.mxu0 0.0
        %5378 = vmatpush2.msra.mxu0 0.0
        %5379 = vmatprep.subr.mxu0 0.0
        %5380 = vmatpush2.msra.mxu0 0.0
        %5381 = vmatprep.subr.mxu0 0.0
        %5382 = vmatpush2.msra.mxu0 0.0
        %5383 = vmatprep.subr.mxu0 0.0
        %5384 = vmatpush2.msra.mxu0 0.0
        %5385 = vmatprep.subr.mxu0 0.0
        %5386 = vmatpush2.msra.mxu0 0.0
        %5387 = vmatprep.subr.mxu0 0.0
        %5388 = vmatpush2.msra.mxu0 0.0
        %5389 = vmatprep.subr.mxu0 0.0
        %5390 = vmatpush2.msra.mxu0 0.0
        %5391 = vmatprep.subr.mxu0 0.0
        %5392 = vmatpush2.msra.mxu0 0.0
        %5393 = vmatprep.subr.mxu0 0.0
        %5394 = vmatpush2.msra.mxu0 0.0
        %5395 = vmatprep.mubr.f32.mxu0 0.0
        %v5396 = vand.u32 %v5157, 4294901760
        %5397 = vmatmul.mubr.f32.gmra.mxu0 %v5396
        %v5398 = vpop.f32.mrf.mxu0
        %v5399 = vadd.f32 %v5248, %v5398
        %v5400 = vpop.f32.mrf.mxu0
        %5401 = vdwg.mxu0
        %5402 = vmatprep.subr.mxu0 0.0
        %v5403 = vand.u32 %v250, 4294901760
        %v5404 = vsub.f32 %v250, %v5403
        %5405 = vmatpush1.msra.mxu0 %v5404
        %5406 = vmatprep.subr.mxu0 0.0
        %v5407 = vand.u32 %v249, 4294901760
        %v5408 = vsub.f32 %v249, %v5407
        %5409 = vmatpush1.msra.mxu0 %v5408
        %5410 = vmatprep.subr.mxu0 0.0
        %v5411 = vand.u32 %v248, 4294901760
        %v5412 = vsub.f32 %v248, %v5411
        %5413 = vmatpush1.msra.mxu0 %v5412
        %5414 = vmatprep.subr.mxu0 0.0
        %v5415 = vand.u32 %v247, 4294901760
        %v5416 = vsub.f32 %v247, %v5415
        %5417 = vmatpush1.msra.mxu0 %v5416
        %5418 = vmatprep.subr.mxu0 0.0
        %v5419 = vand.u32 %v246, 4294901760
        %v5420 = vsub.f32 %v246, %v5419
        %5421 = vmatpush1.msra.mxu0 %v5420
        %5422 = vmatprep.subr.mxu0 0.0
        %v5423 = vand.u32 %v245, 4294901760
        %v5424 = vsub.f32 %v245, %v5423
        %5425 = vmatpush1.msra.mxu0 %v5424
        %5426 = vmatprep.subr.mxu0 0.0
        %v5427 = vand.u32 %v244, 4294901760
        %v5428 = vsub.f32 %v244, %v5427
        %5429 = vmatpush1.msra.mxu0 %v5428
        %5430 = vmatprep.subr.mxu0 0.0
        %v5431 = vand.u32 %v243, 4294901760
        %v5432 = vsub.f32 %v243, %v5431
        %5433 = vmatpush1.msra.mxu0 %v5432
        %5434 = vmatprep.subr.mxu0 0.0
        %v5435 = vand.u32 %v242, 4294901760
        %v5436 = vsub.f32 %v242, %v5435
        %5437 = vmatpush1.msra.mxu0 %v5436
        %5438 = vmatprep.subr.mxu0 0.0
        %v5439 = vand.u32 %v241, 4294901760
        %v5440 = vsub.f32 %v241, %v5439
        %5441 = vmatpush1.msra.mxu0 %v5440
        %5442 = vmatprep.subr.mxu0 0.0
        %v5443 = vand.u32 %v240, 4294901760
        %v5444 = vsub.f32 %v240, %v5443
        %5445 = vmatpush1.msra.mxu0 %v5444
        %5446 = vmatprep.subr.mxu0 0.0
        %v5447 = vand.u32 %v239, 4294901760
        %v5448 = vsub.f32 %v239, %v5447
        %5449 = vmatpush1.msra.mxu0 %v5448
        %5450 = vmatprep.subr.mxu0 0.0
        %v5451 = vand.u32 %v238, 4294901760
        %v5452 = vsub.f32 %v238, %v5451
        %5453 = vmatpush1.msra.mxu0 %v5452
        %5454 = vmatprep.subr.mxu0 0.0
        %v5455 = vand.u32 %v237, 4294901760
        %v5456 = vsub.f32 %v237, %v5455
        %5457 = vmatpush1.msra.mxu0 %v5456
        %5458 = vmatprep.subr.mxu0 0.0
        %v5459 = vand.u32 %v236, 4294901760
        %v5460 = vsub.f32 %v236, %v5459
        %5461 = vmatpush1.msra.mxu0 %v5460
        %5462 = vmatprep.subr.mxu0 0.0
        %v5463 = vand.u32 %v235, 4294901760
        %v5464 = vsub.f32 %v235, %v5463
        %5465 = vmatpush1.msra.mxu0 %v5464
        %5466 = vmatprep.subr.mxu0 0.0
        %5467 = vmatpush2.msra.mxu0 0.0
        %5468 = vmatprep.subr.mxu0 0.0
        %5469 = vmatpush2.msra.mxu0 0.0
        %5470 = vmatprep.subr.mxu0 0.0
        %5471 = vmatpush2.msra.mxu0 0.0
        %5472 = vmatprep.subr.mxu0 0.0
        %5473 = vmatpush2.msra.mxu0 0.0
        %5474 = vmatprep.subr.mxu0 0.0
        %5475 = vmatpush2.msra.mxu0 0.0
        %5476 = vmatprep.subr.mxu0 0.0
        %5477 = vmatpush2.msra.mxu0 0.0
        %5478 = vmatprep.subr.mxu0 0.0
        %5479 = vmatpush2.msra.mxu0 0.0
        %5480 = vmatprep.subr.mxu0 0.0
        %5481 = vmatpush2.msra.mxu0 0.0
        %5482 = vmatprep.subr.mxu0 0.0
        %5483 = vmatpush2.msra.mxu0 0.0
        %5484 = vmatprep.subr.mxu0 0.0
        %5485 = vmatpush2.msra.mxu0 0.0
        %5486 = vmatprep.subr.mxu0 0.0
        %5487 = vmatpush2.msra.mxu0 0.0
        %5488 = vmatprep.subr.mxu0 0.0
        %5489 = vmatpush2.msra.mxu0 0.0
        %5490 = vmatprep.subr.mxu0 0.0
        %5491 = vmatpush2.msra.mxu0 0.0
        %5492 = vmatprep.subr.mxu0 0.0
        %5493 = vmatpush2.msra.mxu0 0.0
        %5494 = vmatprep.subr.mxu0 0.0
        %5495 = vmatpush2.msra.mxu0 0.0
        %5496 = vmatprep.subr.mxu0 0.0
        %5497 = vmatpush2.msra.mxu0 0.0
        %5498 = vmatprep.mubr.f32.mxu0 0.0
        %v5499 = vand.u32 %v5157, 4294901760
        %v5500 = vsub.f32 %v5157, %v5499
        %5501 = vmatmul.mubr.f32.gmra.mxu0 %v5500
        %v5502 = vpop.f32.mrf.mxu0
        %v5503 = vadd.f32 %v5399, %v5502
        %v5504 = vpop.f32.mrf.mxu0
        %5505 = vdwg.mxu0
        %5506 = vmatprep.subr.mxu0 0.0
        %v5507 = vand.u32 %v250, 4294901760
        %5508 = vmatpush1.msra.mxu0 %v5507
        %5509 = vmatprep.subr.mxu0 0.0
        %v5510 = vand.u32 %v249, 4294901760
        %5511 = vmatpush1.msra.mxu0 %v5510
        %5512 = vmatprep.subr.mxu0 0.0
        %v5513 = vand.u32 %v248, 4294901760
        %5514 = vmatpush1.msra.mxu0 %v5513
        %5515 = vmatprep.subr.mxu0 0.0
        %v5516 = vand.u32 %v247, 4294901760
        %5517 = vmatpush1.msra.mxu0 %v5516
        %5518 = vmatprep.subr.mxu0 0.0
        %v5519 = vand.u32 %v246, 4294901760
        %5520 = vmatpush1.msra.mxu0 %v5519
        %5521 = vmatprep.subr.mxu0 0.0
        %v5522 = vand.u32 %v245, 4294901760
        %5523 = vmatpush1.msra.mxu0 %v5522
        %5524 = vmatprep.subr.mxu0 0.0
        %v5525 = vand.u32 %v244, 4294901760
        %5526 = vmatpush1.msra.mxu0 %v5525
        %5527 = vmatprep.subr.mxu0 0.0
        %v5528 = vand.u32 %v243, 4294901760
        %5529 = vmatpush1.msra.mxu0 %v5528
        %5530 = vmatprep.subr.mxu0 0.0
        %v5531 = vand.u32 %v242, 4294901760
        %5532 = vmatpush1.msra.mxu0 %v5531
        %5533 = vmatprep.subr.mxu0 0.0
        %v5534 = vand.u32 %v241, 4294901760
        %5535 = vmatpush1.msra.mxu0 %v5534
        %5536 = vmatprep.subr.mxu0 0.0
        %v5537 = vand.u32 %v240, 4294901760
        %5538 = vmatpush1.msra.mxu0 %v5537
        %5539 = vmatprep.subr.mxu0 0.0
        %v5540 = vand.u32 %v239, 4294901760
        %5541 = vmatpush1.msra.mxu0 %v5540
        %5542 = vmatprep.subr.mxu0 0.0
        %v5543 = vand.u32 %v238, 4294901760
        %5544 = vmatpush1.msra.mxu0 %v5543
        %5545 = vmatprep.subr.mxu0 0.0
        %v5546 = vand.u32 %v237, 4294901760
        %5547 = vmatpush1.msra.mxu0 %v5546
        %5548 = vmatprep.subr.mxu0 0.0
        %v5549 = vand.u32 %v236, 4294901760
        %5550 = vmatpush1.msra.mxu0 %v5549
        %5551 = vmatprep.subr.mxu0 0.0
        %v5552 = vand.u32 %v235, 4294901760
        %5553 = vmatpush1.msra.mxu0 %v5552
        %5554 = vmatprep.subr.mxu0 0.0
        %5555 = vmatpush2.msra.mxu0 0.0
        %5556 = vmatprep.subr.mxu0 0.0
        %5557 = vmatpush2.msra.mxu0 0.0
        %5558 = vmatprep.subr.mxu0 0.0
        %5559 = vmatpush2.msra.mxu0 0.0
        %5560 = vmatprep.subr.mxu0 0.0
        %5561 = vmatpush2.msra.mxu0 0.0
        %5562 = vmatprep.subr.mxu0 0.0
        %5563 = vmatpush2.msra.mxu0 0.0
        %5564 = vmatprep.subr.mxu0 0.0
        %5565 = vmatpush2.msra.mxu0 0.0
        %5566 = vmatprep.subr.mxu0 0.0
        %5567 = vmatpush2.msra.mxu0 0.0
        %5568 = vmatprep.subr.mxu0 0.0
        %5569 = vmatpush2.msra.mxu0 0.0
        %5570 = vmatprep.subr.mxu0 0.0
        %5571 = vmatpush2.msra.mxu0 0.0
        %5572 = vmatprep.subr.mxu0 0.0
        %5573 = vmatpush2.msra.mxu0 0.0
        %5574 = vmatprep.subr.mxu0 0.0
        %5575 = vmatpush2.msra.mxu0 0.0
        %5576 = vmatprep.subr.mxu0 0.0
        %5577 = vmatpush2.msra.mxu0 0.0
        %5578 = vmatprep.subr.mxu0 0.0
        %5579 = vmatpush2.msra.mxu0 0.0
        %5580 = vmatprep.subr.mxu0 0.0
        %5581 = vmatpush2.msra.mxu0 0.0
        %5582 = vmatprep.subr.mxu0 0.0
        %5583 = vmatpush2.msra.mxu0 0.0
        %5584 = vmatprep.subr.mxu0 0.0
        %5585 = vmatpush2.msra.mxu0 0.0
        %5586 = vmatprep.mubr.f32.mxu0 0.0
        %v5587 = vand.u32 %v5157, 4294901760
        %v5588 = vsub.f32 %v5157, %v5587
        %v5589 = vand.u32 %v5588, 4294901760
        %5590 = vmatmul.mubr.f32.gmra.mxu0 %v5589
        %v5591 = vpop.f32.mrf.mxu0
        %v5592 = vadd.f32 %v5503, %v5591
        %v5593 = vpop.f32.mrf.mxu0
        %5594 = vdwg.mxu0
        %5595 = vmatprep.subr.mxu0 0.0
        %v5596 = vand.u32 %v250, 4294901760
        %v5597 = vsub.f32 %v250, %v5596
        %v5598 = vand.u32 %v5597, 4294901760
        %5599 = vmatpush1.msra.mxu0 %v5598
        %5600 = vmatprep.subr.mxu0 0.0
        %v5601 = vand.u32 %v249, 4294901760
        %v5602 = vsub.f32 %v249, %v5601
        %v5603 = vand.u32 %v5602, 4294901760
        %5604 = vmatpush1.msra.mxu0 %v5603
        %5605 = vmatprep.subr.mxu0 0.0
        %v5606 = vand.u32 %v248, 4294901760
        %v5607 = vsub.f32 %v248, %v5606
        %v5608 = vand.u32 %v5607, 4294901760
        %5609 = vmatpush1.msra.mxu0 %v5608
        %5610 = vmatprep.subr.mxu0 0.0
        %v5611 = vand.u32 %v247, 4294901760
        %v5612 = vsub.f32 %v247, %v5611
        %v5613 = vand.u32 %v5612, 4294901760
        %5614 = vmatpush1.msra.mxu0 %v5613
        %5615 = vmatprep.subr.mxu0 0.0
        %v5616 = vand.u32 %v246, 4294901760
        %v5617 = vsub.f32 %v246, %v5616
        %v5618 = vand.u32 %v5617, 4294901760
        %5619 = vmatpush1.msra.mxu0 %v5618
        %5620 = vmatprep.subr.mxu0 0.0
        %v5621 = vand.u32 %v245, 4294901760
        %v5622 = vsub.f32 %v245, %v5621
        %v5623 = vand.u32 %v5622, 4294901760
        %5624 = vmatpush1.msra.mxu0 %v5623
        %5625 = vmatprep.subr.mxu0 0.0
        %v5626 = vand.u32 %v244, 4294901760
        %v5627 = vsub.f32 %v244, %v5626
        %v5628 = vand.u32 %v5627, 4294901760
        %5629 = vmatpush1.msra.mxu0 %v5628
        %5630 = vmatprep.subr.mxu0 0.0
        %v5631 = vand.u32 %v243, 4294901760
        %v5632 = vsub.f32 %v243, %v5631
        %v5633 = vand.u32 %v5632, 4294901760
        %5634 = vmatpush1.msra.mxu0 %v5633
        %5635 = vmatprep.subr.mxu0 0.0
        %v5636 = vand.u32 %v242, 4294901760
        %v5637 = vsub.f32 %v242, %v5636
        %v5638 = vand.u32 %v5637, 4294901760
        %5639 = vmatpush1.msra.mxu0 %v5638
        %5640 = vmatprep.subr.mxu0 0.0
        %v5641 = vand.u32 %v241, 4294901760
        %v5642 = vsub.f32 %v241, %v5641
        %v5643 = vand.u32 %v5642, 4294901760
        %5644 = vmatpush1.msra.mxu0 %v5643
        %5645 = vmatprep.subr.mxu0 0.0
        %v5646 = vand.u32 %v240, 4294901760
        %v5647 = vsub.f32 %v240, %v5646
        %v5648 = vand.u32 %v5647, 4294901760
        %5649 = vmatpush1.msra.mxu0 %v5648
        %5650 = vmatprep.subr.mxu0 0.0
        %v5651 = vand.u32 %v239, 4294901760
        %v5652 = vsub.f32 %v239, %v5651
        %v5653 = vand.u32 %v5652, 4294901760
        %5654 = vmatpush1.msra.mxu0 %v5653
        %5655 = vmatprep.subr.mxu0 0.0
        %v5656 = vand.u32 %v238, 4294901760
        %v5657 = vsub.f32 %v238, %v5656
        %v5658 = vand.u32 %v5657, 4294901760
        %5659 = vmatpush1.msra.mxu0 %v5658
        %5660 = vmatprep.subr.mxu0 0.0
        %v5661 = vand.u32 %v237, 4294901760
        %v5662 = vsub.f32 %v237, %v5661
        %v5663 = vand.u32 %v5662, 4294901760
        %5664 = vmatpush1.msra.mxu0 %v5663
        %5665 = vmatprep.subr.mxu0 0.0
        %v5666 = vand.u32 %v236, 4294901760
        %v5667 = vsub.f32 %v236, %v5666
        %v5668 = vand.u32 %v5667, 4294901760
        %5669 = vmatpush1.msra.mxu0 %v5668
        %5670 = vmatprep.subr.mxu0 0.0
        %v5671 = vand.u32 %v235, 4294901760
        %v5672 = vsub.f32 %v235, %v5671
        %v5673 = vand.u32 %v5672, 4294901760
        %5674 = vmatpush1.msra.mxu0 %v5673
        %5675 = vmatprep.subr.mxu0 0.0
        %5676 = vmatpush2.msra.mxu0 0.0
        %5677 = vmatprep.subr.mxu0 0.0
        %5678 = vmatpush2.msra.mxu0 0.0
        %5679 = vmatprep.subr.mxu0 0.0
        %5680 = vmatpush2.msra.mxu0 0.0
        %5681 = vmatprep.subr.mxu0 0.0
        %5682 = vmatpush2.msra.mxu0 0.0
        %5683 = vmatprep.subr.mxu0 0.0
        %5684 = vmatpush2.msra.mxu0 0.0
        %5685 = vmatprep.subr.mxu0 0.0
        %5686 = vmatpush2.msra.mxu0 0.0
        %5687 = vmatprep.subr.mxu0 0.0
        %5688 = vmatpush2.msra.mxu0 0.0
        %5689 = vmatprep.subr.mxu0 0.0
        %5690 = vmatpush2.msra.mxu0 0.0
        %5691 = vmatprep.subr.mxu0 0.0
        %5692 = vmatpush2.msra.mxu0 0.0
        %5693 = vmatprep.subr.mxu0 0.0
        %5694 = vmatpush2.msra.mxu0 0.0
        %5695 = vmatprep.subr.mxu0 0.0
        %5696 = vmatpush2.msra.mxu0 0.0
        %5697 = vmatprep.subr.mxu0 0.0
        %5698 = vmatpush2.msra.mxu0 0.0
        %5699 = vmatprep.subr.mxu0 0.0
        %5700 = vmatpush2.msra.mxu0 0.0
        %5701 = vmatprep.subr.mxu0 0.0
        %5702 = vmatpush2.msra.mxu0 0.0
        %5703 = vmatprep.subr.mxu0 0.0
        %5704 = vmatpush2.msra.mxu0 0.0
        %5705 = vmatprep.subr.mxu0 0.0
        %5706 = vmatpush2.msra.mxu0 0.0
        %5707 = vmatprep.mubr.f32.mxu0 0.0
        %v5708 = vand.u32 %v5157, 4294901760
        %5709 = vmatmul.mubr.f32.gmra.mxu0 %v5708
        %v5710 = vpop.f32.mrf.mxu0
        %v5711 = vadd.f32 %v5592, %v5710
        %v5712 = vpop.f32.mrf.mxu0
        %5713 = vdwg.mxu0
        %5714 = vmatprep.subr.mxu0 0.0
        %v5715 = vand.u32 %v250, 4294901760
        %5716 = vmatpush1.msra.mxu0 %v5715
        %5717 = vmatprep.subr.mxu0 0.0
        %v5718 = vand.u32 %v249, 4294901760
        %5719 = vmatpush1.msra.mxu0 %v5718
        %5720 = vmatprep.subr.mxu0 0.0
        %v5721 = vand.u32 %v248, 4294901760
        %5722 = vmatpush1.msra.mxu0 %v5721
        %5723 = vmatprep.subr.mxu0 0.0
        %v5724 = vand.u32 %v247, 4294901760
        %5725 = vmatpush1.msra.mxu0 %v5724
        %5726 = vmatprep.subr.mxu0 0.0
        %v5727 = vand.u32 %v246, 4294901760
        %5728 = vmatpush1.msra.mxu0 %v5727
        %5729 = vmatprep.subr.mxu0 0.0
        %v5730 = vand.u32 %v245, 4294901760
        %5731 = vmatpush1.msra.mxu0 %v5730
        %5732 = vmatprep.subr.mxu0 0.0
        %v5733 = vand.u32 %v244, 4294901760
        %5734 = vmatpush1.msra.mxu0 %v5733
        %5735 = vmatprep.subr.mxu0 0.0
        %v5736 = vand.u32 %v243, 4294901760
        %5737 = vmatpush1.msra.mxu0 %v5736
        %5738 = vmatprep.subr.mxu0 0.0
        %v5739 = vand.u32 %v242, 4294901760
        %5740 = vmatpush1.msra.mxu0 %v5739
        %5741 = vmatprep.subr.mxu0 0.0
        %v5742 = vand.u32 %v241, 4294901760
        %5743 = vmatpush1.msra.mxu0 %v5742
        %5744 = vmatprep.subr.mxu0 0.0
        %v5745 = vand.u32 %v240, 4294901760
        %5746 = vmatpush1.msra.mxu0 %v5745
        %5747 = vmatprep.subr.mxu0 0.0
        %v5748 = vand.u32 %v239, 4294901760
        %5749 = vmatpush1.msra.mxu0 %v5748
        %5750 = vmatprep.subr.mxu0 0.0
        %v5751 = vand.u32 %v238, 4294901760
        %5752 = vmatpush1.msra.mxu0 %v5751
        %5753 = vmatprep.subr.mxu0 0.0
        %v5754 = vand.u32 %v237, 4294901760
        %5755 = vmatpush1.msra.mxu0 %v5754
        %5756 = vmatprep.subr.mxu0 0.0
        %v5757 = vand.u32 %v236, 4294901760
        %5758 = vmatpush1.msra.mxu0 %v5757
        %5759 = vmatprep.subr.mxu0 0.0
        %v5760 = vand.u32 %v235, 4294901760
        %5761 = vmatpush1.msra.mxu0 %v5760
        %5762 = vmatprep.subr.mxu0 0.0
        %5763 = vmatpush2.msra.mxu0 0.0
        %5764 = vmatprep.subr.mxu0 0.0
        %5765 = vmatpush2.msra.mxu0 0.0
        %5766 = vmatprep.subr.mxu0 0.0
        %5767 = vmatpush2.msra.mxu0 0.0
        %5768 = vmatprep.subr.mxu0 0.0
        %5769 = vmatpush2.msra.mxu0 0.0
        %5770 = vmatprep.subr.mxu0 0.0
        %5771 = vmatpush2.msra.mxu0 0.0
        %5772 = vmatprep.subr.mxu0 0.0
        %5773 = vmatpush2.msra.mxu0 0.0
        %5774 = vmatprep.subr.mxu0 0.0
        %5775 = vmatpush2.msra.mxu0 0.0
        %5776 = vmatprep.subr.mxu0 0.0
        %5777 = vmatpush2.msra.mxu0 0.0
        %5778 = vmatprep.subr.mxu0 0.0
        %5779 = vmatpush2.msra.mxu0 0.0
        %5780 = vmatprep.subr.mxu0 0.0
        %5781 = vmatpush2.msra.mxu0 0.0
        %5782 = vmatprep.subr.mxu0 0.0
        %5783 = vmatpush2.msra.mxu0 0.0
        %5784 = vmatprep.subr.mxu0 0.0
        %5785 = vmatpush2.msra.mxu0 0.0
        %5786 = vmatprep.subr.mxu0 0.0
        %5787 = vmatpush2.msra.mxu0 0.0
        %5788 = vmatprep.subr.mxu0 0.0
        %5789 = vmatpush2.msra.mxu0 0.0
        %5790 = vmatprep.subr.mxu0 0.0
        %5791 = vmatpush2.msra.mxu0 0.0
        %5792 = vmatprep.subr.mxu0 0.0
        %5793 = vmatpush2.msra.mxu0 0.0
        %5794 = vmatprep.mubr.f32.mxu0 0.0
        %v5795 = vand.u32 %v5157, 4294901760
        %5796 = vmatmul.mubr.f32.gmra.mxu0 %v5795
        %v5797 = vpop.f32.mrf.mxu0
        %v5798 = vadd.f32 %v5711, %v5797
        %v5799 = vpop.f32.mrf.mxu0
        %5800 = vdwg.mxu0
        %v5801 = vmul.f32 %v1392, %v1392
        %v5802 = vmul.f32 %v2492, %v2492
        %v5803 = vmul.f32 %v1392, %v2492
        %v5804 = vsub.f32 %v3594, %v5801
        %v5805 = vsub.f32 %v4696, %v5802
        %v5806 = vsub.f32 %v5798, %v5803
        %v5807 = vmul.f32 %v5803, 2.0
        %v5808 = vadd.f32 %v5807, 6.5025
        %v5809 = vmul.f32 %v5806, 2.0
        %v5810 = vadd.f32 %v5809, 58.5225
        %v5811 = vmul.f32 %v5808, %v5810
        %v5812 = vadd.f32 %v5801, %v5802
        %v5813 = vadd.f32 %v5812, 6.5025
        %v5814 = vadd.f32 %v5804, %v5805
        %v5815 = vadd.f32 %v5814, 58.5225
        %v5816 = vmul.f32 %v5813, %v5815
        %v5817 = vrcp.pop %v5816
        %v5818 = vmul.f32 %v5811, %v5817
        %vm5819 = vcmask 46080
        %v5820 = vsel %vm5819, %v5818, 0.0
        %5821 = vadd.xlane.f32.xlu0 %v5820
        %v5822 = vpop.xlane.xlu0 %5821
        %v5823 = vrot.slane %v5822, 4
        %v5824 = vadd.f32 %v5822, %v5823
        %v5825 = vrot.slane %v5824, 2
        %v5826 = vadd.f32 %v5824, %v5825
        %v5827 = vrot.slane %v5826, 1
        %v5828 = vadd.f32 %v5826, %v5827
        %s5829 = vtos %v5828
        %v5830 = vstv %s5829
        %v5831 = vrcp.pop 36.0
        %v5832 = vmul.f32 %v5830, %v5831
        %vm5833 = vcmask 0
        %5834 = vst.msk [vmem:[%s233] sm:$0x1] %vm5833, %v5832
        %p5835 = scmp.lt.s32.totalorder %s18, 1
        %s5836 = scalar_select %p5835, %s18, 1
        %s5837 = scalar_lea.vmem %s4, %s5836
        // Predicated region
        $region41: #{tpu_custom_call.1} parent=35 // pred_check
          %p5838 = pneg %p130
        $region42: #{tpu_custom_call.1} parent=35 // pred_check_branch
          %5840 = sbr.rel (%p5838) target = $region44
        $region43: #{tpu_custom_call.1} parent=35 // pred_region
          _
        $region44: #{tpu_custom_call.1} parent=35 // pred_fallthru
          _
      $region36: #{tpu_custom_call.1} parent=5 // pred_fallthru
        _
      %p5841 = scmp.le.s32.totalorder 2, %s13
      // Predicated region
      $region45: #{tpu_custom_call.1} parent=5 // pred_check
        %p5842 = pneg %p5841
      $region46: #{tpu_custom_call.1} parent=5 // pred_check_branch
        %5844 = sbr.rel (%p5842) target = $region48
      $region47: #{tpu_custom_call.1} parent=5 // pred_region
        %s5845 = ssub.s32 %s13, 2
        // Predicated region
        $region49: #{tpu_custom_call.1} parent=47 // pred_check
          %p5846 = pneg %p136
        $region50: #{tpu_custom_call.1} parent=47 // pred_check_branch
          %5848 = sbr.rel (%p5846) target = $region52
        $region51: #{tpu_custom_call.1} parent=47 // pred_region
          %p5849 = scmp.lt.s32.totalorder %s19, 1
          %s5850 = scalar_select %p5849, %s19, 1
          %s5851 = scalar_lea.vmem %s4, %s5850
        $region52: #{tpu_custom_call.1} parent=47 // pred_fallthru
          _
      $region48: #{tpu_custom_call.1} parent=5 // pred_fallthru
        _
    $region6: #{tpu_custom_call.1} parent=1 // loop_footer
      %s17 = sadd.s32 1, %s13
    $region7: #{tpu_custom_call.1} parent=1 // loop_footer_branch
      %12 = sbr.rel target = $region3
    $region8: #{tpu_custom_call.1} parent=1 // loop_exit
      _
    %5852 = vsyncpa [#allocation3], 1
    %s5853 = scalar_lea.sflag [#allocation3], 1
    %5854 = vsyncpa %s5853, 1

</llo_original>
